<compile_context>
chip_gen: v6e
topology: v6e:2x2x1
jax: 0.10.0
libtpu: 0.0.40
codegen_flags: <defaults>
</compile_context>

<pallas_src>
import functools

import jax
import jax.numpy as jnp
from jax import lax
from jax.experimental import pallas as pl
from jax.experimental.pallas import tpu as pltpu

# Deterministic "module parameters" (the __init__ args of Scalar_QED_tree).
COUPLING = 0.1
MASS = 1.0
EXT_MOMENTA = [2.0, 3.0, 4.0, 5.0]
DIM = 8                              # length of each momenta vector


def _round_up(x, m):
    return ((x + m - 1) // m) * m


def _scalar_qed_tree_kernel(mom_ref, out_ref, *, dim, coef, two_g2, mass_sq):
    """One batch tile (batch on sublanes).

    mom_ref: (bt, dim)       f32, mom[b, i] = p_b[i]
    out_ref: (bt, dim*dim)   f32, out[b, i*dim + j] = matrix_b[i, j]
    """
    p = mom_ref[...]                                       # (bt, dim)
    # Row scale s[b, i] = (2 g^2 / ext_k) * p_b[i] * rsqrt(m^2 + p_b[i]^2),
    # computed once per tile on the small slab; rsqrt goes to the EUP slot.
    s = coef * p * lax.rsqrt(mass_sq + p * p)              # (bt, dim)
    lane_j = lax.broadcasted_iota(jnp.int32, (1, dim), 1)  # hoisted, (1, dim)

    # Static unroll over the row index i (dim = 8).  Each iteration writes the
    # contiguous lane segment [i*dim, (i+1)*dim) of the (bt, 64) output block.
    # These masked vst's are free: the binding resource is the output HBM DMA,
    # which sees one dense (bt, 64) block per grid step.
    for i in range(dim):
        s_i = s[:, i:i + 1]                                # (bt, 1) lane broadcast
        row = jnp.abs(two_g2 + s_i * p)                    # (bt, dim) over j
        row = jnp.where(lane_j == i, row + 1.0, row)       # identity at j == i
        out_ref[:, i * dim:(i + 1) * dim] = row


def scalar_qed_tree_forward_batched(momenta, k=0, *, batch_tile=8192):
    """Batched Scalar_QED_tree.forward: momenta (B, dim) -> (B, dim, dim) float32.

    Note: k must be a static Python int (EXT_MOMENTA[k] is folded at trace time).
    """
    momenta = jnp.asarray(momenta, dtype=jnp.float32)
    B, dim = momenta.shape

    # Batch lives on sublanes: tile only needs to be a multiple of 8.  Keep it
    # large to amortize per-grid-step overhead; 8192 rows => 2 MiB output tile,
    # ~4.5 MiB double-buffered in+out, comfortably under v7x's 32 MiB scoped VMEM.
    bt = min(batch_tile, _round_up(max(B, 8), 8))
    bt = _round_up(bt, 8)
    Bp = _round_up(B, bt)
    if Bp != B:   # zero-padded rows are safe (MASS^2 > 0 keeps rsqrt finite)
        momenta = jnp.concatenate(
            [momenta, jnp.zeros((Bp - B, dim), jnp.float32)], axis=0)

    coef = 2.0 * COUPLING ** 2 / EXT_MOMENTA[k]   # fold the 1/ext_k divide at trace time
    kernel = functools.partial(
        _scalar_qed_tree_kernel, dim=dim, coef=coef,
        two_g2=2.0 * COUPLING ** 2, mass_sq=MASS * MASS)

    cost = pl.CostEstimate(
        flops=6 * dim * dim * Bp,
        transcendentals=dim * Bp,
        bytes_accessed=(dim * 4 + dim * dim * 4) * Bp)

    out2 = pl.pallas_call(
        kernel,
        out_shape=jax.ShapeDtypeStruct((Bp, dim * dim), jnp.float32),
        grid_spec=pltpu.PrefetchScalarGridSpec(
            num_scalar_prefetch=0,
            grid=(Bp // bt,),
            in_specs=[pl.BlockSpec((bt, dim), lambda t: (t, 0))],
            # TODO(synk): if xprof still shows writeback DMA gaps, add
            # pipeline_mode=pl.Buffered(3) here (extra output buffer is cheap).
            out_specs=pl.BlockSpec((bt, dim * dim), lambda t: (t, 0)),
        ),
        compiler_params=pltpu.CompilerParams(
            dimension_semantics=("parallel",)),
        cost_estimate=cost,
    )(momenta)

    # Contiguous reshape only -- no transpose, no extra HBM pass over the output.
    return out2.reshape(Bp, dim, dim)[:B]


def scalar_qed_tree_forward(momenta, k=0):
    """Original single-vector module signature: momenta (dim,) -> (dim, dim).

    A single dim=8 problem is dispatch-bound; plain fused XLA is strictly faster
    than padding it into a Pallas tile, so no kernel launch here (per review).
    """
    p = jnp.asarray(momenta, dtype=jnp.float32)
    dim = p.shape[0]
    me = 2.0 * COUPLING ** 2 * (
        1.0 + p[:, None] * p[None, :]
        / (jnp.sqrt(MASS ** 2 + p[:, None] ** 2) * EXT_MOMENTA[k]))
    return jnp.eye(dim, dtype=jnp.float32) + jnp.abs(me)


def _reference_batched(momenta, k=0):
    """Pure-JAX reference mirroring the PyTorch/numpy loops (vectorized)."""
    p = jnp.asarray(momenta, dtype=jnp.float32)
    p_i = p[:, :, None]
    p_j = p[:, None, :]
    me = 2.0 * COUPLING ** 2 * (
        1.0 + p_i * p_j / (jnp.sqrt(MASS ** 2 + p_i ** 2) * EXT_MOMENTA[k]))
    return jnp.eye(p.shape[1], dtype=jnp.float32)[None] + jnp.abs(me)


if __name__ == "__main__":
    key = jax.random.PRNGKey(0)
    B = 300                              # deliberately not a multiple of the tile
    momenta = jax.random.uniform(key, (B, DIM), dtype=jnp.float32,
                                 minval=0.5, maxval=4.0)

    out = jax.block_until_ready(scalar_qed_tree_forward_batched(momenta, k=1))
    ref = _reference_batched(momenta, k=1)
    assert out.shape == (B, DIM, DIM)
    assert jnp.allclose(out, ref, rtol=1e-5, atol=1e-5), "batched mismatch vs reference"

    out1 = jax.block_until_ready(scalar_qed_tree_forward(momenta[0], k=0))
    ref1 = _reference_batched(momenta[:1], k=0)[0]
    assert jnp.allclose(out1, ref1, rtol=1e-5, atol=1e-5), "single mismatch vs reference"

    print("KERNEL_OK")
</pallas_src>

<mosaic_0001>
module attributes {stable_mosaic.version = 11 : i64} {
  func.func @_scalar_qed_tree_kernel(%arg0: i32, %arg1: memref<304x8xf32, #tpu.memory_space<vmem>>, %arg2: memref<304x64xf32, #tpu.memory_space<vmem>>) attributes {dimension_semantics = [#tpu.dimension_semantics<parallel>], iteration_bounds = array<i64: 1>, scalar_prefetch = 0 : i64, scratch_operands = 0 : i64, tpu.core_type = #tpu.core_type<tc>, window_params = [{transform_indices = @transform_0, window_bounds = array<i64: 304, 8>}, {transform_indices = @transform_1, window_bounds = array<i64: 304, 64>}]} {
    %c0 = arith.constant 0 : index
    %c0_0 = arith.constant 0 : index
    %0 = vector.load %arg1[%c0, %c0_0] : memref<304x8xf32, #tpu.memory_space<vmem>>, vector<304x8xf32>
    %cst = arith.constant 0.00666666683 : f32
    %1 = vector.broadcast %cst : f32 to vector<304x8xf32>
    %2 = arith.mulf %1, %0 : vector<304x8xf32>
    %3 = arith.mulf %0, %0 : vector<304x8xf32>
    %cst_1 = arith.constant 1.000000e+00 : f32
    %4 = vector.broadcast %cst_1 : f32 to vector<304x8xf32>
    %5 = arith.addf %4, %3 : vector<304x8xf32>
    %6 = math.rsqrt %5 : vector<304x8xf32>
    %7 = arith.mulf %2, %6 : vector<304x8xf32>
    %8 = tpu.iota {dimensions = array<i32: 1>} : vector<1x8xi32>
    %9 = vector.extract_strided_slice %7 {offsets = [0, 0], sizes = [304, 1], strides = [1, 1]} : vector<304x8xf32> to vector<304x1xf32>
    %10 = vector.broadcast %9 : vector<304x1xf32> to vector<304x8xf32>
    %11 = arith.mulf %10, %0 : vector<304x8xf32>
    %cst_2 = arith.constant 2.000000e-02 : f32
    %12 = vector.broadcast %cst_2 : f32 to vector<304x8xf32>
    %13 = arith.addf %12, %11 : vector<304x8xf32>
    %14 = math.absf %13 : vector<304x8xf32>
    %c0_i32 = arith.constant 0 : i32
    %15 = vector.broadcast %c0_i32 : i32 to vector<1x8xi32>
    %16 = arith.cmpi eq, %8, %15 : vector<1x8xi32>
    %cst_3 = arith.constant 1.000000e+00 : f32
    %17 = vector.broadcast %cst_3 : f32 to vector<304x8xf32>
    %18 = arith.addf %14, %17 : vector<304x8xf32>
    %19 = vector.shape_cast %16 : vector<1x8xi1> to vector<1x8xi1>
    %20 = vector.broadcast %19 : vector<1x8xi1> to vector<304x8xi1>
    %21 = arith.select %20, %18, %14 : vector<304x8xi1>, vector<304x8xf32>
    %c0_4 = arith.constant 0 : index
    %c0_5 = arith.constant 0 : index
    %22 = vector.load %arg2[%c0_4, %c0_5] : memref<304x64xf32, #tpu.memory_space<vmem>>, vector<304x8xf32>
    tpu.vector_store %arg2[%c0_4, %c0_5], %21 {strides = array<i32>} : memref<304x64xf32, #tpu.memory_space<vmem>>, vector<304x8xf32>,
    %23 = vector.extract_strided_slice %7 {offsets = [0, 1], sizes = [304, 1], strides = [1, 1]} : vector<304x8xf32> to vector<304x1xf32>
    %24 = vector.broadcast %23 : vector<304x1xf32> to vector<304x8xf32>
    %25 = arith.mulf %24, %0 : vector<304x8xf32>
    %cst_6 = arith.constant 2.000000e-02 : f32
    %26 = vector.broadcast %cst_6 : f32 to vector<304x8xf32>
    %27 = arith.addf %26, %25 : vector<304x8xf32>
    %28 = math.absf %27 : vector<304x8xf32>
    %c1_i32 = arith.constant 1 : i32
    %29 = vector.broadcast %c1_i32 : i32 to vector<1x8xi32>
    %30 = arith.cmpi eq, %8, %29 : vector<1x8xi32>
    %cst_7 = arith.constant 1.000000e+00 : f32
    %31 = vector.broadcast %cst_7 : f32 to vector<304x8xf32>
    %32 = arith.addf %28, %31 : vector<304x8xf32>
    %33 = vector.shape_cast %30 : vector<1x8xi1> to vector<1x8xi1>
    %34 = vector.broadcast %33 : vector<1x8xi1> to vector<304x8xi1>
    %35 = arith.select %34, %32, %28 : vector<304x8xi1>, vector<304x8xf32>
    %c0_8 = arith.constant 0 : index
    %c8 = arith.constant 8 : index
    %36 = vector.load %arg2[%c0_8, %c8] : memref<304x64xf32, #tpu.memory_space<vmem>>, vector<304x8xf32>
    tpu.vector_store %arg2[%c0_8, %c8], %35 {strides = array<i32>} : memref<304x64xf32, #tpu.memory_space<vmem>>, vector<304x8xf32>,
    %37 = vector.extract_strided_slice %7 {offsets = [0, 2], sizes = [304, 1], strides = [1, 1]} : vector<304x8xf32> to vector<304x1xf32>
    %38 = vector.broadcast %37 : vector<304x1xf32> to vector<304x8xf32>
    %39 = arith.mulf %38, %0 : vector<304x8xf32>
    %cst_9 = arith.constant 2.000000e-02 : f32
    %40 = vector.broadcast %cst_9 : f32 to vector<304x8xf32>
    %41 = arith.addf %40, %39 : vector<304x8xf32>
    %42 = math.absf %41 : vector<304x8xf32>
    %c2_i32 = arith.constant 2 : i32
    %43 = vector.broadcast %c2_i32 : i32 to vector<1x8xi32>
    %44 = arith.cmpi eq, %8, %43 : vector<1x8xi32>
    %cst_10 = arith.constant 1.000000e+00 : f32
    %45 = vector.broadcast %cst_10 : f32 to vector<304x8xf32>
    %46 = arith.addf %42, %45 : vector<304x8xf32>
    %47 = vector.shape_cast %44 : vector<1x8xi1> to vector<1x8xi1>
    %48 = vector.broadcast %47 : vector<1x8xi1> to vector<304x8xi1>
    %49 = arith.select %48, %46, %42 : vector<304x8xi1>, vector<304x8xf32>
    %c0_11 = arith.constant 0 : index
    %c16 = arith.constant 16 : index
    %50 = vector.load %arg2[%c0_11, %c16] : memref<304x64xf32, #tpu.memory_space<vmem>>, vector<304x8xf32>
    tpu.vector_store %arg2[%c0_11, %c16], %49 {strides = array<i32>} : memref<304x64xf32, #tpu.memory_space<vmem>>, vector<304x8xf32>,
    %51 = vector.extract_strided_slice %7 {offsets = [0, 3], sizes = [304, 1], strides = [1, 1]} : vector<304x8xf32> to vector<304x1xf32>
    %52 = vector.broadcast %51 : vector<304x1xf32> to vector<304x8xf32>
    %53 = arith.mulf %52, %0 : vector<304x8xf32>
    %cst_12 = arith.constant 2.000000e-02 : f32
    %54 = vector.broadcast %cst_12 : f32 to vector<304x8xf32>
    %55 = arith.addf %54, %53 : vector<304x8xf32>
    %56 = math.absf %55 : vector<304x8xf32>
    %c3_i32 = arith.constant 3 : i32
    %57 = vector.broadcast %c3_i32 : i32 to vector<1x8xi32>
    %58 = arith.cmpi eq, %8, %57 : vector<1x8xi32>
    %cst_13 = arith.constant 1.000000e+00 : f32
    %59 = vector.broadcast %cst_13 : f32 to vector<304x8xf32>
    %60 = arith.addf %56, %59 : vector<304x8xf32>
    %61 = vector.shape_cast %58 : vector<1x8xi1> to vector<1x8xi1>
    %62 = vector.broadcast %61 : vector<1x8xi1> to vector<304x8xi1>
    %63 = arith.select %62, %60, %56 : vector<304x8xi1>, vector<304x8xf32>
    %c0_14 = arith.constant 0 : index
    %c24 = arith.constant 24 : index
    %64 = vector.load %arg2[%c0_14, %c24] : memref<304x64xf32, #tpu.memory_space<vmem>>, vector<304x8xf32>
    tpu.vector_store %arg2[%c0_14, %c24], %63 {strides = array<i32>} : memref<304x64xf32, #tpu.memory_space<vmem>>, vector<304x8xf32>,
    %65 = vector.extract_strided_slice %7 {offsets = [0, 4], sizes = [304, 1], strides = [1, 1]} : vector<304x8xf32> to vector<304x1xf32>
    %66 = vector.broadcast %65 : vector<304x1xf32> to vector<304x8xf32>
    %67 = arith.mulf %66, %0 : vector<304x8xf32>
    %cst_15 = arith.constant 2.000000e-02 : f32
    %68 = vector.broadcast %cst_15 : f32 to vector<304x8xf32>
    %69 = arith.addf %68, %67 : vector<304x8xf32>
    %70 = math.absf %69 : vector<304x8xf32>
    %c4_i32 = arith.constant 4 : i32
    %71 = vector.broadcast %c4_i32 : i32 to vector<1x8xi32>
    %72 = arith.cmpi eq, %8, %71 : vector<1x8xi32>
    %cst_16 = arith.constant 1.000000e+00 : f32
    %73 = vector.broadcast %cst_16 : f32 to vector<304x8xf32>
    %74 = arith.addf %70, %73 : vector<304x8xf32>
    %75 = vector.shape_cast %72 : vector<1x8xi1> to vector<1x8xi1>
    %76 = vector.broadcast %75 : vector<1x8xi1> to vector<304x8xi1>
    %77 = arith.select %76, %74, %70 : vector<304x8xi1>, vector<304x8xf32>
    %c0_17 = arith.constant 0 : index
    %c32 = arith.constant 32 : index
    %78 = vector.load %arg2[%c0_17, %c32] : memref<304x64xf32, #tpu.memory_space<vmem>>, vector<304x8xf32>
    tpu.vector_store %arg2[%c0_17, %c32], %77 {strides = array<i32>} : memref<304x64xf32, #tpu.memory_space<vmem>>, vector<304x8xf32>,
    %79 = vector.extract_strided_slice %7 {offsets = [0, 5], sizes = [304, 1], strides = [1, 1]} : vector<304x8xf32> to vector<304x1xf32>
    %80 = vector.broadcast %79 : vector<304x1xf32> to vector<304x8xf32>
    %81 = arith.mulf %80, %0 : vector<304x8xf32>
    %cst_18 = arith.constant 2.000000e-02 : f32
    %82 = vector.broadcast %cst_18 : f32 to vector<304x8xf32>
    %83 = arith.addf %82, %81 : vector<304x8xf32>
    %84 = math.absf %83 : vector<304x8xf32>
    %c5_i32 = arith.constant 5 : i32
    %85 = vector.broadcast %c5_i32 : i32 to vector<1x8xi32>
    %86 = arith.cmpi eq, %8, %85 : vector<1x8xi32>
    %cst_19 = arith.constant 1.000000e+00 : f32
    %87 = vector.broadcast %cst_19 : f32 to vector<304x8xf32>
    %88 = arith.addf %84, %87 : vector<304x8xf32>
    %89 = vector.shape_cast %86 : vector<1x8xi1> to vector<1x8xi1>
    %90 = vector.broadcast %89 : vector<1x8xi1> to vector<304x8xi1>
    %91 = arith.select %90, %88, %84 : vector<304x8xi1>, vector<304x8xf32>
    %c0_20 = arith.constant 0 : index
    %c40 = arith.constant 40 : index
    %92 = vector.load %arg2[%c0_20, %c40] : memref<304x64xf32, #tpu.memory_space<vmem>>, vector<304x8xf32>
    tpu.vector_store %arg2[%c0_20, %c40], %91 {strides = array<i32>} : memref<304x64xf32, #tpu.memory_space<vmem>>, vector<304x8xf32>,
    %93 = vector.extract_strided_slice %7 {offsets = [0, 6], sizes = [304, 1], strides = [1, 1]} : vector<304x8xf32> to vector<304x1xf32>
    %94 = vector.broadcast %93 : vector<304x1xf32> to vector<304x8xf32>
    %95 = arith.mulf %94, %0 : vector<304x8xf32>
    %cst_21 = arith.constant 2.000000e-02 : f32
    %96 = vector.broadcast %cst_21 : f32 to vector<304x8xf32>
    %97 = arith.addf %96, %95 : vector<304x8xf32>
    %98 = math.absf %97 : vector<304x8xf32>
    %c6_i32 = arith.constant 6 : i32
    %99 = vector.broadcast %c6_i32 : i32 to vector<1x8xi32>
    %100 = arith.cmpi eq, %8, %99 : vector<1x8xi32>
    %cst_22 = arith.constant 1.000000e+00 : f32
    %101 = vector.broadcast %cst_22 : f32 to vector<304x8xf32>
    %102 = arith.addf %98, %101 : vector<304x8xf32>
    %103 = vector.shape_cast %100 : vector<1x8xi1> to vector<1x8xi1>
    %104 = vector.broadcast %103 : vector<1x8xi1> to vector<304x8xi1>
    %105 = arith.select %104, %102, %98 : vector<304x8xi1>, vector<304x8xf32>
    %c0_23 = arith.constant 0 : index
    %c48 = arith.constant 48 : index
    %106 = vector.load %arg2[%c0_23, %c48] : memref<304x64xf32, #tpu.memory_space<vmem>>, vector<304x8xf32>
    tpu.vector_store %arg2[%c0_23, %c48], %105 {strides = array<i32>} : memref<304x64xf32, #tpu.memory_space<vmem>>, vector<304x8xf32>,
    %107 = vector.extract_strided_slice %7 {offsets = [0, 7], sizes = [304, 1], strides = [1, 1]} : vector<304x8xf32> to vector<304x1xf32>
    %108 = vector.broadcast %107 : vector<304x1xf32> to vector<304x8xf32>
    %109 = arith.mulf %108, %0 : vector<304x8xf32>
    %cst_24 = arith.constant 2.000000e-02 : f32
    %110 = vector.broadcast %cst_24 : f32 to vector<304x8xf32>
    %111 = arith.addf %110, %109 : vector<304x8xf32>
    %112 = math.absf %111 : vector<304x8xf32>
    %c7_i32 = arith.constant 7 : i32
    %113 = vector.broadcast %c7_i32 : i32 to vector<1x8xi32>
    %114 = arith.cmpi eq, %8, %113 : vector<1x8xi32>
    %cst_25 = arith.constant 1.000000e+00 : f32
    %115 = vector.broadcast %cst_25 : f32 to vector<304x8xf32>
    %116 = arith.addf %112, %115 : vector<304x8xf32>
    %117 = vector.shape_cast %114 : vector<1x8xi1> to vector<1x8xi1>
    %118 = vector.broadcast %117 : vector<1x8xi1> to vector<304x8xi1>
    %119 = arith.select %118, %116, %112 : vector<304x8xi1>, vector<304x8xf32>
    %c0_26 = arith.constant 0 : index
    %c56 = arith.constant 56 : index
    %120 = vector.load %arg2[%c0_26, %c56] : memref<304x64xf32, #tpu.memory_space<vmem>>, vector<304x8xf32>
    tpu.vector_store %arg2[%c0_26, %c56], %119 {strides = array<i32>} : memref<304x64xf32, #tpu.memory_space<vmem>>, vector<304x8xf32>,
    return
  }
  func.func @transform_0(%arg0: i32) -> (i32, i32) {
    %c0_i32 = arith.constant 0 : i32
    %c0_i32_0 = arith.constant 0 : i32
    return %arg0, %c0_i32 : i32, i32
  }
  func.func @transform_1(%arg0: i32) -> (i32, i32) {
    %c0_i32 = arith.constant 0 : i32
    %c0_i32_0 = arith.constant 0 : i32
    return %arg0, %c0_i32 : i32, i32
  }
}

</mosaic_0001>

<llo_original>
// kernel: tpu_custom_call.1
$region0: #{tpu_custom_call.1}
  #allocation0 [shape = 'u32[]', space=smem, size = 0x4, offset = 0x4, fixed_abs, tag = 'smem constant byte address 0x4 - core index']
  #allocation1 [shape = 'u32[144,128]{1,0:T(1,128)}', space=vmem, size = 0x12000, scoped, tag = 'internal scratch']
  %s0 = inlined_call_operand.vmem [shape: f32[304,8], index: 0, kind: input, shape index: {}]
  %s1 = inlined_call_operand.vmem [shape: f32[304,64], index: 1, kind: output, shape index: {}]
  %s2 = sld [smem:[#allocation0]]
  $region14: #{tpu_custom_call.1} parent=0
    _
  %s4 = ssub.s32 1, %s2
  %s5 = scalar_select 0, %s4, %s2
  // Predicated region
  $region2: #{tpu_custom_call.1} parent=0 // pred_check
    _
  $region3: #{tpu_custom_call.1} parent=0 // pred_check_branch
    %7 = sbr.rel (0) target = $region5
  $region4: #{tpu_custom_call.1} parent=0 // pred_region
    _
  $region5: #{tpu_custom_call.1} parent=0 // pred_fallthru
    _
  %v8 = vld [vmem:[%s0] sm:$0xff]
  %v9 = vld [vmem:[%s0 + $0x8] sm:$0xff]
  %v10 = vld [vmem:[%s0 + $0x10] sm:$0xff]
  %v11 = vld [vmem:[%s0 + $0x18] sm:$0xff]
  %v12 = vld [vmem:[%s0 + $0x20] sm:$0xff]
  %v13 = vld [vmem:[%s0 + $0x28] sm:$0xff]
  %v14 = vld [vmem:[%s0 + $0x30] sm:$0xff]
  %v15 = vld [vmem:[%s0 + $0x38] sm:$0xff]
  %v16 = vld [vmem:[%s0 + $0x40] sm:$0xff]
  %v17 = vld [vmem:[%s0 + $0x48] sm:$0xff]
  %v18 = vld [vmem:[%s0 + $0x50] sm:$0xff]
  %v19 = vld [vmem:[%s0 + $0x58] sm:$0xff]
  %v20 = vld [vmem:[%s0 + $0x60] sm:$0xff]
  %v21 = vld [vmem:[%s0 + $0x68] sm:$0xff]
  %v22 = vld [vmem:[%s0 + $0x70] sm:$0xff]
  %v23 = vld [vmem:[%s0 + $0x78] sm:$0xff]
  %v24 = vld [vmem:[%s0 + $0x80] sm:$0xff]
  %v25 = vld [vmem:[%s0 + $0x88] sm:$0xff]
  %v26 = vld [vmem:[%s0 + $0x90] sm:$0xff]
  %v27 = vld [vmem:[%s0 + $0x98] sm:$0xff]
  %v28 = vld [vmem:[%s0 + $0xa0] sm:$0xff]
  %v29 = vld [vmem:[%s0 + $0xa8] sm:$0xff]
  %v30 = vld [vmem:[%s0 + $0xb0] sm:$0xff]
  %v31 = vld [vmem:[%s0 + $0xb8] sm:$0xff]
  %v32 = vld [vmem:[%s0 + $0xc0] sm:$0xff]
  %v33 = vld [vmem:[%s0 + $0xc8] sm:$0xff]
  %v34 = vld [vmem:[%s0 + $0xd0] sm:$0xff]
  %v35 = vld [vmem:[%s0 + $0xd8] sm:$0xff]
  %v36 = vld [vmem:[%s0 + $0xe0] sm:$0xff]
  %v37 = vld [vmem:[%s0 + $0xe8] sm:$0xff]
  %v38 = vld [vmem:[%s0 + $0xf0] sm:$0xff]
  %v39 = vld [vmem:[%s0 + $0xf8] sm:$0xff]
  %v40 = vld [vmem:[%s0 + $0x100] sm:$0xff]
  %v41 = vld [vmem:[%s0 + $0x108] sm:$0xff]
  %v42 = vld [vmem:[%s0 + $0x110] sm:$0xff]
  %v43 = vld [vmem:[%s0 + $0x118] sm:$0xff]
  %v44 = vld [vmem:[%s0 + $0x120] sm:$0xff]
  %v45 = vld [vmem:[%s0 + $0x128] sm:$0xff]
  %v46 = vmul.f32 %v8, 0.006666667
  %v47 = vmul.f32 %v9, 0.006666667
  %v48 = vmul.f32 %v10, 0.006666667
  %v49 = vmul.f32 %v11, 0.006666667
  %v50 = vmul.f32 %v12, 0.006666667
  %v51 = vmul.f32 %v13, 0.006666667
  %v52 = vmul.f32 %v14, 0.006666667
  %v53 = vmul.f32 %v15, 0.006666667
  %v54 = vmul.f32 %v16, 0.006666667
  %v55 = vmul.f32 %v17, 0.006666667
  %v56 = vmul.f32 %v18, 0.006666667
  %v57 = vmul.f32 %v19, 0.006666667
  %v58 = vmul.f32 %v20, 0.006666667
  %v59 = vmul.f32 %v21, 0.006666667
  %v60 = vmul.f32 %v22, 0.006666667
  %v61 = vmul.f32 %v23, 0.006666667
  %v62 = vmul.f32 %v24, 0.006666667
  %v63 = vmul.f32 %v25, 0.006666667
  %v64 = vmul.f32 %v26, 0.006666667
  %v65 = vmul.f32 %v27, 0.006666667
  %v66 = vmul.f32 %v28, 0.006666667
  %v67 = vmul.f32 %v29, 0.006666667
  %v68 = vmul.f32 %v30, 0.006666667
  %v69 = vmul.f32 %v31, 0.006666667
  %v70 = vmul.f32 %v32, 0.006666667
  %v71 = vmul.f32 %v33, 0.006666667
  %v72 = vmul.f32 %v34, 0.006666667
  %v73 = vmul.f32 %v35, 0.006666667
  %v74 = vmul.f32 %v36, 0.006666667
  %v75 = vmul.f32 %v37, 0.006666667
  %v76 = vmul.f32 %v38, 0.006666667
  %v77 = vmul.f32 %v39, 0.006666667
  %v78 = vmul.f32 %v40, 0.006666667
  %v79 = vmul.f32 %v41, 0.006666667
  %v80 = vmul.f32 %v42, 0.006666667
  %v81 = vmul.f32 %v43, 0.006666667
  %v82 = vmul.f32 %v44, 0.006666667
  %v83 = vmul.f32 %v45, 0.006666667
  %v84 = vmul.f32 %v8, %v8
  %v85 = vmul.f32 %v9, %v9
  %v86 = vmul.f32 %v10, %v10
  %v87 = vmul.f32 %v11, %v11
  %v88 = vmul.f32 %v12, %v12
  %v89 = vmul.f32 %v13, %v13
  %v90 = vmul.f32 %v14, %v14
  %v91 = vmul.f32 %v15, %v15
  %v92 = vmul.f32 %v16, %v16
  %v93 = vmul.f32 %v17, %v17
  %v94 = vmul.f32 %v18, %v18
  %v95 = vmul.f32 %v19, %v19
  %v96 = vmul.f32 %v20, %v20
  %v97 = vmul.f32 %v21, %v21
  %v98 = vmul.f32 %v22, %v22
  %v99 = vmul.f32 %v23, %v23
  %v100 = vmul.f32 %v24, %v24
  %v101 = vmul.f32 %v25, %v25
  %v102 = vmul.f32 %v26, %v26
  %v103 = vmul.f32 %v27, %v27
  %v104 = vmul.f32 %v28, %v28
  %v105 = vmul.f32 %v29, %v29
  %v106 = vmul.f32 %v30, %v30
  %v107 = vmul.f32 %v31, %v31
  %v108 = vmul.f32 %v32, %v32
  %v109 = vmul.f32 %v33, %v33
  %v110 = vmul.f32 %v34, %v34
  %v111 = vmul.f32 %v35, %v35
  %v112 = vmul.f32 %v36, %v36
  %v113 = vmul.f32 %v37, %v37
  %v114 = vmul.f32 %v38, %v38
  %v115 = vmul.f32 %v39, %v39
  %v116 = vmul.f32 %v40, %v40
  %v117 = vmul.f32 %v41, %v41
  %v118 = vmul.f32 %v42, %v42
  %v119 = vmul.f32 %v43, %v43
  %v120 = vmul.f32 %v44, %v44
  %v121 = vmul.f32 %v45, %v45
  %v122 = vadd.f32 %v84, 1.0
  %v123 = vadd.f32 %v85, 1.0
  %v124 = vadd.f32 %v86, 1.0
  %v125 = vadd.f32 %v87, 1.0
  %v126 = vadd.f32 %v88, 1.0
  %v127 = vadd.f32 %v89, 1.0
  %v128 = vadd.f32 %v90, 1.0
  %v129 = vadd.f32 %v91, 1.0
  %v130 = vadd.f32 %v92, 1.0
  %v131 = vadd.f32 %v93, 1.0
  %v132 = vadd.f32 %v94, 1.0
  %v133 = vadd.f32 %v95, 1.0
  %v134 = vadd.f32 %v96, 1.0
  %v135 = vadd.f32 %v97, 1.0
  %v136 = vadd.f32 %v98, 1.0
  %v137 = vadd.f32 %v99, 1.0
  %v138 = vadd.f32 %v100, 1.0
  %v139 = vadd.f32 %v101, 1.0
  %v140 = vadd.f32 %v102, 1.0
  %v141 = vadd.f32 %v103, 1.0
  %v142 = vadd.f32 %v104, 1.0
  %v143 = vadd.f32 %v105, 1.0
  %v144 = vadd.f32 %v106, 1.0
  %v145 = vadd.f32 %v107, 1.0
  %v146 = vadd.f32 %v108, 1.0
  %v147 = vadd.f32 %v109, 1.0
  %v148 = vadd.f32 %v110, 1.0
  %v149 = vadd.f32 %v111, 1.0
  %v150 = vadd.f32 %v112, 1.0
  %v151 = vadd.f32 %v113, 1.0
  %v152 = vadd.f32 %v114, 1.0
  %v153 = vadd.f32 %v115, 1.0
  %v154 = vadd.f32 %v116, 1.0
  %v155 = vadd.f32 %v117, 1.0
  %v156 = vadd.f32 %v118, 1.0
  %v157 = vadd.f32 %v119, 1.0
  %v158 = vadd.f32 %v120, 1.0
  %v159 = vadd.f32 %v121, 1.0
  %v160 = vrsqrt.pop %v122
  %v161 = vrsqrt.pop %v123
  %v162 = vrsqrt.pop %v124
  %v163 = vrsqrt.pop %v125
  %v164 = vrsqrt.pop %v126
  %v165 = vrsqrt.pop %v127
  %v166 = vrsqrt.pop %v128
  %v167 = vrsqrt.pop %v129
  %v168 = vrsqrt.pop %v130
  %v169 = vrsqrt.pop %v131
  %v170 = vrsqrt.pop %v132
  %v171 = vrsqrt.pop %v133
  %v172 = vrsqrt.pop %v134
  %v173 = vrsqrt.pop %v135
  %v174 = vrsqrt.pop %v136
  %v175 = vrsqrt.pop %v137
  %v176 = vrsqrt.pop %v138
  %v177 = vrsqrt.pop %v139
  %v178 = vrsqrt.pop %v140
  %v179 = vrsqrt.pop %v141
  %v180 = vrsqrt.pop %v142
  %v181 = vrsqrt.pop %v143
  %v182 = vrsqrt.pop %v144
  %v183 = vrsqrt.pop %v145
  %v184 = vrsqrt.pop %v146
  %v185 = vrsqrt.pop %v147
  %v186 = vrsqrt.pop %v148
  %v187 = vrsqrt.pop %v149
  %v188 = vrsqrt.pop %v150
  %v189 = vrsqrt.pop %v151
  %v190 = vrsqrt.pop %v152
  %v191 = vrsqrt.pop %v153
  %v192 = vrsqrt.pop %v154
  %v193 = vrsqrt.pop %v155
  %v194 = vrsqrt.pop %v156
  %v195 = vrsqrt.pop %v157
  %v196 = vrsqrt.pop %v158
  %v197 = vrsqrt.pop %v159
  %v198 = vmul.f32 %v46, %v160
  %v199 = vmul.f32 %v47, %v161
  %v200 = vmul.f32 %v48, %v162
  %v201 = vmul.f32 %v49, %v163
  %v202 = vmul.f32 %v50, %v164
  %v203 = vmul.f32 %v51, %v165
  %v204 = vmul.f32 %v52, %v166
  %v205 = vmul.f32 %v53, %v167
  %v206 = vmul.f32 %v54, %v168
  %v207 = vmul.f32 %v55, %v169
  %v208 = vmul.f32 %v56, %v170
  %v209 = vmul.f32 %v57, %v171
  %v210 = vmul.f32 %v58, %v172
  %v211 = vmul.f32 %v59, %v173
  %v212 = vmul.f32 %v60, %v174
  %v213 = vmul.f32 %v61, %v175
  %v214 = vmul.f32 %v62, %v176
  %v215 = vmul.f32 %v63, %v177
  %v216 = vmul.f32 %v64, %v178
  %v217 = vmul.f32 %v65, %v179
  %v218 = vmul.f32 %v66, %v180
  %v219 = vmul.f32 %v67, %v181
  %v220 = vmul.f32 %v68, %v182
  %v221 = vmul.f32 %v69, %v183
  %v222 = vmul.f32 %v70, %v184
  %v223 = vmul.f32 %v71, %v185
  %v224 = vmul.f32 %v72, %v186
  %v225 = vmul.f32 %v73, %v187
  %v226 = vmul.f32 %v74, %v188
  %v227 = vmul.f32 %v75, %v189
  %v228 = vmul.f32 %v76, %v190
  %v229 = vmul.f32 %v77, %v191
  %v230 = vmul.f32 %v78, %v192
  %v231 = vmul.f32 %v79, %v193
  %v232 = vmul.f32 %v80, %v194
  %v233 = vmul.f32 %v81, %v195
  %v234 = vmul.f32 %v82, %v196
  %v235 = vmul.f32 %v83, %v197
  %v236 = vlaneseq
  %v237 = vand.u32 %v236, 127
  %239 = vset.pattern.permute.xlu0 0
  %240 = vperm.xlu0 %239, %v198
  %v241 = vpop.permute.xlu0 %240
  %244 = vset.pattern.permute.xlu0 0
  %245 = vperm.xlu0 %244, %v199
  %v246 = vpop.permute.xlu0 %245
  %249 = vset.pattern.permute.xlu0 0
  %250 = vperm.xlu0 %249, %v200
  %v251 = vpop.permute.xlu0 %250
  %254 = vset.pattern.permute.xlu0 0
  %255 = vperm.xlu0 %254, %v201
  %v256 = vpop.permute.xlu0 %255
  %259 = vset.pattern.permute.xlu0 0
  %260 = vperm.xlu0 %259, %v202
  %v261 = vpop.permute.xlu0 %260
  %264 = vset.pattern.permute.xlu0 0
  %265 = vperm.xlu0 %264, %v203
  %v266 = vpop.permute.xlu0 %265
  %269 = vset.pattern.permute.xlu0 0
  %270 = vperm.xlu0 %269, %v204
  %v271 = vpop.permute.xlu0 %270
  %274 = vset.pattern.permute.xlu0 0
  %275 = vperm.xlu0 %274, %v205
  %v276 = vpop.permute.xlu0 %275
  %279 = vset.pattern.permute.xlu0 0
  %280 = vperm.xlu0 %279, %v206
  %v281 = vpop.permute.xlu0 %280
  %284 = vset.pattern.permute.xlu0 0
  %285 = vperm.xlu0 %284, %v207
  %v286 = vpop.permute.xlu0 %285
  %289 = vset.pattern.permute.xlu0 0
  %290 = vperm.xlu0 %289, %v208
  %v291 = vpop.permute.xlu0 %290
  %294 = vset.pattern.permute.xlu0 0
  %295 = vperm.xlu0 %294, %v209
  %v296 = vpop.permute.xlu0 %295
  %299 = vset.pattern.permute.xlu0 0
  %300 = vperm.xlu0 %299, %v210
  %v301 = vpop.permute.xlu0 %300
  %304 = vset.pattern.permute.xlu0 0
  %305 = vperm.xlu0 %304, %v211
  %v306 = vpop.permute.xlu0 %305
  %309 = vset.pattern.permute.xlu0 0
  %310 = vperm.xlu0 %309, %v212
  %v311 = vpop.permute.xlu0 %310
  %314 = vset.pattern.permute.xlu0 0
  %315 = vperm.xlu0 %314, %v213
  %v316 = vpop.permute.xlu0 %315
  %319 = vset.pattern.permute.xlu0 0
  %320 = vperm.xlu0 %319, %v214
  %v321 = vpop.permute.xlu0 %320
  %324 = vset.pattern.permute.xlu0 0
  %325 = vperm.xlu0 %324, %v215
  %v326 = vpop.permute.xlu0 %325
  %329 = vset.pattern.permute.xlu0 0
  %330 = vperm.xlu0 %329, %v216
  %v331 = vpop.permute.xlu0 %330
  %334 = vset.pattern.permute.xlu0 0
  %335 = vperm.xlu0 %334, %v217
  %v336 = vpop.permute.xlu0 %335
  %339 = vset.pattern.permute.xlu0 0
  %340 = vperm.xlu0 %339, %v218
  %v341 = vpop.permute.xlu0 %340
  %344 = vset.pattern.permute.xlu0 0
  %345 = vperm.xlu0 %344, %v219
  %v346 = vpop.permute.xlu0 %345
  %349 = vset.pattern.permute.xlu0 0
  %350 = vperm.xlu0 %349, %v220
  %v351 = vpop.permute.xlu0 %350
  %354 = vset.pattern.permute.xlu0 0
  %355 = vperm.xlu0 %354, %v221
  %v356 = vpop.permute.xlu0 %355
  %359 = vset.pattern.permute.xlu0 0
  %360 = vperm.xlu0 %359, %v222
  %v361 = vpop.permute.xlu0 %360
  %364 = vset.pattern.permute.xlu0 0
  %365 = vperm.xlu0 %364, %v223
  %v366 = vpop.permute.xlu0 %365
  %369 = vset.pattern.permute.xlu0 0
  %370 = vperm.xlu0 %369, %v224
  %v371 = vpop.permute.xlu0 %370
  %374 = vset.pattern.permute.xlu0 0
  %375 = vperm.xlu0 %374, %v225
  %v376 = vpop.permute.xlu0 %375
  %379 = vset.pattern.permute.xlu0 0
  %380 = vperm.xlu0 %379, %v226
  %v381 = vpop.permute.xlu0 %380
  %384 = vset.pattern.permute.xlu0 0
  %385 = vperm.xlu0 %384, %v227
  %v386 = vpop.permute.xlu0 %385
  %389 = vset.pattern.permute.xlu0 0
  %390 = vperm.xlu0 %389, %v228
  %v391 = vpop.permute.xlu0 %390
  %394 = vset.pattern.permute.xlu0 0
  %395 = vperm.xlu0 %394, %v229
  %v396 = vpop.permute.xlu0 %395
  %399 = vset.pattern.permute.xlu0 0
  %400 = vperm.xlu0 %399, %v230
  %v401 = vpop.permute.xlu0 %400
  %404 = vset.pattern.permute.xlu0 0
  %405 = vperm.xlu0 %404, %v231
  %v406 = vpop.permute.xlu0 %405
  %409 = vset.pattern.permute.xlu0 0
  %410 = vperm.xlu0 %409, %v232
  %v411 = vpop.permute.xlu0 %410
  %414 = vset.pattern.permute.xlu0 0
  %415 = vperm.xlu0 %414, %v233
  %v416 = vpop.permute.xlu0 %415
  %419 = vset.pattern.permute.xlu0 0
  %420 = vperm.xlu0 %419, %v234
  %v421 = vpop.permute.xlu0 %420
  %424 = vset.pattern.permute.xlu0 0
  %425 = vperm.xlu0 %424, %v235
  %v426 = vpop.permute.xlu0 %425
  %v428 = vmul.f32 %v241, %v8
  %v429 = vmul.f32 %v246, %v9
  %v430 = vmul.f32 %v251, %v10
  %v431 = vmul.f32 %v256, %v11
  %v432 = vmul.f32 %v261, %v12
  %v433 = vmul.f32 %v266, %v13
  %v434 = vmul.f32 %v271, %v14
  %v435 = vmul.f32 %v276, %v15
  %v436 = vmul.f32 %v281, %v16
  %v437 = vmul.f32 %v286, %v17
  %v438 = vmul.f32 %v291, %v18
  %v439 = vmul.f32 %v296, %v19
  %v440 = vmul.f32 %v301, %v20
  %v441 = vmul.f32 %v306, %v21
  %v442 = vmul.f32 %v311, %v22
  %v443 = vmul.f32 %v316, %v23
  %v444 = vmul.f32 %v321, %v24
  %v445 = vmul.f32 %v326, %v25
  %v446 = vmul.f32 %v331, %v26
  %v447 = vmul.f32 %v336, %v27
  %v448 = vmul.f32 %v341, %v28
  %v449 = vmul.f32 %v346, %v29
  %v450 = vmul.f32 %v351, %v30
  %v451 = vmul.f32 %v356, %v31
  %v452 = vmul.f32 %v361, %v32
  %v453 = vmul.f32 %v366, %v33
  %v454 = vmul.f32 %v371, %v34
  %v455 = vmul.f32 %v376, %v35
  %v456 = vmul.f32 %v381, %v36
  %v457 = vmul.f32 %v386, %v37
  %v458 = vmul.f32 %v391, %v38
  %v459 = vmul.f32 %v396, %v39
  %v460 = vmul.f32 %v401, %v40
  %v461 = vmul.f32 %v406, %v41
  %v462 = vmul.f32 %v411, %v42
  %v463 = vmul.f32 %v416, %v43
  %v464 = vmul.f32 %v421, %v44
  %v465 = vmul.f32 %v426, %v45
  %v466 = vadd.f32 %v428, 0.02
  %v467 = vadd.f32 %v429, 0.02
  %v468 = vadd.f32 %v430, 0.02
  %v469 = vadd.f32 %v431, 0.02
  %v470 = vadd.f32 %v432, 0.02
  %v471 = vadd.f32 %v433, 0.02
  %v472 = vadd.f32 %v434, 0.02
  %v473 = vadd.f32 %v435, 0.02
  %v474 = vadd.f32 %v436, 0.02
  %v475 = vadd.f32 %v437, 0.02
  %v476 = vadd.f32 %v438, 0.02
  %v477 = vadd.f32 %v439, 0.02
  %v478 = vadd.f32 %v440, 0.02
  %v479 = vadd.f32 %v441, 0.02
  %v480 = vadd.f32 %v442, 0.02
  %v481 = vadd.f32 %v443, 0.02
  %v482 = vadd.f32 %v444, 0.02
  %v483 = vadd.f32 %v445, 0.02
  %v484 = vadd.f32 %v446, 0.02
  %v485 = vadd.f32 %v447, 0.02
  %v486 = vadd.f32 %v448, 0.02
  %v487 = vadd.f32 %v449, 0.02
  %v488 = vadd.f32 %v450, 0.02
  %v489 = vadd.f32 %v451, 0.02
  %v490 = vadd.f32 %v452, 0.02
  %v491 = vadd.f32 %v453, 0.02
  %v492 = vadd.f32 %v454, 0.02
  %v493 = vadd.f32 %v455, 0.02
  %v494 = vadd.f32 %v456, 0.02
  %v495 = vadd.f32 %v457, 0.02
  %v496 = vadd.f32 %v458, 0.02
  %v497 = vadd.f32 %v459, 0.02
  %v498 = vadd.f32 %v460, 0.02
  %v499 = vadd.f32 %v461, 0.02
  %v500 = vadd.f32 %v462, 0.02
  %v501 = vadd.f32 %v463, 0.02
  %v502 = vadd.f32 %v464, 0.02
  %v503 = vadd.f32 %v465, 0.02
  %v504 = vand.u32 2147483647, %v466
  %v505 = vand.u32 2147483647, %v467
  %v506 = vand.u32 2147483647, %v468
  %v507 = vand.u32 2147483647, %v469
  %v508 = vand.u32 2147483647, %v470
  %v509 = vand.u32 2147483647, %v471
  %v510 = vand.u32 2147483647, %v472
  %v511 = vand.u32 2147483647, %v473
  %v512 = vand.u32 2147483647, %v474
  %v513 = vand.u32 2147483647, %v475
  %v514 = vand.u32 2147483647, %v476
  %v515 = vand.u32 2147483647, %v477
  %v516 = vand.u32 2147483647, %v478
  %v517 = vand.u32 2147483647, %v479
  %v518 = vand.u32 2147483647, %v480
  %v519 = vand.u32 2147483647, %v481
  %v520 = vand.u32 2147483647, %v482
  %v521 = vand.u32 2147483647, %v483
  %v522 = vand.u32 2147483647, %v484
  %v523 = vand.u32 2147483647, %v485
  %v524 = vand.u32 2147483647, %v486
  %v525 = vand.u32 2147483647, %v487
  %v526 = vand.u32 2147483647, %v488
  %v527 = vand.u32 2147483647, %v489
  %v528 = vand.u32 2147483647, %v490
  %v529 = vand.u32 2147483647, %v491
  %v530 = vand.u32 2147483647, %v492
  %v531 = vand.u32 2147483647, %v493
  %v532 = vand.u32 2147483647, %v494
  %v533 = vand.u32 2147483647, %v495
  %v534 = vand.u32 2147483647, %v496
  %v535 = vand.u32 2147483647, %v497
  %v536 = vand.u32 2147483647, %v498
  %v537 = vand.u32 2147483647, %v499
  %v538 = vand.u32 2147483647, %v500
  %v539 = vand.u32 2147483647, %v501
  %v540 = vand.u32 2147483647, %v502
  %v541 = vand.u32 2147483647, %v503
  %vm542 = vcmp.eq.s32.totalorder %v237, 0
  %v543 = vadd.f32 %v504, 1.0
  %v544 = vadd.f32 %v505, 1.0
  %v545 = vadd.f32 %v506, 1.0
  %v546 = vadd.f32 %v507, 1.0
  %v547 = vadd.f32 %v508, 1.0
  %v548 = vadd.f32 %v509, 1.0
  %v549 = vadd.f32 %v510, 1.0
  %v550 = vadd.f32 %v511, 1.0
  %v551 = vadd.f32 %v512, 1.0
  %v552 = vadd.f32 %v513, 1.0
  %v553 = vadd.f32 %v514, 1.0
  %v554 = vadd.f32 %v515, 1.0
  %v555 = vadd.f32 %v516, 1.0
  %v556 = vadd.f32 %v517, 1.0
  %v557 = vadd.f32 %v518, 1.0
  %v558 = vadd.f32 %v519, 1.0
  %v559 = vadd.f32 %v520, 1.0
  %v560 = vadd.f32 %v521, 1.0
  %v561 = vadd.f32 %v522, 1.0
  %v562 = vadd.f32 %v523, 1.0
  %v563 = vadd.f32 %v524, 1.0
  %v564 = vadd.f32 %v525, 1.0
  %v565 = vadd.f32 %v526, 1.0
  %v566 = vadd.f32 %v527, 1.0
  %v567 = vadd.f32 %v528, 1.0
  %v568 = vadd.f32 %v529, 1.0
  %v569 = vadd.f32 %v530, 1.0
  %v570 = vadd.f32 %v531, 1.0
  %v571 = vadd.f32 %v532, 1.0
  %v572 = vadd.f32 %v533, 1.0
  %v573 = vadd.f32 %v534, 1.0
  %v574 = vadd.f32 %v535, 1.0
  %v575 = vadd.f32 %v536, 1.0
  %v576 = vadd.f32 %v537, 1.0
  %v577 = vadd.f32 %v538, 1.0
  %v578 = vadd.f32 %v539, 1.0
  %v579 = vadd.f32 %v540, 1.0
  %v580 = vadd.f32 %v541, 1.0
  %v581 = vsel %vm542, 1, 0
  %vm582 = vcmp.eq.s32.totalorder %v581, 1
  %v583 = vsel %vm582, %v543, %v504
  %v584 = vsel %vm582, %v544, %v505
  %v585 = vsel %vm582, %v545, %v506
  %v586 = vsel %vm582, %v546, %v507
  %v587 = vsel %vm582, %v547, %v508
  %v588 = vsel %vm582, %v548, %v509
  %v589 = vsel %vm582, %v549, %v510
  %v590 = vsel %vm582, %v550, %v511
  %v591 = vsel %vm582, %v551, %v512
  %v592 = vsel %vm582, %v552, %v513
  %v593 = vsel %vm582, %v553, %v514
  %v594 = vsel %vm582, %v554, %v515
  %v595 = vsel %vm582, %v555, %v516
  %v596 = vsel %vm582, %v556, %v517
  %v597 = vsel %vm582, %v557, %v518
  %v598 = vsel %vm582, %v558, %v519
  %v599 = vsel %vm582, %v559, %v520
  %v600 = vsel %vm582, %v560, %v521
  %v601 = vsel %vm582, %v561, %v522
  %v602 = vsel %vm582, %v562, %v523
  %v603 = vsel %vm582, %v563, %v524
  %v604 = vsel %vm582, %v564, %v525
  %v605 = vsel %vm582, %v565, %v526
  %v606 = vsel %vm582, %v566, %v527
  %v607 = vsel %vm582, %v567, %v528
  %v608 = vsel %vm582, %v568, %v529
  %v609 = vsel %vm582, %v569, %v530
  %v610 = vsel %vm582, %v570, %v531
  %v611 = vsel %vm582, %v571, %v532
  %v612 = vsel %vm582, %v572, %v533
  %v613 = vsel %vm582, %v573, %v534
  %v614 = vsel %vm582, %v574, %v535
  %v615 = vsel %vm582, %v575, %v536
  %v616 = vsel %vm582, %v576, %v537
  %v617 = vsel %vm582, %v577, %v538
  %v618 = vsel %vm582, %v578, %v539
  %v619 = vsel %vm582, %v579, %v540
  %v620 = vsel %vm582, %v580, %v541
  %vm621 = vcmask 64512
  %622 = vst.msk [vmem:[%s1] sm:$0xff] %vm621, %v583
  %623 = vst.msk [vmem:[%s1 + $0x8] sm:$0xff] %vm621, %v584
  %624 = vst.msk [vmem:[%s1 + $0x10] sm:$0xff] %vm621, %v585
  %625 = vst.msk [vmem:[%s1 + $0x18] sm:$0xff] %vm621, %v586
  %626 = vst.msk [vmem:[%s1 + $0x20] sm:$0xff] %vm621, %v587
  %627 = vst.msk [vmem:[%s1 + $0x28] sm:$0xff] %vm621, %v588
  %628 = vst.msk [vmem:[%s1 + $0x30] sm:$0xff] %vm621, %v589
  %629 = vst.msk [vmem:[%s1 + $0x38] sm:$0xff] %vm621, %v590
  %630 = vst.msk [vmem:[%s1 + $0x40] sm:$0xff] %vm621, %v591
  %631 = vst.msk [vmem:[%s1 + $0x48] sm:$0xff] %vm621, %v592
  %632 = vst.msk [vmem:[%s1 + $0x50] sm:$0xff] %vm621, %v593
  %633 = vst.msk [vmem:[%s1 + $0x58] sm:$0xff] %vm621, %v594
  %634 = vst.msk [vmem:[%s1 + $0x60] sm:$0xff] %vm621, %v595
  %635 = vst.msk [vmem:[%s1 + $0x68] sm:$0xff] %vm621, %v596
  %636 = vst.msk [vmem:[%s1 + $0x70] sm:$0xff] %vm621, %v597
  %637 = vst.msk [vmem:[%s1 + $0x78] sm:$0xff] %vm621, %v598
  %638 = vst.msk [vmem:[%s1 + $0x80] sm:$0xff] %vm621, %v599
  %639 = vst.msk [vmem:[%s1 + $0x88] sm:$0xff] %vm621, %v600
  %640 = vst.msk [vmem:[%s1 + $0x90] sm:$0xff] %vm621, %v601
  %641 = vst.msk [vmem:[%s1 + $0x98] sm:$0xff] %vm621, %v602
  %642 = vst.msk [vmem:[%s1 + $0xa0] sm:$0xff] %vm621, %v603
  %643 = vst.msk [vmem:[%s1 + $0xa8] sm:$0xff] %vm621, %v604
  %644 = vst.msk [vmem:[%s1 + $0xb0] sm:$0xff] %vm621, %v605
  %645 = vst.msk [vmem:[%s1 + $0xb8] sm:$0xff] %vm621, %v606
  %646 = vst.msk [vmem:[%s1 + $0xc0] sm:$0xff] %vm621, %v607
  %647 = vst.msk [vmem:[%s1 + $0xc8] sm:$0xff] %vm621, %v608
  %648 = vst.msk [vmem:[%s1 + $0xd0] sm:$0xff] %vm621, %v609
  %649 = vst.msk [vmem:[%s1 + $0xd8] sm:$0xff] %vm621, %v610
  %650 = vst.msk [vmem:[%s1 + $0xe0] sm:$0xff] %vm621, %v611
  %651 = vst.msk [vmem:[%s1 + $0xe8] sm:$0xff] %vm621, %v612
  %652 = vst.msk [vmem:[%s1 + $0xf0] sm:$0xff] %vm621, %v613
  %653 = vst.msk [vmem:[%s1 + $0xf8] sm:$0xff] %vm621, %v614
  %654 = vst.msk [vmem:[%s1 + $0x100] sm:$0xff] %vm621, %v615
  %655 = vst.msk [vmem:[%s1 + $0x108] sm:$0xff] %vm621, %v616
  %656 = vst.msk [vmem:[%s1 + $0x110] sm:$0xff] %vm621, %v617
  %657 = vst.msk [vmem:[%s1 + $0x118] sm:$0xff] %vm621, %v618
  %658 = vst.msk [vmem:[%s1 + $0x120] sm:$0xff] %vm621, %v619
  %659 = vst.msk [vmem:[%s1 + $0x128] sm:$0xff] %vm621, %v620
  %660 = vset.pattern.permute.xlu0 1
  %661 = vperm.xlu0 %660, %v198
  %v662 = vpop.permute.xlu0 %661
  %664 = vset.pattern.permute.xlu0 1
  %665 = vperm.xlu0 %664, %v199
  %v666 = vpop.permute.xlu0 %665
  %668 = vset.pattern.permute.xlu0 1
  %669 = vperm.xlu0 %668, %v200
  %v670 = vpop.permute.xlu0 %669
  %672 = vset.pattern.permute.xlu0 1
  %673 = vperm.xlu0 %672, %v201
  %v674 = vpop.permute.xlu0 %673
  %676 = vset.pattern.permute.xlu0 1
  %677 = vperm.xlu0 %676, %v202
  %v678 = vpop.permute.xlu0 %677
  %680 = vset.pattern.permute.xlu0 1
  %681 = vperm.xlu0 %680, %v203
  %v682 = vpop.permute.xlu0 %681
  %684 = vset.pattern.permute.xlu0 1
  %685 = vperm.xlu0 %684, %v204
  %v686 = vpop.permute.xlu0 %685
  %688 = vset.pattern.permute.xlu0 1
  %689 = vperm.xlu0 %688, %v205
  %v690 = vpop.permute.xlu0 %689
  %692 = vset.pattern.permute.xlu0 1
  %693 = vperm.xlu0 %692, %v206
  %v694 = vpop.permute.xlu0 %693
  %696 = vset.pattern.permute.xlu0 1
  %697 = vperm.xlu0 %696, %v207
  %v698 = vpop.permute.xlu0 %697
  %700 = vset.pattern.permute.xlu0 1
  %701 = vperm.xlu0 %700, %v208
  %v702 = vpop.permute.xlu0 %701
  %704 = vset.pattern.permute.xlu0 1
  %705 = vperm.xlu0 %704, %v209
  %v706 = vpop.permute.xlu0 %705
  %708 = vset.pattern.permute.xlu0 1
  %709 = vperm.xlu0 %708, %v210
  %v710 = vpop.permute.xlu0 %709
  %712 = vset.pattern.permute.xlu0 1
  %713 = vperm.xlu0 %712, %v211
  %v714 = vpop.permute.xlu0 %713
  %716 = vset.pattern.permute.xlu0 1
  %717 = vperm.xlu0 %716, %v212
  %v718 = vpop.permute.xlu0 %717
  %720 = vset.pattern.permute.xlu0 1
  %721 = vperm.xlu0 %720, %v213
  %v722 = vpop.permute.xlu0 %721
  %724 = vset.pattern.permute.xlu0 1
  %725 = vperm.xlu0 %724, %v214
  %v726 = vpop.permute.xlu0 %725
  %728 = vset.pattern.permute.xlu0 1
  %729 = vperm.xlu0 %728, %v215
  %v730 = vpop.permute.xlu0 %729
  %732 = vset.pattern.permute.xlu0 1
  %733 = vperm.xlu0 %732, %v216
  %v734 = vpop.permute.xlu0 %733
  %736 = vset.pattern.permute.xlu0 1
  %737 = vperm.xlu0 %736, %v217
  %v738 = vpop.permute.xlu0 %737
  %740 = vset.pattern.permute.xlu0 1
  %741 = vperm.xlu0 %740, %v218
  %v742 = vpop.permute.xlu0 %741
  %744 = vset.pattern.permute.xlu0 1
  %745 = vperm.xlu0 %744, %v219
  %v746 = vpop.permute.xlu0 %745
  %748 = vset.pattern.permute.xlu0 1
  %749 = vperm.xlu0 %748, %v220
  %v750 = vpop.permute.xlu0 %749
  %752 = vset.pattern.permute.xlu0 1
  %753 = vperm.xlu0 %752, %v221
  %v754 = vpop.permute.xlu0 %753
  %756 = vset.pattern.permute.xlu0 1
  %757 = vperm.xlu0 %756, %v222
  %v758 = vpop.permute.xlu0 %757
  %760 = vset.pattern.permute.xlu0 1
  %761 = vperm.xlu0 %760, %v223
  %v762 = vpop.permute.xlu0 %761
  %764 = vset.pattern.permute.xlu0 1
  %765 = vperm.xlu0 %764, %v224
  %v766 = vpop.permute.xlu0 %765
  %768 = vset.pattern.permute.xlu0 1
  %769 = vperm.xlu0 %768, %v225
  %v770 = vpop.permute.xlu0 %769
  %772 = vset.pattern.permute.xlu0 1
  %773 = vperm.xlu0 %772, %v226
  %v774 = vpop.permute.xlu0 %773
  %776 = vset.pattern.permute.xlu0 1
  %777 = vperm.xlu0 %776, %v227
  %v778 = vpop.permute.xlu0 %777
  %780 = vset.pattern.permute.xlu0 1
  %781 = vperm.xlu0 %780, %v228
  %v782 = vpop.permute.xlu0 %781
  %784 = vset.pattern.permute.xlu0 1
  %785 = vperm.xlu0 %784, %v229
  %v786 = vpop.permute.xlu0 %785
  %788 = vset.pattern.permute.xlu0 1
  %789 = vperm.xlu0 %788, %v230
  %v790 = vpop.permute.xlu0 %789
  %792 = vset.pattern.permute.xlu0 1
  %793 = vperm.xlu0 %792, %v231
  %v794 = vpop.permute.xlu0 %793
  %796 = vset.pattern.permute.xlu0 1
  %797 = vperm.xlu0 %796, %v232
  %v798 = vpop.permute.xlu0 %797
  %800 = vset.pattern.permute.xlu0 1
  %801 = vperm.xlu0 %800, %v233
  %v802 = vpop.permute.xlu0 %801
  %804 = vset.pattern.permute.xlu0 1
  %805 = vperm.xlu0 %804, %v234
  %v806 = vpop.permute.xlu0 %805
  %808 = vset.pattern.permute.xlu0 1
  %809 = vperm.xlu0 %808, %v235
  %v810 = vpop.permute.xlu0 %809
  %v812 = vmul.f32 %v662, %v8
  %v813 = vmul.f32 %v666, %v9
  %v814 = vmul.f32 %v670, %v10
  %v815 = vmul.f32 %v674, %v11
  %v816 = vmul.f32 %v678, %v12
  %v817 = vmul.f32 %v682, %v13
  %v818 = vmul.f32 %v686, %v14
  %v819 = vmul.f32 %v690, %v15
  %v820 = vmul.f32 %v694, %v16
  %v821 = vmul.f32 %v698, %v17
  %v822 = vmul.f32 %v702, %v18
  %v823 = vmul.f32 %v706, %v19
  %v824 = vmul.f32 %v710, %v20
  %v825 = vmul.f32 %v714, %v21
  %v826 = vmul.f32 %v718, %v22
  %v827 = vmul.f32 %v722, %v23
  %v828 = vmul.f32 %v726, %v24
  %v829 = vmul.f32 %v730, %v25
  %v830 = vmul.f32 %v734, %v26
  %v831 = vmul.f32 %v738, %v27
  %v832 = vmul.f32 %v742, %v28
  %v833 = vmul.f32 %v746, %v29
  %v834 = vmul.f32 %v750, %v30
  %v835 = vmul.f32 %v754, %v31
  %v836 = vmul.f32 %v758, %v32
  %v837 = vmul.f32 %v762, %v33
  %v838 = vmul.f32 %v766, %v34
  %v839 = vmul.f32 %v770, %v35
  %v840 = vmul.f32 %v774, %v36
  %v841 = vmul.f32 %v778, %v37
  %v842 = vmul.f32 %v782, %v38
  %v843 = vmul.f32 %v786, %v39
  %v844 = vmul.f32 %v790, %v40
  %v845 = vmul.f32 %v794, %v41
  %v846 = vmul.f32 %v798, %v42
  %v847 = vmul.f32 %v802, %v43
  %v848 = vmul.f32 %v806, %v44
  %v849 = vmul.f32 %v810, %v45
  %v850 = vadd.f32 %v812, 0.02
  %v851 = vadd.f32 %v813, 0.02
  %v852 = vadd.f32 %v814, 0.02
  %v853 = vadd.f32 %v815, 0.02
  %v854 = vadd.f32 %v816, 0.02
  %v855 = vadd.f32 %v817, 0.02
  %v856 = vadd.f32 %v818, 0.02
  %v857 = vadd.f32 %v819, 0.02
  %v858 = vadd.f32 %v820, 0.02
  %v859 = vadd.f32 %v821, 0.02
  %v860 = vadd.f32 %v822, 0.02
  %v861 = vadd.f32 %v823, 0.02
  %v862 = vadd.f32 %v824, 0.02
  %v863 = vadd.f32 %v825, 0.02
  %v864 = vadd.f32 %v826, 0.02
  %v865 = vadd.f32 %v827, 0.02
  %v866 = vadd.f32 %v828, 0.02
  %v867 = vadd.f32 %v829, 0.02
  %v868 = vadd.f32 %v830, 0.02
  %v869 = vadd.f32 %v831, 0.02
  %v870 = vadd.f32 %v832, 0.02
  %v871 = vadd.f32 %v833, 0.02
  %v872 = vadd.f32 %v834, 0.02
  %v873 = vadd.f32 %v835, 0.02
  %v874 = vadd.f32 %v836, 0.02
  %v875 = vadd.f32 %v837, 0.02
  %v876 = vadd.f32 %v838, 0.02
  %v877 = vadd.f32 %v839, 0.02
  %v878 = vadd.f32 %v840, 0.02
  %v879 = vadd.f32 %v841, 0.02
  %v880 = vadd.f32 %v842, 0.02
  %v881 = vadd.f32 %v843, 0.02
  %v882 = vadd.f32 %v844, 0.02
  %v883 = vadd.f32 %v845, 0.02
  %v884 = vadd.f32 %v846, 0.02
  %v885 = vadd.f32 %v847, 0.02
  %v886 = vadd.f32 %v848, 0.02
  %v887 = vadd.f32 %v849, 0.02
  %v888 = vand.u32 2147483647, %v850
  %v889 = vand.u32 2147483647, %v851
  %v890 = vand.u32 2147483647, %v852
  %v891 = vand.u32 2147483647, %v853
  %v892 = vand.u32 2147483647, %v854
  %v893 = vand.u32 2147483647, %v855
  %v894 = vand.u32 2147483647, %v856
  %v895 = vand.u32 2147483647, %v857
  %v896 = vand.u32 2147483647, %v858
  %v897 = vand.u32 2147483647, %v859
  %v898 = vand.u32 2147483647, %v860
  %v899 = vand.u32 2147483647, %v861
  %v900 = vand.u32 2147483647, %v862
  %v901 = vand.u32 2147483647, %v863
  %v902 = vand.u32 2147483647, %v864
  %v903 = vand.u32 2147483647, %v865
  %v904 = vand.u32 2147483647, %v866
  %v905 = vand.u32 2147483647, %v867
  %v906 = vand.u32 2147483647, %v868
  %v907 = vand.u32 2147483647, %v869
  %v908 = vand.u32 2147483647, %v870
  %v909 = vand.u32 2147483647, %v871
  %v910 = vand.u32 2147483647, %v872
  %v911 = vand.u32 2147483647, %v873
  %v912 = vand.u32 2147483647, %v874
  %v913 = vand.u32 2147483647, %v875
  %v914 = vand.u32 2147483647, %v876
  %v915 = vand.u32 2147483647, %v877
  %v916 = vand.u32 2147483647, %v878
  %v917 = vand.u32 2147483647, %v879
  %v918 = vand.u32 2147483647, %v880
  %v919 = vand.u32 2147483647, %v881
  %v920 = vand.u32 2147483647, %v882
  %v921 = vand.u32 2147483647, %v883
  %v922 = vand.u32 2147483647, %v884
  %v923 = vand.u32 2147483647, %v885
  %v924 = vand.u32 2147483647, %v886
  %v925 = vand.u32 2147483647, %v887
  %vm926 = vcmp.eq.s32.totalorder %v237, 1
  %v927 = vadd.f32 %v888, 1.0
  %v928 = vadd.f32 %v889, 1.0
  %v929 = vadd.f32 %v890, 1.0
  %v930 = vadd.f32 %v891, 1.0
  %v931 = vadd.f32 %v892, 1.0
  %v932 = vadd.f32 %v893, 1.0
  %v933 = vadd.f32 %v894, 1.0
  %v934 = vadd.f32 %v895, 1.0
  %v935 = vadd.f32 %v896, 1.0
  %v936 = vadd.f32 %v897, 1.0
  %v937 = vadd.f32 %v898, 1.0
  %v938 = vadd.f32 %v899, 1.0
  %v939 = vadd.f32 %v900, 1.0
  %v940 = vadd.f32 %v901, 1.0
  %v941 = vadd.f32 %v902, 1.0
  %v942 = vadd.f32 %v903, 1.0
  %v943 = vadd.f32 %v904, 1.0
  %v944 = vadd.f32 %v905, 1.0
  %v945 = vadd.f32 %v906, 1.0
  %v946 = vadd.f32 %v907, 1.0
  %v947 = vadd.f32 %v908, 1.0
  %v948 = vadd.f32 %v909, 1.0
  %v949 = vadd.f32 %v910, 1.0
  %v950 = vadd.f32 %v911, 1.0
  %v951 = vadd.f32 %v912, 1.0
  %v952 = vadd.f32 %v913, 1.0
  %v953 = vadd.f32 %v914, 1.0
  %v954 = vadd.f32 %v915, 1.0
  %v955 = vadd.f32 %v916, 1.0
  %v956 = vadd.f32 %v917, 1.0
  %v957 = vadd.f32 %v918, 1.0
  %v958 = vadd.f32 %v919, 1.0
  %v959 = vadd.f32 %v920, 1.0
  %v960 = vadd.f32 %v921, 1.0
  %v961 = vadd.f32 %v922, 1.0
  %v962 = vadd.f32 %v923, 1.0
  %v963 = vadd.f32 %v924, 1.0
  %v964 = vadd.f32 %v925, 1.0
  %v965 = vsel %vm926, 1, 0
  %vm966 = vcmp.eq.s32.totalorder %v965, 1
  %v967 = vsel %vm966, %v927, %v888
  %v968 = vsel %vm966, %v928, %v889
  %v969 = vsel %vm966, %v929, %v890
  %v970 = vsel %vm966, %v930, %v891
  %v971 = vsel %vm966, %v931, %v892
  %v972 = vsel %vm966, %v932, %v893
  %v973 = vsel %vm966, %v933, %v894
  %v974 = vsel %vm966, %v934, %v895
  %v975 = vsel %vm966, %v935, %v896
  %v976 = vsel %vm966, %v936, %v897
  %v977 = vsel %vm966, %v937, %v898
  %v978 = vsel %vm966, %v938, %v899
  %v979 = vsel %vm966, %v939, %v900
  %v980 = vsel %vm966, %v940, %v901
  %v981 = vsel %vm966, %v941, %v902
  %v982 = vsel %vm966, %v942, %v903
  %v983 = vsel %vm966, %v943, %v904
  %v984 = vsel %vm966, %v944, %v905
  %v985 = vsel %vm966, %v945, %v906
  %v986 = vsel %vm966, %v946, %v907
  %v987 = vsel %vm966, %v947, %v908
  %v988 = vsel %vm966, %v948, %v909
  %v989 = vsel %vm966, %v949, %v910
  %v990 = vsel %vm966, %v950, %v911
  %v991 = vsel %vm966, %v951, %v912
  %v992 = vsel %vm966, %v952, %v913
  %v993 = vsel %vm966, %v953, %v914
  %v994 = vsel %vm966, %v954, %v915
  %v995 = vsel %vm966, %v955, %v916
  %v996 = vsel %vm966, %v956, %v917
  %v997 = vsel %vm966, %v957, %v918
  %v998 = vsel %vm966, %v958, %v919
  %v999 = vsel %vm966, %v959, %v920
  %v1000 = vsel %vm966, %v960, %v921
  %v1001 = vsel %vm966, %v961, %v922
  %v1002 = vsel %vm966, %v962, %v923
  %v1003 = vsel %vm966, %v963, %v924
  %v1004 = vsel %vm966, %v964, %v925
  %1043 = vrot.lane.b32.xlu0 %v967, 8
  %v1044 = vpop.permute.xlu0 %1043
  %1045 = vrot.lane.b32.xlu0 %v968, 8
  %v1046 = vpop.permute.xlu0 %1045
  %1047 = vrot.lane.b32.xlu0 %v969, 8
  %v1048 = vpop.permute.xlu0 %1047
  %1049 = vrot.lane.b32.xlu0 %v970, 8
  %v1050 = vpop.permute.xlu0 %1049
  %1051 = vrot.lane.b32.xlu0 %v971, 8
  %v1052 = vpop.permute.xlu0 %1051
  %1053 = vrot.lane.b32.xlu0 %v972, 8
  %v1054 = vpop.permute.xlu0 %1053
  %1055 = vrot.lane.b32.xlu0 %v973, 8
  %v1056 = vpop.permute.xlu0 %1055
  %1057 = vrot.lane.b32.xlu0 %v974, 8
  %v1058 = vpop.permute.xlu0 %1057
  %1059 = vrot.lane.b32.xlu0 %v975, 8
  %v1060 = vpop.permute.xlu0 %1059
  %1061 = vrot.lane.b32.xlu0 %v976, 8
  %v1062 = vpop.permute.xlu0 %1061
  %1063 = vrot.lane.b32.xlu0 %v977, 8
  %v1064 = vpop.permute.xlu0 %1063
  %1065 = vrot.lane.b32.xlu0 %v978, 8
  %v1066 = vpop.permute.xlu0 %1065
  %1067 = vrot.lane.b32.xlu0 %v979, 8
  %v1068 = vpop.permute.xlu0 %1067
  %1069 = vrot.lane.b32.xlu0 %v980, 8
  %v1070 = vpop.permute.xlu0 %1069
  %1071 = vrot.lane.b32.xlu0 %v981, 8
  %v1072 = vpop.permute.xlu0 %1071
  %1073 = vrot.lane.b32.xlu0 %v982, 8
  %v1074 = vpop.permute.xlu0 %1073
  %1075 = vrot.lane.b32.xlu0 %v983, 8
  %v1076 = vpop.permute.xlu0 %1075
  %1077 = vrot.lane.b32.xlu0 %v984, 8
  %v1078 = vpop.permute.xlu0 %1077
  %1079 = vrot.lane.b32.xlu0 %v985, 8
  %v1080 = vpop.permute.xlu0 %1079
  %1081 = vrot.lane.b32.xlu0 %v986, 8
  %v1082 = vpop.permute.xlu0 %1081
  %1083 = vrot.lane.b32.xlu0 %v987, 8
  %v1084 = vpop.permute.xlu0 %1083
  %1085 = vrot.lane.b32.xlu0 %v988, 8
  %v1086 = vpop.permute.xlu0 %1085
  %1087 = vrot.lane.b32.xlu0 %v989, 8
  %v1088 = vpop.permute.xlu0 %1087
  %1089 = vrot.lane.b32.xlu0 %v990, 8
  %v1090 = vpop.permute.xlu0 %1089
  %1091 = vrot.lane.b32.xlu0 %v991, 8
  %v1092 = vpop.permute.xlu0 %1091
  %1093 = vrot.lane.b32.xlu0 %v992, 8
  %v1094 = vpop.permute.xlu0 %1093
  %1095 = vrot.lane.b32.xlu0 %v993, 8
  %v1096 = vpop.permute.xlu0 %1095
  %1097 = vrot.lane.b32.xlu0 %v994, 8
  %v1098 = vpop.permute.xlu0 %1097
  %1099 = vrot.lane.b32.xlu0 %v995, 8
  %v1100 = vpop.permute.xlu0 %1099
  %1101 = vrot.lane.b32.xlu0 %v996, 8
  %v1102 = vpop.permute.xlu0 %1101
  %1103 = vrot.lane.b32.xlu0 %v997, 8
  %v1104 = vpop.permute.xlu0 %1103
  %1105 = vrot.lane.b32.xlu0 %v998, 8
  %v1106 = vpop.permute.xlu0 %1105
  %1107 = vrot.lane.b32.xlu0 %v999, 8
  %v1108 = vpop.permute.xlu0 %1107
  %1109 = vrot.lane.b32.xlu0 %v1000, 8
  %v1110 = vpop.permute.xlu0 %1109
  %1111 = vrot.lane.b32.xlu0 %v1001, 8
  %v1112 = vpop.permute.xlu0 %1111
  %1113 = vrot.lane.b32.xlu0 %v1002, 8
  %v1114 = vpop.permute.xlu0 %1113
  %1115 = vrot.lane.b32.xlu0 %v1003, 8
  %v1116 = vpop.permute.xlu0 %1115
  %1117 = vrot.lane.b32.xlu0 %v1004, 8
  %v1118 = vpop.permute.xlu0 %1117
  %vm1157 = vcmask 130112
  %1158 = vst.msk [vmem:[%s1] sm:$0xff] %vm1157, %v1044
  %1159 = vst.msk [vmem:[%s1 + $0x8] sm:$0xff] %vm1157, %v1046
  %1160 = vst.msk [vmem:[%s1 + $0x10] sm:$0xff] %vm1157, %v1048
  %1161 = vst.msk [vmem:[%s1 + $0x18] sm:$0xff] %vm1157, %v1050
  %1162 = vst.msk [vmem:[%s1 + $0x20] sm:$0xff] %vm1157, %v1052
  %1163 = vst.msk [vmem:[%s1 + $0x28] sm:$0xff] %vm1157, %v1054
  %1164 = vst.msk [vmem:[%s1 + $0x30] sm:$0xff] %vm1157, %v1056
  %1165 = vst.msk [vmem:[%s1 + $0x38] sm:$0xff] %vm1157, %v1058
  %1166 = vst.msk [vmem:[%s1 + $0x40] sm:$0xff] %vm1157, %v1060
  %1167 = vst.msk [vmem:[%s1 + $0x48] sm:$0xff] %vm1157, %v1062
  %1168 = vst.msk [vmem:[%s1 + $0x50] sm:$0xff] %vm1157, %v1064
  %1169 = vst.msk [vmem:[%s1 + $0x58] sm:$0xff] %vm1157, %v1066
  %1170 = vst.msk [vmem:[%s1 + $0x60] sm:$0xff] %vm1157, %v1068
  %1171 = vst.msk [vmem:[%s1 + $0x68] sm:$0xff] %vm1157, %v1070
  %1172 = vst.msk [vmem:[%s1 + $0x70] sm:$0xff] %vm1157, %v1072
  %1173 = vst.msk [vmem:[%s1 + $0x78] sm:$0xff] %vm1157, %v1074
  %1174 = vst.msk [vmem:[%s1 + $0x80] sm:$0xff] %vm1157, %v1076
  %1175 = vst.msk [vmem:[%s1 + $0x88] sm:$0xff] %vm1157, %v1078
  %1176 = vst.msk [vmem:[%s1 + $0x90] sm:$0xff] %vm1157, %v1080
  %1177 = vst.msk [vmem:[%s1 + $0x98] sm:$0xff] %vm1157, %v1082
  %1178 = vst.msk [vmem:[%s1 + $0xa0] sm:$0xff] %vm1157, %v1084
  %1179 = vst.msk [vmem:[%s1 + $0xa8] sm:$0xff] %vm1157, %v1086
  %1180 = vst.msk [vmem:[%s1 + $0xb0] sm:$0xff] %vm1157, %v1088
  %1181 = vst.msk [vmem:[%s1 + $0xb8] sm:$0xff] %vm1157, %v1090
  %1182 = vst.msk [vmem:[%s1 + $0xc0] sm:$0xff] %vm1157, %v1092
  %1183 = vst.msk [vmem:[%s1 + $0xc8] sm:$0xff] %vm1157, %v1094
  %1184 = vst.msk [vmem:[%s1 + $0xd0] sm:$0xff] %vm1157, %v1096
  %1185 = vst.msk [vmem:[%s1 + $0xd8] sm:$0xff] %vm1157, %v1098
  %1186 = vst.msk [vmem:[%s1 + $0xe0] sm:$0xff] %vm1157, %v1100
  %1187 = vst.msk [vmem:[%s1 + $0xe8] sm:$0xff] %vm1157, %v1102
  %1188 = vst.msk [vmem:[%s1 + $0xf0] sm:$0xff] %vm1157, %v1104
  %1189 = vst.msk [vmem:[%s1 + $0xf8] sm:$0xff] %vm1157, %v1106
  %1190 = vst.msk [vmem:[%s1 + $0x100] sm:$0xff] %vm1157, %v1108
  %1191 = vst.msk [vmem:[%s1 + $0x108] sm:$0xff] %vm1157, %v1110
  %1192 = vst.msk [vmem:[%s1 + $0x110] sm:$0xff] %vm1157, %v1112
  %1193 = vst.msk [vmem:[%s1 + $0x118] sm:$0xff] %vm1157, %v1114
  %1194 = vst.msk [vmem:[%s1 + $0x120] sm:$0xff] %vm1157, %v1116
  %1195 = vst.msk [vmem:[%s1 + $0x128] sm:$0xff] %vm1157, %v1118
  %1196 = vset.pattern.permute.xlu0 2
  %1197 = vperm.xlu0 %1196, %v198
  %v1198 = vpop.permute.xlu0 %1197
  %1200 = vset.pattern.permute.xlu0 2
  %1201 = vperm.xlu0 %1200, %v199
  %v1202 = vpop.permute.xlu0 %1201
  %1204 = vset.pattern.permute.xlu0 2
  %1205 = vperm.xlu0 %1204, %v200
  %v1206 = vpop.permute.xlu0 %1205
  %1208 = vset.pattern.permute.xlu0 2
  %1209 = vperm.xlu0 %1208, %v201
  %v1210 = vpop.permute.xlu0 %1209
  %1212 = vset.pattern.permute.xlu0 2
  %1213 = vperm.xlu0 %1212, %v202
  %v1214 = vpop.permute.xlu0 %1213
  %1216 = vset.pattern.permute.xlu0 2
  %1217 = vperm.xlu0 %1216, %v203
  %v1218 = vpop.permute.xlu0 %1217
  %1220 = vset.pattern.permute.xlu0 2
  %1221 = vperm.xlu0 %1220, %v204
  %v1222 = vpop.permute.xlu0 %1221
  %1224 = vset.pattern.permute.xlu0 2
  %1225 = vperm.xlu0 %1224, %v205
  %v1226 = vpop.permute.xlu0 %1225
  %1228 = vset.pattern.permute.xlu0 2
  %1229 = vperm.xlu0 %1228, %v206
  %v1230 = vpop.permute.xlu0 %1229
  %1232 = vset.pattern.permute.xlu0 2
  %1233 = vperm.xlu0 %1232, %v207
  %v1234 = vpop.permute.xlu0 %1233
  %1236 = vset.pattern.permute.xlu0 2
  %1237 = vperm.xlu0 %1236, %v208
  %v1238 = vpop.permute.xlu0 %1237
  %1240 = vset.pattern.permute.xlu0 2
  %1241 = vperm.xlu0 %1240, %v209
  %v1242 = vpop.permute.xlu0 %1241
  %1244 = vset.pattern.permute.xlu0 2
  %1245 = vperm.xlu0 %1244, %v210
  %v1246 = vpop.permute.xlu0 %1245
  %1248 = vset.pattern.permute.xlu0 2
  %1249 = vperm.xlu0 %1248, %v211
  %v1250 = vpop.permute.xlu0 %1249
  %1252 = vset.pattern.permute.xlu0 2
  %1253 = vperm.xlu0 %1252, %v212
  %v1254 = vpop.permute.xlu0 %1253
  %1256 = vset.pattern.permute.xlu0 2
  %1257 = vperm.xlu0 %1256, %v213
  %v1258 = vpop.permute.xlu0 %1257
  %1260 = vset.pattern.permute.xlu0 2
  %1261 = vperm.xlu0 %1260, %v214
  %v1262 = vpop.permute.xlu0 %1261
  %1264 = vset.pattern.permute.xlu0 2
  %1265 = vperm.xlu0 %1264, %v215
  %v1266 = vpop.permute.xlu0 %1265
  %1268 = vset.pattern.permute.xlu0 2
  %1269 = vperm.xlu0 %1268, %v216
  %v1270 = vpop.permute.xlu0 %1269
  %1272 = vset.pattern.permute.xlu0 2
  %1273 = vperm.xlu0 %1272, %v217
  %v1274 = vpop.permute.xlu0 %1273
  %1276 = vset.pattern.permute.xlu0 2
  %1277 = vperm.xlu0 %1276, %v218
  %v1278 = vpop.permute.xlu0 %1277
  %1280 = vset.pattern.permute.xlu0 2
  %1281 = vperm.xlu0 %1280, %v219
  %v1282 = vpop.permute.xlu0 %1281
  %1284 = vset.pattern.permute.xlu0 2
  %1285 = vperm.xlu0 %1284, %v220
  %v1286 = vpop.permute.xlu0 %1285
  %1288 = vset.pattern.permute.xlu0 2
  %1289 = vperm.xlu0 %1288, %v221
  %v1290 = vpop.permute.xlu0 %1289
  %1292 = vset.pattern.permute.xlu0 2
  %1293 = vperm.xlu0 %1292, %v222
  %v1294 = vpop.permute.xlu0 %1293
  %1296 = vset.pattern.permute.xlu0 2
  %1297 = vperm.xlu0 %1296, %v223
  %v1298 = vpop.permute.xlu0 %1297
  %1300 = vset.pattern.permute.xlu0 2
  %1301 = vperm.xlu0 %1300, %v224
  %v1302 = vpop.permute.xlu0 %1301
  %1304 = vset.pattern.permute.xlu0 2
  %1305 = vperm.xlu0 %1304, %v225
  %v1306 = vpop.permute.xlu0 %1305
  %1308 = vset.pattern.permute.xlu0 2
  %1309 = vperm.xlu0 %1308, %v226
  %v1310 = vpop.permute.xlu0 %1309
  %1312 = vset.pattern.permute.xlu0 2
  %1313 = vperm.xlu0 %1312, %v227
  %v1314 = vpop.permute.xlu0 %1313
  %1316 = vset.pattern.permute.xlu0 2
  %1317 = vperm.xlu0 %1316, %v228
  %v1318 = vpop.permute.xlu0 %1317
  %1320 = vset.pattern.permute.xlu0 2
  %1321 = vperm.xlu0 %1320, %v229
  %v1322 = vpop.permute.xlu0 %1321
  %1324 = vset.pattern.permute.xlu0 2
  %1325 = vperm.xlu0 %1324, %v230
  %v1326 = vpop.permute.xlu0 %1325
  %1328 = vset.pattern.permute.xlu0 2
  %1329 = vperm.xlu0 %1328, %v231
  %v1330 = vpop.permute.xlu0 %1329
  %1332 = vset.pattern.permute.xlu0 2
  %1333 = vperm.xlu0 %1332, %v232
  %v1334 = vpop.permute.xlu0 %1333
  %1336 = vset.pattern.permute.xlu0 2
  %1337 = vperm.xlu0 %1336, %v233
  %v1338 = vpop.permute.xlu0 %1337
  %1340 = vset.pattern.permute.xlu0 2
  %1341 = vperm.xlu0 %1340, %v234
  %v1342 = vpop.permute.xlu0 %1341
  %1344 = vset.pattern.permute.xlu0 2
  %1345 = vperm.xlu0 %1344, %v235
  %v1346 = vpop.permute.xlu0 %1345
  %v1348 = vmul.f32 %v1198, %v8
  %v1349 = vmul.f32 %v1202, %v9
  %v1350 = vmul.f32 %v1206, %v10
  %v1351 = vmul.f32 %v1210, %v11
  %v1352 = vmul.f32 %v1214, %v12
  %v1353 = vmul.f32 %v1218, %v13
  %v1354 = vmul.f32 %v1222, %v14
  %v1355 = vmul.f32 %v1226, %v15
  %v1356 = vmul.f32 %v1230, %v16
  %v1357 = vmul.f32 %v1234, %v17
  %v1358 = vmul.f32 %v1238, %v18
  %v1359 = vmul.f32 %v1242, %v19
  %v1360 = vmul.f32 %v1246, %v20
  %v1361 = vmul.f32 %v1250, %v21
  %v1362 = vmul.f32 %v1254, %v22
  %v1363 = vmul.f32 %v1258, %v23
  %v1364 = vmul.f32 %v1262, %v24
  %v1365 = vmul.f32 %v1266, %v25
  %v1366 = vmul.f32 %v1270, %v26
  %v1367 = vmul.f32 %v1274, %v27
  %v1368 = vmul.f32 %v1278, %v28
  %v1369 = vmul.f32 %v1282, %v29
  %v1370 = vmul.f32 %v1286, %v30
  %v1371 = vmul.f32 %v1290, %v31
  %v1372 = vmul.f32 %v1294, %v32
  %v1373 = vmul.f32 %v1298, %v33
  %v1374 = vmul.f32 %v1302, %v34
  %v1375 = vmul.f32 %v1306, %v35
  %v1376 = vmul.f32 %v1310, %v36
  %v1377 = vmul.f32 %v1314, %v37
  %v1378 = vmul.f32 %v1318, %v38
  %v1379 = vmul.f32 %v1322, %v39
  %v1380 = vmul.f32 %v1326, %v40
  %v1381 = vmul.f32 %v1330, %v41
  %v1382 = vmul.f32 %v1334, %v42
  %v1383 = vmul.f32 %v1338, %v43
  %v1384 = vmul.f32 %v1342, %v44
  %v1385 = vmul.f32 %v1346, %v45
  %v1386 = vadd.f32 %v1348, 0.02
  %v1387 = vadd.f32 %v1349, 0.02
  %v1388 = vadd.f32 %v1350, 0.02
  %v1389 = vadd.f32 %v1351, 0.02
  %v1390 = vadd.f32 %v1352, 0.02
  %v1391 = vadd.f32 %v1353, 0.02
  %v1392 = vadd.f32 %v1354, 0.02
  %v1393 = vadd.f32 %v1355, 0.02
  %v1394 = vadd.f32 %v1356, 0.02
  %v1395 = vadd.f32 %v1357, 0.02
  %v1396 = vadd.f32 %v1358, 0.02
  %v1397 = vadd.f32 %v1359, 0.02
  %v1398 = vadd.f32 %v1360, 0.02
  %v1399 = vadd.f32 %v1361, 0.02
  %v1400 = vadd.f32 %v1362, 0.02
  %v1401 = vadd.f32 %v1363, 0.02
  %v1402 = vadd.f32 %v1364, 0.02
  %v1403 = vadd.f32 %v1365, 0.02
  %v1404 = vadd.f32 %v1366, 0.02
  %v1405 = vadd.f32 %v1367, 0.02
  %v1406 = vadd.f32 %v1368, 0.02
  %v1407 = vadd.f32 %v1369, 0.02
  %v1408 = vadd.f32 %v1370, 0.02
  %v1409 = vadd.f32 %v1371, 0.02
  %v1410 = vadd.f32 %v1372, 0.02
  %v1411 = vadd.f32 %v1373, 0.02
  %v1412 = vadd.f32 %v1374, 0.02
  %v1413 = vadd.f32 %v1375, 0.02
  %v1414 = vadd.f32 %v1376, 0.02
  %v1415 = vadd.f32 %v1377, 0.02
  %v1416 = vadd.f32 %v1378, 0.02
  %v1417 = vadd.f32 %v1379, 0.02
  %v1418 = vadd.f32 %v1380, 0.02
  %v1419 = vadd.f32 %v1381, 0.02
  %v1420 = vadd.f32 %v1382, 0.02
  %v1421 = vadd.f32 %v1383, 0.02
  %v1422 = vadd.f32 %v1384, 0.02
  %v1423 = vadd.f32 %v1385, 0.02
  %v1424 = vand.u32 2147483647, %v1386
  %v1425 = vand.u32 2147483647, %v1387
  %v1426 = vand.u32 2147483647, %v1388
  %v1427 = vand.u32 2147483647, %v1389
  %v1428 = vand.u32 2147483647, %v1390
  %v1429 = vand.u32 2147483647, %v1391
  %v1430 = vand.u32 2147483647, %v1392
  %v1431 = vand.u32 2147483647, %v1393
  %v1432 = vand.u32 2147483647, %v1394
  %v1433 = vand.u32 2147483647, %v1395
  %v1434 = vand.u32 2147483647, %v1396
  %v1435 = vand.u32 2147483647, %v1397
  %v1436 = vand.u32 2147483647, %v1398
  %v1437 = vand.u32 2147483647, %v1399
  %v1438 = vand.u32 2147483647, %v1400
  %v1439 = vand.u32 2147483647, %v1401
  %v1440 = vand.u32 2147483647, %v1402
  %v1441 = vand.u32 2147483647, %v1403
  %v1442 = vand.u32 2147483647, %v1404
  %v1443 = vand.u32 2147483647, %v1405
  %v1444 = vand.u32 2147483647, %v1406
  %v1445 = vand.u32 2147483647, %v1407
  %v1446 = vand.u32 2147483647, %v1408
  %v1447 = vand.u32 2147483647, %v1409
  %v1448 = vand.u32 2147483647, %v1410
  %v1449 = vand.u32 2147483647, %v1411
  %v1450 = vand.u32 2147483647, %v1412
  %v1451 = vand.u32 2147483647, %v1413
  %v1452 = vand.u32 2147483647, %v1414
  %v1453 = vand.u32 2147483647, %v1415
  %v1454 = vand.u32 2147483647, %v1416
  %v1455 = vand.u32 2147483647, %v1417
  %v1456 = vand.u32 2147483647, %v1418
  %v1457 = vand.u32 2147483647, %v1419
  %v1458 = vand.u32 2147483647, %v1420
  %v1459 = vand.u32 2147483647, %v1421
  %v1460 = vand.u32 2147483647, %v1422
  %v1461 = vand.u32 2147483647, %v1423
  %vm1462 = vcmp.eq.s32.totalorder %v237, 2
  %v1463 = vadd.f32 %v1424, 1.0
  %v1464 = vadd.f32 %v1425, 1.0
  %v1465 = vadd.f32 %v1426, 1.0
  %v1466 = vadd.f32 %v1427, 1.0
  %v1467 = vadd.f32 %v1428, 1.0
  %v1468 = vadd.f32 %v1429, 1.0
  %v1469 = vadd.f32 %v1430, 1.0
  %v1470 = vadd.f32 %v1431, 1.0
  %v1471 = vadd.f32 %v1432, 1.0
  %v1472 = vadd.f32 %v1433, 1.0
  %v1473 = vadd.f32 %v1434, 1.0
  %v1474 = vadd.f32 %v1435, 1.0
  %v1475 = vadd.f32 %v1436, 1.0
  %v1476 = vadd.f32 %v1437, 1.0
  %v1477 = vadd.f32 %v1438, 1.0
  %v1478 = vadd.f32 %v1439, 1.0
  %v1479 = vadd.f32 %v1440, 1.0
  %v1480 = vadd.f32 %v1441, 1.0
  %v1481 = vadd.f32 %v1442, 1.0
  %v1482 = vadd.f32 %v1443, 1.0
  %v1483 = vadd.f32 %v1444, 1.0
  %v1484 = vadd.f32 %v1445, 1.0
  %v1485 = vadd.f32 %v1446, 1.0
  %v1486 = vadd.f32 %v1447, 1.0
  %v1487 = vadd.f32 %v1448, 1.0
  %v1488 = vadd.f32 %v1449, 1.0
  %v1489 = vadd.f32 %v1450, 1.0
  %v1490 = vadd.f32 %v1451, 1.0
  %v1491 = vadd.f32 %v1452, 1.0
  %v1492 = vadd.f32 %v1453, 1.0
  %v1493 = vadd.f32 %v1454, 1.0
  %v1494 = vadd.f32 %v1455, 1.0
  %v1495 = vadd.f32 %v1456, 1.0
  %v1496 = vadd.f32 %v1457, 1.0
  %v1497 = vadd.f32 %v1458, 1.0
  %v1498 = vadd.f32 %v1459, 1.0
  %v1499 = vadd.f32 %v1460, 1.0
  %v1500 = vadd.f32 %v1461, 1.0
  %v1501 = vsel %vm1462, 1, 0
  %vm1502 = vcmp.eq.s32.totalorder %v1501, 1
  %v1503 = vsel %vm1502, %v1463, %v1424
  %v1504 = vsel %vm1502, %v1464, %v1425
  %v1505 = vsel %vm1502, %v1465, %v1426
  %v1506 = vsel %vm1502, %v1466, %v1427
  %v1507 = vsel %vm1502, %v1467, %v1428
  %v1508 = vsel %vm1502, %v1468, %v1429
  %v1509 = vsel %vm1502, %v1469, %v1430
  %v1510 = vsel %vm1502, %v1470, %v1431
  %v1511 = vsel %vm1502, %v1471, %v1432
  %v1512 = vsel %vm1502, %v1472, %v1433
  %v1513 = vsel %vm1502, %v1473, %v1434
  %v1514 = vsel %vm1502, %v1474, %v1435
  %v1515 = vsel %vm1502, %v1475, %v1436
  %v1516 = vsel %vm1502, %v1476, %v1437
  %v1517 = vsel %vm1502, %v1477, %v1438
  %v1518 = vsel %vm1502, %v1478, %v1439
  %v1519 = vsel %vm1502, %v1479, %v1440
  %v1520 = vsel %vm1502, %v1480, %v1441
  %v1521 = vsel %vm1502, %v1481, %v1442
  %v1522 = vsel %vm1502, %v1482, %v1443
  %v1523 = vsel %vm1502, %v1483, %v1444
  %v1524 = vsel %vm1502, %v1484, %v1445
  %v1525 = vsel %vm1502, %v1485, %v1446
  %v1526 = vsel %vm1502, %v1486, %v1447
  %v1527 = vsel %vm1502, %v1487, %v1448
  %v1528 = vsel %vm1502, %v1488, %v1449
  %v1529 = vsel %vm1502, %v1489, %v1450
  %v1530 = vsel %vm1502, %v1490, %v1451
  %v1531 = vsel %vm1502, %v1491, %v1452
  %v1532 = vsel %vm1502, %v1492, %v1453
  %v1533 = vsel %vm1502, %v1493, %v1454
  %v1534 = vsel %vm1502, %v1494, %v1455
  %v1535 = vsel %vm1502, %v1495, %v1456
  %v1536 = vsel %vm1502, %v1496, %v1457
  %v1537 = vsel %vm1502, %v1497, %v1458
  %v1538 = vsel %vm1502, %v1498, %v1459
  %v1539 = vsel %vm1502, %v1499, %v1460
  %v1540 = vsel %vm1502, %v1500, %v1461
  %1579 = vrot.lane.b32.xlu0 %v1503, 16
  %v1580 = vpop.permute.xlu0 %1579
  %1581 = vrot.lane.b32.xlu0 %v1504, 16
  %v1582 = vpop.permute.xlu0 %1581
  %1583 = vrot.lane.b32.xlu0 %v1505, 16
  %v1584 = vpop.permute.xlu0 %1583
  %1585 = vrot.lane.b32.xlu0 %v1506, 16
  %v1586 = vpop.permute.xlu0 %1585
  %1587 = vrot.lane.b32.xlu0 %v1507, 16
  %v1588 = vpop.permute.xlu0 %1587
  %1589 = vrot.lane.b32.xlu0 %v1508, 16
  %v1590 = vpop.permute.xlu0 %1589
  %1591 = vrot.lane.b32.xlu0 %v1509, 16
  %v1592 = vpop.permute.xlu0 %1591
  %1593 = vrot.lane.b32.xlu0 %v1510, 16
  %v1594 = vpop.permute.xlu0 %1593
  %1595 = vrot.lane.b32.xlu0 %v1511, 16
  %v1596 = vpop.permute.xlu0 %1595
  %1597 = vrot.lane.b32.xlu0 %v1512, 16
  %v1598 = vpop.permute.xlu0 %1597
  %1599 = vrot.lane.b32.xlu0 %v1513, 16
  %v1600 = vpop.permute.xlu0 %1599
  %1601 = vrot.lane.b32.xlu0 %v1514, 16
  %v1602 = vpop.permute.xlu0 %1601
  %1603 = vrot.lane.b32.xlu0 %v1515, 16
  %v1604 = vpop.permute.xlu0 %1603
  %1605 = vrot.lane.b32.xlu0 %v1516, 16
  %v1606 = vpop.permute.xlu0 %1605
  %1607 = vrot.lane.b32.xlu0 %v1517, 16
  %v1608 = vpop.permute.xlu0 %1607
  %1609 = vrot.lane.b32.xlu0 %v1518, 16
  %v1610 = vpop.permute.xlu0 %1609
  %1611 = vrot.lane.b32.xlu0 %v1519, 16
  %v1612 = vpop.permute.xlu0 %1611
  %1613 = vrot.lane.b32.xlu0 %v1520, 16
  %v1614 = vpop.permute.xlu0 %1613
  %1615 = vrot.lane.b32.xlu0 %v1521, 16
  %v1616 = vpop.permute.xlu0 %1615
  %1617 = vrot.lane.b32.xlu0 %v1522, 16
  %v1618 = vpop.permute.xlu0 %1617
  %1619 = vrot.lane.b32.xlu0 %v1523, 16
  %v1620 = vpop.permute.xlu0 %1619
  %1621 = vrot.lane.b32.xlu0 %v1524, 16
  %v1622 = vpop.permute.xlu0 %1621
  %1623 = vrot.lane.b32.xlu0 %v1525, 16
  %v1624 = vpop.permute.xlu0 %1623
  %1625 = vrot.lane.b32.xlu0 %v1526, 16
  %v1626 = vpop.permute.xlu0 %1625
  %1627 = vrot.lane.b32.xlu0 %v1527, 16
  %v1628 = vpop.permute.xlu0 %1627
  %1629 = vrot.lane.b32.xlu0 %v1528, 16
  %v1630 = vpop.permute.xlu0 %1629
  %1631 = vrot.lane.b32.xlu0 %v1529, 16
  %v1632 = vpop.permute.xlu0 %1631
  %1633 = vrot.lane.b32.xlu0 %v1530, 16
  %v1634 = vpop.permute.xlu0 %1633
  %1635 = vrot.lane.b32.xlu0 %v1531, 16
  %v1636 = vpop.permute.xlu0 %1635
  %1637 = vrot.lane.b32.xlu0 %v1532, 16
  %v1638 = vpop.permute.xlu0 %1637
  %1639 = vrot.lane.b32.xlu0 %v1533, 16
  %v1640 = vpop.permute.xlu0 %1639
  %1641 = vrot.lane.b32.xlu0 %v1534, 16
  %v1642 = vpop.permute.xlu0 %1641
  %1643 = vrot.lane.b32.xlu0 %v1535, 16
  %v1644 = vpop.permute.xlu0 %1643
  %1645 = vrot.lane.b32.xlu0 %v1536, 16
  %v1646 = vpop.permute.xlu0 %1645
  %1647 = vrot.lane.b32.xlu0 %v1537, 16
  %v1648 = vpop.permute.xlu0 %1647
  %1649 = vrot.lane.b32.xlu0 %v1538, 16
  %v1650 = vpop.permute.xlu0 %1649
  %1651 = vrot.lane.b32.xlu0 %v1539, 16
  %v1652 = vpop.permute.xlu0 %1651
  %1653 = vrot.lane.b32.xlu0 %v1540, 16
  %v1654 = vpop.permute.xlu0 %1653
  %vm1693 = vcmask 195712
  %1694 = vst.msk [vmem:[%s1] sm:$0xff] %vm1693, %v1580
  %1695 = vst.msk [vmem:[%s1 + $0x8] sm:$0xff] %vm1693, %v1582
  %1696 = vst.msk [vmem:[%s1 + $0x10] sm:$0xff] %vm1693, %v1584
  %1697 = vst.msk [vmem:[%s1 + $0x18] sm:$0xff] %vm1693, %v1586
  %1698 = vst.msk [vmem:[%s1 + $0x20] sm:$0xff] %vm1693, %v1588
  %1699 = vst.msk [vmem:[%s1 + $0x28] sm:$0xff] %vm1693, %v1590
  %1700 = vst.msk [vmem:[%s1 + $0x30] sm:$0xff] %vm1693, %v1592
  %1701 = vst.msk [vmem:[%s1 + $0x38] sm:$0xff] %vm1693, %v1594
  %1702 = vst.msk [vmem:[%s1 + $0x40] sm:$0xff] %vm1693, %v1596
  %1703 = vst.msk [vmem:[%s1 + $0x48] sm:$0xff] %vm1693, %v1598
  %1704 = vst.msk [vmem:[%s1 + $0x50] sm:$0xff] %vm1693, %v1600
  %1705 = vst.msk [vmem:[%s1 + $0x58] sm:$0xff] %vm1693, %v1602
  %1706 = vst.msk [vmem:[%s1 + $0x60] sm:$0xff] %vm1693, %v1604
  %1707 = vst.msk [vmem:[%s1 + $0x68] sm:$0xff] %vm1693, %v1606
  %1708 = vst.msk [vmem:[%s1 + $0x70] sm:$0xff] %vm1693, %v1608
  %1709 = vst.msk [vmem:[%s1 + $0x78] sm:$0xff] %vm1693, %v1610
  %1710 = vst.msk [vmem:[%s1 + $0x80] sm:$0xff] %vm1693, %v1612
  %1711 = vst.msk [vmem:[%s1 + $0x88] sm:$0xff] %vm1693, %v1614
  %1712 = vst.msk [vmem:[%s1 + $0x90] sm:$0xff] %vm1693, %v1616
  %1713 = vst.msk [vmem:[%s1 + $0x98] sm:$0xff] %vm1693, %v1618
  %1714 = vst.msk [vmem:[%s1 + $0xa0] sm:$0xff] %vm1693, %v1620
  %1715 = vst.msk [vmem:[%s1 + $0xa8] sm:$0xff] %vm1693, %v1622
  %1716 = vst.msk [vmem:[%s1 + $0xb0] sm:$0xff] %vm1693, %v1624
  %1717 = vst.msk [vmem:[%s1 + $0xb8] sm:$0xff] %vm1693, %v1626
  %1718 = vst.msk [vmem:[%s1 + $0xc0] sm:$0xff] %vm1693, %v1628
  %1719 = vst.msk [vmem:[%s1 + $0xc8] sm:$0xff] %vm1693, %v1630
  %1720 = vst.msk [vmem:[%s1 + $0xd0] sm:$0xff] %vm1693, %v1632
  %1721 = vst.msk [vmem:[%s1 + $0xd8] sm:$0xff] %vm1693, %v1634
  %1722 = vst.msk [vmem:[%s1 + $0xe0] sm:$0xff] %vm1693, %v1636
  %1723 = vst.msk [vmem:[%s1 + $0xe8] sm:$0xff] %vm1693, %v1638
  %1724 = vst.msk [vmem:[%s1 + $0xf0] sm:$0xff] %vm1693, %v1640
  %1725 = vst.msk [vmem:[%s1 + $0xf8] sm:$0xff] %vm1693, %v1642
  %1726 = vst.msk [vmem:[%s1 + $0x100] sm:$0xff] %vm1693, %v1644
  %1727 = vst.msk [vmem:[%s1 + $0x108] sm:$0xff] %vm1693, %v1646
  %1728 = vst.msk [vmem:[%s1 + $0x110] sm:$0xff] %vm1693, %v1648
  %1729 = vst.msk [vmem:[%s1 + $0x118] sm:$0xff] %vm1693, %v1650
  %1730 = vst.msk [vmem:[%s1 + $0x120] sm:$0xff] %vm1693, %v1652
  %1731 = vst.msk [vmem:[%s1 + $0x128] sm:$0xff] %vm1693, %v1654
  %1732 = vset.pattern.permute.xlu0 3
  %1733 = vperm.xlu0 %1732, %v198
  %v1734 = vpop.permute.xlu0 %1733
  %1736 = vset.pattern.permute.xlu0 3
  %1737 = vperm.xlu0 %1736, %v199
  %v1738 = vpop.permute.xlu0 %1737
  %1740 = vset.pattern.permute.xlu0 3
  %1741 = vperm.xlu0 %1740, %v200
  %v1742 = vpop.permute.xlu0 %1741
  %1744 = vset.pattern.permute.xlu0 3
  %1745 = vperm.xlu0 %1744, %v201
  %v1746 = vpop.permute.xlu0 %1745
  %1748 = vset.pattern.permute.xlu0 3
  %1749 = vperm.xlu0 %1748, %v202
  %v1750 = vpop.permute.xlu0 %1749
  %1752 = vset.pattern.permute.xlu0 3
  %1753 = vperm.xlu0 %1752, %v203
  %v1754 = vpop.permute.xlu0 %1753
  %1756 = vset.pattern.permute.xlu0 3
  %1757 = vperm.xlu0 %1756, %v204
  %v1758 = vpop.permute.xlu0 %1757
  %1760 = vset.pattern.permute.xlu0 3
  %1761 = vperm.xlu0 %1760, %v205
  %v1762 = vpop.permute.xlu0 %1761
  %1764 = vset.pattern.permute.xlu0 3
  %1765 = vperm.xlu0 %1764, %v206
  %v1766 = vpop.permute.xlu0 %1765
  %1768 = vset.pattern.permute.xlu0 3
  %1769 = vperm.xlu0 %1768, %v207
  %v1770 = vpop.permute.xlu0 %1769
  %1772 = vset.pattern.permute.xlu0 3
  %1773 = vperm.xlu0 %1772, %v208
  %v1774 = vpop.permute.xlu0 %1773
  %1776 = vset.pattern.permute.xlu0 3
  %1777 = vperm.xlu0 %1776, %v209
  %v1778 = vpop.permute.xlu0 %1777
  %1780 = vset.pattern.permute.xlu0 3
  %1781 = vperm.xlu0 %1780, %v210
  %v1782 = vpop.permute.xlu0 %1781
  %1784 = vset.pattern.permute.xlu0 3
  %1785 = vperm.xlu0 %1784, %v211
  %v1786 = vpop.permute.xlu0 %1785
  %1788 = vset.pattern.permute.xlu0 3
  %1789 = vperm.xlu0 %1788, %v212
  %v1790 = vpop.permute.xlu0 %1789
  %1792 = vset.pattern.permute.xlu0 3
  %1793 = vperm.xlu0 %1792, %v213
  %v1794 = vpop.permute.xlu0 %1793
  %1796 = vset.pattern.permute.xlu0 3
  %1797 = vperm.xlu0 %1796, %v214
  %v1798 = vpop.permute.xlu0 %1797
  %1800 = vset.pattern.permute.xlu0 3
  %1801 = vperm.xlu0 %1800, %v215
  %v1802 = vpop.permute.xlu0 %1801
  %1804 = vset.pattern.permute.xlu0 3
  %1805 = vperm.xlu0 %1804, %v216
  %v1806 = vpop.permute.xlu0 %1805
  %1808 = vset.pattern.permute.xlu0 3
  %1809 = vperm.xlu0 %1808, %v217
  %v1810 = vpop.permute.xlu0 %1809
  %1812 = vset.pattern.permute.xlu0 3
  %1813 = vperm.xlu0 %1812, %v218
  %v1814 = vpop.permute.xlu0 %1813
  %1816 = vset.pattern.permute.xlu0 3
  %1817 = vperm.xlu0 %1816, %v219
  %v1818 = vpop.permute.xlu0 %1817
  %1820 = vset.pattern.permute.xlu0 3
  %1821 = vperm.xlu0 %1820, %v220
  %v1822 = vpop.permute.xlu0 %1821
  %1824 = vset.pattern.permute.xlu0 3
  %1825 = vperm.xlu0 %1824, %v221
  %v1826 = vpop.permute.xlu0 %1825
  %1828 = vset.pattern.permute.xlu0 3
  %1829 = vperm.xlu0 %1828, %v222
  %v1830 = vpop.permute.xlu0 %1829
  %1832 = vset.pattern.permute.xlu0 3
  %1833 = vperm.xlu0 %1832, %v223
  %v1834 = vpop.permute.xlu0 %1833
  %1836 = vset.pattern.permute.xlu0 3
  %1837 = vperm.xlu0 %1836, %v224
  %v1838 = vpop.permute.xlu0 %1837
  %1840 = vset.pattern.permute.xlu0 3
  %1841 = vperm.xlu0 %1840, %v225
  %v1842 = vpop.permute.xlu0 %1841
  %1844 = vset.pattern.permute.xlu0 3
  %1845 = vperm.xlu0 %1844, %v226
  %v1846 = vpop.permute.xlu0 %1845
  %1848 = vset.pattern.permute.xlu0 3
  %1849 = vperm.xlu0 %1848, %v227
  %v1850 = vpop.permute.xlu0 %1849
  %1852 = vset.pattern.permute.xlu0 3
  %1853 = vperm.xlu0 %1852, %v228
  %v1854 = vpop.permute.xlu0 %1853
  %1856 = vset.pattern.permute.xlu0 3
  %1857 = vperm.xlu0 %1856, %v229
  %v1858 = vpop.permute.xlu0 %1857
  %1860 = vset.pattern.permute.xlu0 3
  %1861 = vperm.xlu0 %1860, %v230
  %v1862 = vpop.permute.xlu0 %1861
  %1864 = vset.pattern.permute.xlu0 3
  %1865 = vperm.xlu0 %1864, %v231
  %v1866 = vpop.permute.xlu0 %1865
  %1868 = vset.pattern.permute.xlu0 3
  %1869 = vperm.xlu0 %1868, %v232
  %v1870 = vpop.permute.xlu0 %1869
  %1872 = vset.pattern.permute.xlu0 3
  %1873 = vperm.xlu0 %1872, %v233
  %v1874 = vpop.permute.xlu0 %1873
  %1876 = vset.pattern.permute.xlu0 3
  %1877 = vperm.xlu0 %1876, %v234
  %v1878 = vpop.permute.xlu0 %1877
  %1880 = vset.pattern.permute.xlu0 3
  %1881 = vperm.xlu0 %1880, %v235
  %v1882 = vpop.permute.xlu0 %1881
  %v1884 = vmul.f32 %v1734, %v8
  %v1885 = vmul.f32 %v1738, %v9
  %v1886 = vmul.f32 %v1742, %v10
  %v1887 = vmul.f32 %v1746, %v11
  %v1888 = vmul.f32 %v1750, %v12
  %v1889 = vmul.f32 %v1754, %v13
  %v1890 = vmul.f32 %v1758, %v14
  %v1891 = vmul.f32 %v1762, %v15
  %v1892 = vmul.f32 %v1766, %v16
  %v1893 = vmul.f32 %v1770, %v17
  %v1894 = vmul.f32 %v1774, %v18
  %v1895 = vmul.f32 %v1778, %v19
  %v1896 = vmul.f32 %v1782, %v20
  %v1897 = vmul.f32 %v1786, %v21
  %v1898 = vmul.f32 %v1790, %v22
  %v1899 = vmul.f32 %v1794, %v23
  %v1900 = vmul.f32 %v1798, %v24
  %v1901 = vmul.f32 %v1802, %v25
  %v1902 = vmul.f32 %v1806, %v26
  %v1903 = vmul.f32 %v1810, %v27
  %v1904 = vmul.f32 %v1814, %v28
  %v1905 = vmul.f32 %v1818, %v29
  %v1906 = vmul.f32 %v1822, %v30
  %v1907 = vmul.f32 %v1826, %v31
  %v1908 = vmul.f32 %v1830, %v32
  %v1909 = vmul.f32 %v1834, %v33
  %v1910 = vmul.f32 %v1838, %v34
  %v1911 = vmul.f32 %v1842, %v35
  %v1912 = vmul.f32 %v1846, %v36
  %v1913 = vmul.f32 %v1850, %v37
  %v1914 = vmul.f32 %v1854, %v38
  %v1915 = vmul.f32 %v1858, %v39
  %v1916 = vmul.f32 %v1862, %v40
  %v1917 = vmul.f32 %v1866, %v41
  %v1918 = vmul.f32 %v1870, %v42
  %v1919 = vmul.f32 %v1874, %v43
  %v1920 = vmul.f32 %v1878, %v44
  %v1921 = vmul.f32 %v1882, %v45
  %v1922 = vadd.f32 %v1884, 0.02
  %v1923 = vadd.f32 %v1885, 0.02
  %v1924 = vadd.f32 %v1886, 0.02
  %v1925 = vadd.f32 %v1887, 0.02
  %v1926 = vadd.f32 %v1888, 0.02
  %v1927 = vadd.f32 %v1889, 0.02
  %v1928 = vadd.f32 %v1890, 0.02
  %v1929 = vadd.f32 %v1891, 0.02
  %v1930 = vadd.f32 %v1892, 0.02
  %v1931 = vadd.f32 %v1893, 0.02
  %v1932 = vadd.f32 %v1894, 0.02
  %v1933 = vadd.f32 %v1895, 0.02
  %v1934 = vadd.f32 %v1896, 0.02
  %v1935 = vadd.f32 %v1897, 0.02
  %v1936 = vadd.f32 %v1898, 0.02
  %v1937 = vadd.f32 %v1899, 0.02
  %v1938 = vadd.f32 %v1900, 0.02
  %v1939 = vadd.f32 %v1901, 0.02
  %v1940 = vadd.f32 %v1902, 0.02
  %v1941 = vadd.f32 %v1903, 0.02
  %v1942 = vadd.f32 %v1904, 0.02
  %v1943 = vadd.f32 %v1905, 0.02
  %v1944 = vadd.f32 %v1906, 0.02
  %v1945 = vadd.f32 %v1907, 0.02
  %v1946 = vadd.f32 %v1908, 0.02
  %v1947 = vadd.f32 %v1909, 0.02
  %v1948 = vadd.f32 %v1910, 0.02
  %v1949 = vadd.f32 %v1911, 0.02
  %v1950 = vadd.f32 %v1912, 0.02
  %v1951 = vadd.f32 %v1913, 0.02
  %v1952 = vadd.f32 %v1914, 0.02
  %v1953 = vadd.f32 %v1915, 0.02
  %v1954 = vadd.f32 %v1916, 0.02
  %v1955 = vadd.f32 %v1917, 0.02
  %v1956 = vadd.f32 %v1918, 0.02
  %v1957 = vadd.f32 %v1919, 0.02
  %v1958 = vadd.f32 %v1920, 0.02
  %v1959 = vadd.f32 %v1921, 0.02
  %v1960 = vand.u32 2147483647, %v1922
  %v1961 = vand.u32 2147483647, %v1923
  %v1962 = vand.u32 2147483647, %v1924
  %v1963 = vand.u32 2147483647, %v1925
  %v1964 = vand.u32 2147483647, %v1926
  %v1965 = vand.u32 2147483647, %v1927
  %v1966 = vand.u32 2147483647, %v1928
  %v1967 = vand.u32 2147483647, %v1929
  %v1968 = vand.u32 2147483647, %v1930
  %v1969 = vand.u32 2147483647, %v1931
  %v1970 = vand.u32 2147483647, %v1932
  %v1971 = vand.u32 2147483647, %v1933
  %v1972 = vand.u32 2147483647, %v1934
  %v1973 = vand.u32 2147483647, %v1935
  %v1974 = vand.u32 2147483647, %v1936
  %v1975 = vand.u32 2147483647, %v1937
  %v1976 = vand.u32 2147483647, %v1938
  %v1977 = vand.u32 2147483647, %v1939
  %v1978 = vand.u32 2147483647, %v1940
  %v1979 = vand.u32 2147483647, %v1941
  %v1980 = vand.u32 2147483647, %v1942
  %v1981 = vand.u32 2147483647, %v1943
  %v1982 = vand.u32 2147483647, %v1944
  %v1983 = vand.u32 2147483647, %v1945
  %v1984 = vand.u32 2147483647, %v1946
  %v1985 = vand.u32 2147483647, %v1947
  %v1986 = vand.u32 2147483647, %v1948
  %v1987 = vand.u32 2147483647, %v1949
  %v1988 = vand.u32 2147483647, %v1950
  %v1989 = vand.u32 2147483647, %v1951
  %v1990 = vand.u32 2147483647, %v1952
  %v1991 = vand.u32 2147483647, %v1953
  %v1992 = vand.u32 2147483647, %v1954
  %v1993 = vand.u32 2147483647, %v1955
  %v1994 = vand.u32 2147483647, %v1956
  %v1995 = vand.u32 2147483647, %v1957
  %v1996 = vand.u32 2147483647, %v1958
  %v1997 = vand.u32 2147483647, %v1959
  %vm1998 = vcmp.eq.s32.totalorder %v237, 3
  %v1999 = vadd.f32 %v1960, 1.0
  %v2000 = vadd.f32 %v1961, 1.0
  %v2001 = vadd.f32 %v1962, 1.0
  %v2002 = vadd.f32 %v1963, 1.0
  %v2003 = vadd.f32 %v1964, 1.0
  %v2004 = vadd.f32 %v1965, 1.0
  %v2005 = vadd.f32 %v1966, 1.0
  %v2006 = vadd.f32 %v1967, 1.0
  %v2007 = vadd.f32 %v1968, 1.0
  %v2008 = vadd.f32 %v1969, 1.0
  %v2009 = vadd.f32 %v1970, 1.0
  %v2010 = vadd.f32 %v1971, 1.0
  %v2011 = vadd.f32 %v1972, 1.0
  %v2012 = vadd.f32 %v1973, 1.0
  %v2013 = vadd.f32 %v1974, 1.0
  %v2014 = vadd.f32 %v1975, 1.0
  %v2015 = vadd.f32 %v1976, 1.0
  %v2016 = vadd.f32 %v1977, 1.0
  %v2017 = vadd.f32 %v1978, 1.0
  %v2018 = vadd.f32 %v1979, 1.0
  %v2019 = vadd.f32 %v1980, 1.0
  %v2020 = vadd.f32 %v1981, 1.0
  %v2021 = vadd.f32 %v1982, 1.0
  %v2022 = vadd.f32 %v1983, 1.0
  %v2023 = vadd.f32 %v1984, 1.0
  %v2024 = vadd.f32 %v1985, 1.0
  %v2025 = vadd.f32 %v1986, 1.0
  %v2026 = vadd.f32 %v1987, 1.0
  %v2027 = vadd.f32 %v1988, 1.0
  %v2028 = vadd.f32 %v1989, 1.0
  %v2029 = vadd.f32 %v1990, 1.0
  %v2030 = vadd.f32 %v1991, 1.0
  %v2031 = vadd.f32 %v1992, 1.0
  %v2032 = vadd.f32 %v1993, 1.0
  %v2033 = vadd.f32 %v1994, 1.0
  %v2034 = vadd.f32 %v1995, 1.0
  %v2035 = vadd.f32 %v1996, 1.0
  %v2036 = vadd.f32 %v1997, 1.0
  %v2037 = vsel %vm1998, 1, 0
  %vm2038 = vcmp.eq.s32.totalorder %v2037, 1
  %v2039 = vsel %vm2038, %v1999, %v1960
  %v2040 = vsel %vm2038, %v2000, %v1961
  %v2041 = vsel %vm2038, %v2001, %v1962
  %v2042 = vsel %vm2038, %v2002, %v1963
  %v2043 = vsel %vm2038, %v2003, %v1964
  %v2044 = vsel %vm2038, %v2004, %v1965
  %v2045 = vsel %vm2038, %v2005, %v1966
  %v2046 = vsel %vm2038, %v2006, %v1967
  %v2047 = vsel %vm2038, %v2007, %v1968
  %v2048 = vsel %vm2038, %v2008, %v1969
  %v2049 = vsel %vm2038, %v2009, %v1970
  %v2050 = vsel %vm2038, %v2010, %v1971
  %v2051 = vsel %vm2038, %v2011, %v1972
  %v2052 = vsel %vm2038, %v2012, %v1973
  %v2053 = vsel %vm2038, %v2013, %v1974
  %v2054 = vsel %vm2038, %v2014, %v1975
  %v2055 = vsel %vm2038, %v2015, %v1976
  %v2056 = vsel %vm2038, %v2016, %v1977
  %v2057 = vsel %vm2038, %v2017, %v1978
  %v2058 = vsel %vm2038, %v2018, %v1979
  %v2059 = vsel %vm2038, %v2019, %v1980
  %v2060 = vsel %vm2038, %v2020, %v1981
  %v2061 = vsel %vm2038, %v2021, %v1982
  %v2062 = vsel %vm2038, %v2022, %v1983
  %v2063 = vsel %vm2038, %v2023, %v1984
  %v2064 = vsel %vm2038, %v2024, %v1985
  %v2065 = vsel %vm2038, %v2025, %v1986
  %v2066 = vsel %vm2038, %v2026, %v1987
  %v2067 = vsel %vm2038, %v2027, %v1988
  %v2068 = vsel %vm2038, %v2028, %v1989
  %v2069 = vsel %vm2038, %v2029, %v1990
  %v2070 = vsel %vm2038, %v2030, %v1991
  %v2071 = vsel %vm2038, %v2031, %v1992
  %v2072 = vsel %vm2038, %v2032, %v1993
  %v2073 = vsel %vm2038, %v2033, %v1994
  %v2074 = vsel %vm2038, %v2034, %v1995
  %v2075 = vsel %vm2038, %v2035, %v1996
  %v2076 = vsel %vm2038, %v2036, %v1997
  %2115 = vrot.lane.b32.xlu0 %v2039, 24
  %v2116 = vpop.permute.xlu0 %2115
  %2117 = vrot.lane.b32.xlu0 %v2040, 24
  %v2118 = vpop.permute.xlu0 %2117
  %2119 = vrot.lane.b32.xlu0 %v2041, 24
  %v2120 = vpop.permute.xlu0 %2119
  %2121 = vrot.lane.b32.xlu0 %v2042, 24
  %v2122 = vpop.permute.xlu0 %2121
  %2123 = vrot.lane.b32.xlu0 %v2043, 24
  %v2124 = vpop.permute.xlu0 %2123
  %2125 = vrot.lane.b32.xlu0 %v2044, 24
  %v2126 = vpop.permute.xlu0 %2125
  %2127 = vrot.lane.b32.xlu0 %v2045, 24
  %v2128 = vpop.permute.xlu0 %2127
  %2129 = vrot.lane.b32.xlu0 %v2046, 24
  %v2130 = vpop.permute.xlu0 %2129
  %2131 = vrot.lane.b32.xlu0 %v2047, 24
  %v2132 = vpop.permute.xlu0 %2131
  %2133 = vrot.lane.b32.xlu0 %v2048, 24
  %v2134 = vpop.permute.xlu0 %2133
  %2135 = vrot.lane.b32.xlu0 %v2049, 24
  %v2136 = vpop.permute.xlu0 %2135
  %2137 = vrot.lane.b32.xlu0 %v2050, 24
  %v2138 = vpop.permute.xlu0 %2137
  %2139 = vrot.lane.b32.xlu0 %v2051, 24
  %v2140 = vpop.permute.xlu0 %2139
  %2141 = vrot.lane.b32.xlu0 %v2052, 24
  %v2142 = vpop.permute.xlu0 %2141
  %2143 = vrot.lane.b32.xlu0 %v2053, 24
  %v2144 = vpop.permute.xlu0 %2143
  %2145 = vrot.lane.b32.xlu0 %v2054, 24
  %v2146 = vpop.permute.xlu0 %2145
  %2147 = vrot.lane.b32.xlu0 %v2055, 24
  %v2148 = vpop.permute.xlu0 %2147
  %2149 = vrot.lane.b32.xlu0 %v2056, 24
  %v2150 = vpop.permute.xlu0 %2149
  %2151 = vrot.lane.b32.xlu0 %v2057, 24
  %v2152 = vpop.permute.xlu0 %2151
  %2153 = vrot.lane.b32.xlu0 %v2058, 24
  %v2154 = vpop.permute.xlu0 %2153
  %2155 = vrot.lane.b32.xlu0 %v2059, 24
  %v2156 = vpop.permute.xlu0 %2155
  %2157 = vrot.lane.b32.xlu0 %v2060, 24
  %v2158 = vpop.permute.xlu0 %2157
  %2159 = vrot.lane.b32.xlu0 %v2061, 24
  %v2160 = vpop.permute.xlu0 %2159
  %2161 = vrot.lane.b32.xlu0 %v2062, 24
  %v2162 = vpop.permute.xlu0 %2161
  %2163 = vrot.lane.b32.xlu0 %v2063, 24
  %v2164 = vpop.permute.xlu0 %2163
  %2165 = vrot.lane.b32.xlu0 %v2064, 24
  %v2166 = vpop.permute.xlu0 %2165
  %2167 = vrot.lane.b32.xlu0 %v2065, 24
  %v2168 = vpop.permute.xlu0 %2167
  %2169 = vrot.lane.b32.xlu0 %v2066, 24
  %v2170 = vpop.permute.xlu0 %2169
  %2171 = vrot.lane.b32.xlu0 %v2067, 24
  %v2172 = vpop.permute.xlu0 %2171
  %2173 = vrot.lane.b32.xlu0 %v2068, 24
  %v2174 = vpop.permute.xlu0 %2173
  %2175 = vrot.lane.b32.xlu0 %v2069, 24
  %v2176 = vpop.permute.xlu0 %2175
  %2177 = vrot.lane.b32.xlu0 %v2070, 24
  %v2178 = vpop.permute.xlu0 %2177
  %2179 = vrot.lane.b32.xlu0 %v2071, 24
  %v2180 = vpop.permute.xlu0 %2179
  %2181 = vrot.lane.b32.xlu0 %v2072, 24
  %v2182 = vpop.permute.xlu0 %2181
  %2183 = vrot.lane.b32.xlu0 %v2073, 24
  %v2184 = vpop.permute.xlu0 %2183
  %2185 = vrot.lane.b32.xlu0 %v2074, 24
  %v2186 = vpop.permute.xlu0 %2185
  %2187 = vrot.lane.b32.xlu0 %v2075, 24
  %v2188 = vpop.permute.xlu0 %2187
  %2189 = vrot.lane.b32.xlu0 %v2076, 24
  %v2190 = vpop.permute.xlu0 %2189
  %vm2229 = vcmask 261312
  %2230 = vst.msk [vmem:[%s1] sm:$0xff] %vm2229, %v2116
  %2231 = vst.msk [vmem:[%s1 + $0x8] sm:$0xff] %vm2229, %v2118
  %2232 = vst.msk [vmem:[%s1 + $0x10] sm:$0xff] %vm2229, %v2120
  %2233 = vst.msk [vmem:[%s1 + $0x18] sm:$0xff] %vm2229, %v2122
  %2234 = vst.msk [vmem:[%s1 + $0x20] sm:$0xff] %vm2229, %v2124
  %2235 = vst.msk [vmem:[%s1 + $0x28] sm:$0xff] %vm2229, %v2126
  %2236 = vst.msk [vmem:[%s1 + $0x30] sm:$0xff] %vm2229, %v2128
  %2237 = vst.msk [vmem:[%s1 + $0x38] sm:$0xff] %vm2229, %v2130
  %2238 = vst.msk [vmem:[%s1 + $0x40] sm:$0xff] %vm2229, %v2132
  %2239 = vst.msk [vmem:[%s1 + $0x48] sm:$0xff] %vm2229, %v2134
  %2240 = vst.msk [vmem:[%s1 + $0x50] sm:$0xff] %vm2229, %v2136
  %2241 = vst.msk [vmem:[%s1 + $0x58] sm:$0xff] %vm2229, %v2138
  %2242 = vst.msk [vmem:[%s1 + $0x60] sm:$0xff] %vm2229, %v2140
  %2243 = vst.msk [vmem:[%s1 + $0x68] sm:$0xff] %vm2229, %v2142
  %2244 = vst.msk [vmem:[%s1 + $0x70] sm:$0xff] %vm2229, %v2144
  %2245 = vst.msk [vmem:[%s1 + $0x78] sm:$0xff] %vm2229, %v2146
  %2246 = vst.msk [vmem:[%s1 + $0x80] sm:$0xff] %vm2229, %v2148
  %2247 = vst.msk [vmem:[%s1 + $0x88] sm:$0xff] %vm2229, %v2150
  %2248 = vst.msk [vmem:[%s1 + $0x90] sm:$0xff] %vm2229, %v2152
  %2249 = vst.msk [vmem:[%s1 + $0x98] sm:$0xff] %vm2229, %v2154
  %2250 = vst.msk [vmem:[%s1 + $0xa0] sm:$0xff] %vm2229, %v2156
  %2251 = vst.msk [vmem:[%s1 + $0xa8] sm:$0xff] %vm2229, %v2158
  %2252 = vst.msk [vmem:[%s1 + $0xb0] sm:$0xff] %vm2229, %v2160
  %2253 = vst.msk [vmem:[%s1 + $0xb8] sm:$0xff] %vm2229, %v2162
  %2254 = vst.msk [vmem:[%s1 + $0xc0] sm:$0xff] %vm2229, %v2164
  %2255 = vst.msk [vmem:[%s1 + $0xc8] sm:$0xff] %vm2229, %v2166
  %2256 = vst.msk [vmem:[%s1 + $0xd0] sm:$0xff] %vm2229, %v2168
  %2257 = vst.msk [vmem:[%s1 + $0xd8] sm:$0xff] %vm2229, %v2170
  %2258 = vst.msk [vmem:[%s1 + $0xe0] sm:$0xff] %vm2229, %v2172
  %2259 = vst.msk [vmem:[%s1 + $0xe8] sm:$0xff] %vm2229, %v2174
  %2260 = vst.msk [vmem:[%s1 + $0xf0] sm:$0xff] %vm2229, %v2176
  %2261 = vst.msk [vmem:[%s1 + $0xf8] sm:$0xff] %vm2229, %v2178
  %2262 = vst.msk [vmem:[%s1 + $0x100] sm:$0xff] %vm2229, %v2180
  %2263 = vst.msk [vmem:[%s1 + $0x108] sm:$0xff] %vm2229, %v2182
  %2264 = vst.msk [vmem:[%s1 + $0x110] sm:$0xff] %vm2229, %v2184
  %2265 = vst.msk [vmem:[%s1 + $0x118] sm:$0xff] %vm2229, %v2186
  %2266 = vst.msk [vmem:[%s1 + $0x120] sm:$0xff] %vm2229, %v2188
  %2267 = vst.msk [vmem:[%s1 + $0x128] sm:$0xff] %vm2229, %v2190
  %2268 = vset.pattern.permute.xlu0 4
  %2269 = vperm.xlu0 %2268, %v198
  %v2270 = vpop.permute.xlu0 %2269
  %2272 = vset.pattern.permute.xlu0 4
  %2273 = vperm.xlu0 %2272, %v199
  %v2274 = vpop.permute.xlu0 %2273
  %2276 = vset.pattern.permute.xlu0 4
  %2277 = vperm.xlu0 %2276, %v200
  %v2278 = vpop.permute.xlu0 %2277
  %2280 = vset.pattern.permute.xlu0 4
  %2281 = vperm.xlu0 %2280, %v201
  %v2282 = vpop.permute.xlu0 %2281
  %2284 = vset.pattern.permute.xlu0 4
  %2285 = vperm.xlu0 %2284, %v202
  %v2286 = vpop.permute.xlu0 %2285
  %2288 = vset.pattern.permute.xlu0 4
  %2289 = vperm.xlu0 %2288, %v203
  %v2290 = vpop.permute.xlu0 %2289
  %2292 = vset.pattern.permute.xlu0 4
  %2293 = vperm.xlu0 %2292, %v204
  %v2294 = vpop.permute.xlu0 %2293
  %2296 = vset.pattern.permute.xlu0 4
  %2297 = vperm.xlu0 %2296, %v205
  %v2298 = vpop.permute.xlu0 %2297
  %2300 = vset.pattern.permute.xlu0 4
  %2301 = vperm.xlu0 %2300, %v206
  %v2302 = vpop.permute.xlu0 %2301
  %2304 = vset.pattern.permute.xlu0 4
  %2305 = vperm.xlu0 %2304, %v207
  %v2306 = vpop.permute.xlu0 %2305
  %2308 = vset.pattern.permute.xlu0 4
  %2309 = vperm.xlu0 %2308, %v208
  %v2310 = vpop.permute.xlu0 %2309
  %2312 = vset.pattern.permute.xlu0 4
  %2313 = vperm.xlu0 %2312, %v209
  %v2314 = vpop.permute.xlu0 %2313
  %2316 = vset.pattern.permute.xlu0 4
  %2317 = vperm.xlu0 %2316, %v210
  %v2318 = vpop.permute.xlu0 %2317
  %2320 = vset.pattern.permute.xlu0 4
  %2321 = vperm.xlu0 %2320, %v211
  %v2322 = vpop.permute.xlu0 %2321
  %2324 = vset.pattern.permute.xlu0 4
  %2325 = vperm.xlu0 %2324, %v212
  %v2326 = vpop.permute.xlu0 %2325
  %2328 = vset.pattern.permute.xlu0 4
  %2329 = vperm.xlu0 %2328, %v213
  %v2330 = vpop.permute.xlu0 %2329
  %2332 = vset.pattern.permute.xlu0 4
  %2333 = vperm.xlu0 %2332, %v214
  %v2334 = vpop.permute.xlu0 %2333
  %2336 = vset.pattern.permute.xlu0 4
  %2337 = vperm.xlu0 %2336, %v215
  %v2338 = vpop.permute.xlu0 %2337
  %2340 = vset.pattern.permute.xlu0 4
  %2341 = vperm.xlu0 %2340, %v216
  %v2342 = vpop.permute.xlu0 %2341
  %2344 = vset.pattern.permute.xlu0 4
  %2345 = vperm.xlu0 %2344, %v217
  %v2346 = vpop.permute.xlu0 %2345
  %2348 = vset.pattern.permute.xlu0 4
  %2349 = vperm.xlu0 %2348, %v218
  %v2350 = vpop.permute.xlu0 %2349
  %2352 = vset.pattern.permute.xlu0 4
  %2353 = vperm.xlu0 %2352, %v219
  %v2354 = vpop.permute.xlu0 %2353
  %2356 = vset.pattern.permute.xlu0 4
  %2357 = vperm.xlu0 %2356, %v220
  %v2358 = vpop.permute.xlu0 %2357
  %2360 = vset.pattern.permute.xlu0 4
  %2361 = vperm.xlu0 %2360, %v221
  %v2362 = vpop.permute.xlu0 %2361
  %2364 = vset.pattern.permute.xlu0 4
  %2365 = vperm.xlu0 %2364, %v222
  %v2366 = vpop.permute.xlu0 %2365
  %2368 = vset.pattern.permute.xlu0 4
  %2369 = vperm.xlu0 %2368, %v223
  %v2370 = vpop.permute.xlu0 %2369
  %2372 = vset.pattern.permute.xlu0 4
  %2373 = vperm.xlu0 %2372, %v224
  %v2374 = vpop.permute.xlu0 %2373
  %2376 = vset.pattern.permute.xlu0 4
  %2377 = vperm.xlu0 %2376, %v225
  %v2378 = vpop.permute.xlu0 %2377
  %2380 = vset.pattern.permute.xlu0 4
  %2381 = vperm.xlu0 %2380, %v226
  %v2382 = vpop.permute.xlu0 %2381
  %2384 = vset.pattern.permute.xlu0 4
  %2385 = vperm.xlu0 %2384, %v227
  %v2386 = vpop.permute.xlu0 %2385
  %2388 = vset.pattern.permute.xlu0 4
  %2389 = vperm.xlu0 %2388, %v228
  %v2390 = vpop.permute.xlu0 %2389
  %2392 = vset.pattern.permute.xlu0 4
  %2393 = vperm.xlu0 %2392, %v229
  %v2394 = vpop.permute.xlu0 %2393
  %2396 = vset.pattern.permute.xlu0 4
  %2397 = vperm.xlu0 %2396, %v230
  %v2398 = vpop.permute.xlu0 %2397
  %2400 = vset.pattern.permute.xlu0 4
  %2401 = vperm.xlu0 %2400, %v231
  %v2402 = vpop.permute.xlu0 %2401
  %2404 = vset.pattern.permute.xlu0 4
  %2405 = vperm.xlu0 %2404, %v232
  %v2406 = vpop.permute.xlu0 %2405
  %2408 = vset.pattern.permute.xlu0 4
  %2409 = vperm.xlu0 %2408, %v233
  %v2410 = vpop.permute.xlu0 %2409
  %2412 = vset.pattern.permute.xlu0 4
  %2413 = vperm.xlu0 %2412, %v234
  %v2414 = vpop.permute.xlu0 %2413
  %2416 = vset.pattern.permute.xlu0 4
  %2417 = vperm.xlu0 %2416, %v235
  %v2418 = vpop.permute.xlu0 %2417
  %v2420 = vmul.f32 %v2270, %v8
  %v2421 = vmul.f32 %v2274, %v9
  %v2422 = vmul.f32 %v2278, %v10
  %v2423 = vmul.f32 %v2282, %v11
  %v2424 = vmul.f32 %v2286, %v12
  %v2425 = vmul.f32 %v2290, %v13
  %v2426 = vmul.f32 %v2294, %v14
  %v2427 = vmul.f32 %v2298, %v15
  %v2428 = vmul.f32 %v2302, %v16
  %v2429 = vmul.f32 %v2306, %v17
  %v2430 = vmul.f32 %v2310, %v18
  %v2431 = vmul.f32 %v2314, %v19
  %v2432 = vmul.f32 %v2318, %v20
  %v2433 = vmul.f32 %v2322, %v21
  %v2434 = vmul.f32 %v2326, %v22
  %v2435 = vmul.f32 %v2330, %v23
  %v2436 = vmul.f32 %v2334, %v24
  %v2437 = vmul.f32 %v2338, %v25
  %v2438 = vmul.f32 %v2342, %v26
  %v2439 = vmul.f32 %v2346, %v27
  %v2440 = vmul.f32 %v2350, %v28
  %v2441 = vmul.f32 %v2354, %v29
  %v2442 = vmul.f32 %v2358, %v30
  %v2443 = vmul.f32 %v2362, %v31
  %v2444 = vmul.f32 %v2366, %v32
  %v2445 = vmul.f32 %v2370, %v33
  %v2446 = vmul.f32 %v2374, %v34
  %v2447 = vmul.f32 %v2378, %v35
  %v2448 = vmul.f32 %v2382, %v36
  %v2449 = vmul.f32 %v2386, %v37
  %v2450 = vmul.f32 %v2390, %v38
  %v2451 = vmul.f32 %v2394, %v39
  %v2452 = vmul.f32 %v2398, %v40
  %v2453 = vmul.f32 %v2402, %v41
  %v2454 = vmul.f32 %v2406, %v42
  %v2455 = vmul.f32 %v2410, %v43
  %v2456 = vmul.f32 %v2414, %v44
  %v2457 = vmul.f32 %v2418, %v45
  %v2458 = vadd.f32 %v2420, 0.02
  %v2459 = vadd.f32 %v2421, 0.02
  %v2460 = vadd.f32 %v2422, 0.02
  %v2461 = vadd.f32 %v2423, 0.02
  %v2462 = vadd.f32 %v2424, 0.02
  %v2463 = vadd.f32 %v2425, 0.02
  %v2464 = vadd.f32 %v2426, 0.02
  %v2465 = vadd.f32 %v2427, 0.02
  %v2466 = vadd.f32 %v2428, 0.02
  %v2467 = vadd.f32 %v2429, 0.02
  %v2468 = vadd.f32 %v2430, 0.02
  %v2469 = vadd.f32 %v2431, 0.02
  %v2470 = vadd.f32 %v2432, 0.02
  %v2471 = vadd.f32 %v2433, 0.02
  %v2472 = vadd.f32 %v2434, 0.02
  %v2473 = vadd.f32 %v2435, 0.02
  %v2474 = vadd.f32 %v2436, 0.02
  %v2475 = vadd.f32 %v2437, 0.02
  %v2476 = vadd.f32 %v2438, 0.02
  %v2477 = vadd.f32 %v2439, 0.02
  %v2478 = vadd.f32 %v2440, 0.02
  %v2479 = vadd.f32 %v2441, 0.02
  %v2480 = vadd.f32 %v2442, 0.02
  %v2481 = vadd.f32 %v2443, 0.02
  %v2482 = vadd.f32 %v2444, 0.02
  %v2483 = vadd.f32 %v2445, 0.02
  %v2484 = vadd.f32 %v2446, 0.02
  %v2485 = vadd.f32 %v2447, 0.02
  %v2486 = vadd.f32 %v2448, 0.02
  %v2487 = vadd.f32 %v2449, 0.02
  %v2488 = vadd.f32 %v2450, 0.02
  %v2489 = vadd.f32 %v2451, 0.02
  %v2490 = vadd.f32 %v2452, 0.02
  %v2491 = vadd.f32 %v2453, 0.02
  %v2492 = vadd.f32 %v2454, 0.02
  %v2493 = vadd.f32 %v2455, 0.02
  %v2494 = vadd.f32 %v2456, 0.02
  %v2495 = vadd.f32 %v2457, 0.02
  %v2496 = vand.u32 2147483647, %v2458
  %v2497 = vand.u32 2147483647, %v2459
  %v2498 = vand.u32 2147483647, %v2460
  %v2499 = vand.u32 2147483647, %v2461
  %v2500 = vand.u32 2147483647, %v2462
  %v2501 = vand.u32 2147483647, %v2463
  %v2502 = vand.u32 2147483647, %v2464
  %v2503 = vand.u32 2147483647, %v2465
  %v2504 = vand.u32 2147483647, %v2466
  %v2505 = vand.u32 2147483647, %v2467
  %v2506 = vand.u32 2147483647, %v2468
  %v2507 = vand.u32 2147483647, %v2469
  %v2508 = vand.u32 2147483647, %v2470
  %v2509 = vand.u32 2147483647, %v2471
  %v2510 = vand.u32 2147483647, %v2472
  %v2511 = vand.u32 2147483647, %v2473
  %v2512 = vand.u32 2147483647, %v2474
  %v2513 = vand.u32 2147483647, %v2475
  %v2514 = vand.u32 2147483647, %v2476
  %v2515 = vand.u32 2147483647, %v2477
  %v2516 = vand.u32 2147483647, %v2478
  %v2517 = vand.u32 2147483647, %v2479
  %v2518 = vand.u32 2147483647, %v2480
  %v2519 = vand.u32 2147483647, %v2481
  %v2520 = vand.u32 2147483647, %v2482
  %v2521 = vand.u32 2147483647, %v2483
  %v2522 = vand.u32 2147483647, %v2484
  %v2523 = vand.u32 2147483647, %v2485
  %v2524 = vand.u32 2147483647, %v2486
  %v2525 = vand.u32 2147483647, %v2487
  %v2526 = vand.u32 2147483647, %v2488
  %v2527 = vand.u32 2147483647, %v2489
  %v2528 = vand.u32 2147483647, %v2490
  %v2529 = vand.u32 2147483647, %v2491
  %v2530 = vand.u32 2147483647, %v2492
  %v2531 = vand.u32 2147483647, %v2493
  %v2532 = vand.u32 2147483647, %v2494
  %v2533 = vand.u32 2147483647, %v2495
  %vm2534 = vcmp.eq.s32.totalorder %v237, 4
  %v2535 = vadd.f32 %v2496, 1.0
  %v2536 = vadd.f32 %v2497, 1.0
  %v2537 = vadd.f32 %v2498, 1.0
  %v2538 = vadd.f32 %v2499, 1.0
  %v2539 = vadd.f32 %v2500, 1.0
  %v2540 = vadd.f32 %v2501, 1.0
  %v2541 = vadd.f32 %v2502, 1.0
  %v2542 = vadd.f32 %v2503, 1.0
  %v2543 = vadd.f32 %v2504, 1.0
  %v2544 = vadd.f32 %v2505, 1.0
  %v2545 = vadd.f32 %v2506, 1.0
  %v2546 = vadd.f32 %v2507, 1.0
  %v2547 = vadd.f32 %v2508, 1.0
  %v2548 = vadd.f32 %v2509, 1.0
  %v2549 = vadd.f32 %v2510, 1.0
  %v2550 = vadd.f32 %v2511, 1.0
  %v2551 = vadd.f32 %v2512, 1.0
  %v2552 = vadd.f32 %v2513, 1.0
  %v2553 = vadd.f32 %v2514, 1.0
  %v2554 = vadd.f32 %v2515, 1.0
  %v2555 = vadd.f32 %v2516, 1.0
  %v2556 = vadd.f32 %v2517, 1.0
  %v2557 = vadd.f32 %v2518, 1.0
  %v2558 = vadd.f32 %v2519, 1.0
  %v2559 = vadd.f32 %v2520, 1.0
  %v2560 = vadd.f32 %v2521, 1.0
  %v2561 = vadd.f32 %v2522, 1.0
  %v2562 = vadd.f32 %v2523, 1.0
  %v2563 = vadd.f32 %v2524, 1.0
  %v2564 = vadd.f32 %v2525, 1.0
  %v2565 = vadd.f32 %v2526, 1.0
  %v2566 = vadd.f32 %v2527, 1.0
  %v2567 = vadd.f32 %v2528, 1.0
  %v2568 = vadd.f32 %v2529, 1.0
  %v2569 = vadd.f32 %v2530, 1.0
  %v2570 = vadd.f32 %v2531, 1.0
  %v2571 = vadd.f32 %v2532, 1.0
  %v2572 = vadd.f32 %v2533, 1.0
  %v2573 = vsel %vm2534, 1, 0
  %vm2574 = vcmp.eq.s32.totalorder %v2573, 1
  %v2575 = vsel %vm2574, %v2535, %v2496
  %v2576 = vsel %vm2574, %v2536, %v2497
  %v2577 = vsel %vm2574, %v2537, %v2498
  %v2578 = vsel %vm2574, %v2538, %v2499
  %v2579 = vsel %vm2574, %v2539, %v2500
  %v2580 = vsel %vm2574, %v2540, %v2501
  %v2581 = vsel %vm2574, %v2541, %v2502
  %v2582 = vsel %vm2574, %v2542, %v2503
  %v2583 = vsel %vm2574, %v2543, %v2504
  %v2584 = vsel %vm2574, %v2544, %v2505
  %v2585 = vsel %vm2574, %v2545, %v2506
  %v2586 = vsel %vm2574, %v2546, %v2507
  %v2587 = vsel %vm2574, %v2547, %v2508
  %v2588 = vsel %vm2574, %v2548, %v2509
  %v2589 = vsel %vm2574, %v2549, %v2510
  %v2590 = vsel %vm2574, %v2550, %v2511
  %v2591 = vsel %vm2574, %v2551, %v2512
  %v2592 = vsel %vm2574, %v2552, %v2513
  %v2593 = vsel %vm2574, %v2553, %v2514
  %v2594 = vsel %vm2574, %v2554, %v2515
  %v2595 = vsel %vm2574, %v2555, %v2516
  %v2596 = vsel %vm2574, %v2556, %v2517
  %v2597 = vsel %vm2574, %v2557, %v2518
  %v2598 = vsel %vm2574, %v2558, %v2519
  %v2599 = vsel %vm2574, %v2559, %v2520
  %v2600 = vsel %vm2574, %v2560, %v2521
  %v2601 = vsel %vm2574, %v2561, %v2522
  %v2602 = vsel %vm2574, %v2562, %v2523
  %v2603 = vsel %vm2574, %v2563, %v2524
  %v2604 = vsel %vm2574, %v2564, %v2525
  %v2605 = vsel %vm2574, %v2565, %v2526
  %v2606 = vsel %vm2574, %v2566, %v2527
  %v2607 = vsel %vm2574, %v2567, %v2528
  %v2608 = vsel %vm2574, %v2568, %v2529
  %v2609 = vsel %vm2574, %v2569, %v2530
  %v2610 = vsel %vm2574, %v2570, %v2531
  %v2611 = vsel %vm2574, %v2571, %v2532
  %v2612 = vsel %vm2574, %v2572, %v2533
  %2651 = vrot.lane.b32.xlu0 %v2575, 32
  %v2652 = vpop.permute.xlu0 %2651
  %2653 = vrot.lane.b32.xlu0 %v2576, 32
  %v2654 = vpop.permute.xlu0 %2653
  %2655 = vrot.lane.b32.xlu0 %v2577, 32
  %v2656 = vpop.permute.xlu0 %2655
  %2657 = vrot.lane.b32.xlu0 %v2578, 32
  %v2658 = vpop.permute.xlu0 %2657
  %2659 = vrot.lane.b32.xlu0 %v2579, 32
  %v2660 = vpop.permute.xlu0 %2659
  %2661 = vrot.lane.b32.xlu0 %v2580, 32
  %v2662 = vpop.permute.xlu0 %2661
  %2663 = vrot.lane.b32.xlu0 %v2581, 32
  %v2664 = vpop.permute.xlu0 %2663
  %2665 = vrot.lane.b32.xlu0 %v2582, 32
  %v2666 = vpop.permute.xlu0 %2665
  %2667 = vrot.lane.b32.xlu0 %v2583, 32
  %v2668 = vpop.permute.xlu0 %2667
  %2669 = vrot.lane.b32.xlu0 %v2584, 32
  %v2670 = vpop.permute.xlu0 %2669
  %2671 = vrot.lane.b32.xlu0 %v2585, 32
  %v2672 = vpop.permute.xlu0 %2671
  %2673 = vrot.lane.b32.xlu0 %v2586, 32
  %v2674 = vpop.permute.xlu0 %2673
  %2675 = vrot.lane.b32.xlu0 %v2587, 32
  %v2676 = vpop.permute.xlu0 %2675
  %2677 = vrot.lane.b32.xlu0 %v2588, 32
  %v2678 = vpop.permute.xlu0 %2677
  %2679 = vrot.lane.b32.xlu0 %v2589, 32
  %v2680 = vpop.permute.xlu0 %2679
  %2681 = vrot.lane.b32.xlu0 %v2590, 32
  %v2682 = vpop.permute.xlu0 %2681
  %2683 = vrot.lane.b32.xlu0 %v2591, 32
  %v2684 = vpop.permute.xlu0 %2683
  %2685 = vrot.lane.b32.xlu0 %v2592, 32
  %v2686 = vpop.permute.xlu0 %2685
  %2687 = vrot.lane.b32.xlu0 %v2593, 32
  %v2688 = vpop.permute.xlu0 %2687
  %2689 = vrot.lane.b32.xlu0 %v2594, 32
  %v2690 = vpop.permute.xlu0 %2689
  %2691 = vrot.lane.b32.xlu0 %v2595, 32
  %v2692 = vpop.permute.xlu0 %2691
  %2693 = vrot.lane.b32.xlu0 %v2596, 32
  %v2694 = vpop.permute.xlu0 %2693
  %2695 = vrot.lane.b32.xlu0 %v2597, 32
  %v2696 = vpop.permute.xlu0 %2695
  %2697 = vrot.lane.b32.xlu0 %v2598, 32
  %v2698 = vpop.permute.xlu0 %2697
  %2699 = vrot.lane.b32.xlu0 %v2599, 32
  %v2700 = vpop.permute.xlu0 %2699
  %2701 = vrot.lane.b32.xlu0 %v2600, 32
  %v2702 = vpop.permute.xlu0 %2701
  %2703 = vrot.lane.b32.xlu0 %v2601, 32
  %v2704 = vpop.permute.xlu0 %2703
  %2705 = vrot.lane.b32.xlu0 %v2602, 32
  %v2706 = vpop.permute.xlu0 %2705
  %2707 = vrot.lane.b32.xlu0 %v2603, 32
  %v2708 = vpop.permute.xlu0 %2707
  %2709 = vrot.lane.b32.xlu0 %v2604, 32
  %v2710 = vpop.permute.xlu0 %2709
  %2711 = vrot.lane.b32.xlu0 %v2605, 32
  %v2712 = vpop.permute.xlu0 %2711
  %2713 = vrot.lane.b32.xlu0 %v2606, 32
  %v2714 = vpop.permute.xlu0 %2713
  %2715 = vrot.lane.b32.xlu0 %v2607, 32
  %v2716 = vpop.permute.xlu0 %2715
  %2717 = vrot.lane.b32.xlu0 %v2608, 32
  %v2718 = vpop.permute.xlu0 %2717
  %2719 = vrot.lane.b32.xlu0 %v2609, 32
  %v2720 = vpop.permute.xlu0 %2719
  %2721 = vrot.lane.b32.xlu0 %v2610, 32
  %v2722 = vpop.permute.xlu0 %2721
  %2723 = vrot.lane.b32.xlu0 %v2611, 32
  %v2724 = vpop.permute.xlu0 %2723
  %2725 = vrot.lane.b32.xlu0 %v2612, 32
  %v2726 = vpop.permute.xlu0 %2725
  %vm2765 = vcmask 326912
  %2766 = vst.msk [vmem:[%s1] sm:$0xff] %vm2765, %v2652
  %2767 = vst.msk [vmem:[%s1 + $0x8] sm:$0xff] %vm2765, %v2654
  %2768 = vst.msk [vmem:[%s1 + $0x10] sm:$0xff] %vm2765, %v2656
  %2769 = vst.msk [vmem:[%s1 + $0x18] sm:$0xff] %vm2765, %v2658
  %2770 = vst.msk [vmem:[%s1 + $0x20] sm:$0xff] %vm2765, %v2660
  %2771 = vst.msk [vmem:[%s1 + $0x28] sm:$0xff] %vm2765, %v2662
  %2772 = vst.msk [vmem:[%s1 + $0x30] sm:$0xff] %vm2765, %v2664
  %2773 = vst.msk [vmem:[%s1 + $0x38] sm:$0xff] %vm2765, %v2666
  %2774 = vst.msk [vmem:[%s1 + $0x40] sm:$0xff] %vm2765, %v2668
  %2775 = vst.msk [vmem:[%s1 + $0x48] sm:$0xff] %vm2765, %v2670
  %2776 = vst.msk [vmem:[%s1 + $0x50] sm:$0xff] %vm2765, %v2672
  %2777 = vst.msk [vmem:[%s1 + $0x58] sm:$0xff] %vm2765, %v2674
  %2778 = vst.msk [vmem:[%s1 + $0x60] sm:$0xff] %vm2765, %v2676
  %2779 = vst.msk [vmem:[%s1 + $0x68] sm:$0xff] %vm2765, %v2678
  %2780 = vst.msk [vmem:[%s1 + $0x70] sm:$0xff] %vm2765, %v2680
  %2781 = vst.msk [vmem:[%s1 + $0x78] sm:$0xff] %vm2765, %v2682
  %2782 = vst.msk [vmem:[%s1 + $0x80] sm:$0xff] %vm2765, %v2684
  %2783 = vst.msk [vmem:[%s1 + $0x88] sm:$0xff] %vm2765, %v2686
  %2784 = vst.msk [vmem:[%s1 + $0x90] sm:$0xff] %vm2765, %v2688
  %2785 = vst.msk [vmem:[%s1 + $0x98] sm:$0xff] %vm2765, %v2690
  %2786 = vst.msk [vmem:[%s1 + $0xa0] sm:$0xff] %vm2765, %v2692
  %2787 = vst.msk [vmem:[%s1 + $0xa8] sm:$0xff] %vm2765, %v2694
  %2788 = vst.msk [vmem:[%s1 + $0xb0] sm:$0xff] %vm2765, %v2696
  %2789 = vst.msk [vmem:[%s1 + $0xb8] sm:$0xff] %vm2765, %v2698
  %2790 = vst.msk [vmem:[%s1 + $0xc0] sm:$0xff] %vm2765, %v2700
  %2791 = vst.msk [vmem:[%s1 + $0xc8] sm:$0xff] %vm2765, %v2702
  %2792 = vst.msk [vmem:[%s1 + $0xd0] sm:$0xff] %vm2765, %v2704
  %2793 = vst.msk [vmem:[%s1 + $0xd8] sm:$0xff] %vm2765, %v2706
  %2794 = vst.msk [vmem:[%s1 + $0xe0] sm:$0xff] %vm2765, %v2708
  %2795 = vst.msk [vmem:[%s1 + $0xe8] sm:$0xff] %vm2765, %v2710
  %2796 = vst.msk [vmem:[%s1 + $0xf0] sm:$0xff] %vm2765, %v2712
  %2797 = vst.msk [vmem:[%s1 + $0xf8] sm:$0xff] %vm2765, %v2714
  %2798 = vst.msk [vmem:[%s1 + $0x100] sm:$0xff] %vm2765, %v2716
  %2799 = vst.msk [vmem:[%s1 + $0x108] sm:$0xff] %vm2765, %v2718
  %2800 = vst.msk [vmem:[%s1 + $0x110] sm:$0xff] %vm2765, %v2720
  %2801 = vst.msk [vmem:[%s1 + $0x118] sm:$0xff] %vm2765, %v2722
  %2802 = vst.msk [vmem:[%s1 + $0x120] sm:$0xff] %vm2765, %v2724
  %2803 = vst.msk [vmem:[%s1 + $0x128] sm:$0xff] %vm2765, %v2726
  %2804 = vset.pattern.permute.xlu0 5
  %2805 = vperm.xlu0 %2804, %v198
  %v2806 = vpop.permute.xlu0 %2805
  %2808 = vset.pattern.permute.xlu0 5
  %2809 = vperm.xlu0 %2808, %v199
  %v2810 = vpop.permute.xlu0 %2809
  %2812 = vset.pattern.permute.xlu0 5
  %2813 = vperm.xlu0 %2812, %v200
  %v2814 = vpop.permute.xlu0 %2813
  %2816 = vset.pattern.permute.xlu0 5
  %2817 = vperm.xlu0 %2816, %v201
  %v2818 = vpop.permute.xlu0 %2817
  %2820 = vset.pattern.permute.xlu0 5
  %2821 = vperm.xlu0 %2820, %v202
  %v2822 = vpop.permute.xlu0 %2821
  %2824 = vset.pattern.permute.xlu0 5
  %2825 = vperm.xlu0 %2824, %v203
  %v2826 = vpop.permute.xlu0 %2825
  %2828 = vset.pattern.permute.xlu0 5
  %2829 = vperm.xlu0 %2828, %v204
  %v2830 = vpop.permute.xlu0 %2829
  %2832 = vset.pattern.permute.xlu0 5
  %2833 = vperm.xlu0 %2832, %v205
  %v2834 = vpop.permute.xlu0 %2833
  %2836 = vset.pattern.permute.xlu0 5
  %2837 = vperm.xlu0 %2836, %v206
  %v2838 = vpop.permute.xlu0 %2837
  %2840 = vset.pattern.permute.xlu0 5
  %2841 = vperm.xlu0 %2840, %v207
  %v2842 = vpop.permute.xlu0 %2841
  %2844 = vset.pattern.permute.xlu0 5
  %2845 = vperm.xlu0 %2844, %v208
  %v2846 = vpop.permute.xlu0 %2845
  %2848 = vset.pattern.permute.xlu0 5
  %2849 = vperm.xlu0 %2848, %v209
  %v2850 = vpop.permute.xlu0 %2849
  %2852 = vset.pattern.permute.xlu0 5
  %2853 = vperm.xlu0 %2852, %v210
  %v2854 = vpop.permute.xlu0 %2853
  %2856 = vset.pattern.permute.xlu0 5
  %2857 = vperm.xlu0 %2856, %v211
  %v2858 = vpop.permute.xlu0 %2857
  %2860 = vset.pattern.permute.xlu0 5
  %2861 = vperm.xlu0 %2860, %v212
  %v2862 = vpop.permute.xlu0 %2861
  %2864 = vset.pattern.permute.xlu0 5
  %2865 = vperm.xlu0 %2864, %v213
  %v2866 = vpop.permute.xlu0 %2865
  %2868 = vset.pattern.permute.xlu0 5
  %2869 = vperm.xlu0 %2868, %v214
  %v2870 = vpop.permute.xlu0 %2869
  %2872 = vset.pattern.permute.xlu0 5
  %2873 = vperm.xlu0 %2872, %v215
  %v2874 = vpop.permute.xlu0 %2873
  %2876 = vset.pattern.permute.xlu0 5
  %2877 = vperm.xlu0 %2876, %v216
  %v2878 = vpop.permute.xlu0 %2877
  %2880 = vset.pattern.permute.xlu0 5
  %2881 = vperm.xlu0 %2880, %v217
  %v2882 = vpop.permute.xlu0 %2881
  %2884 = vset.pattern.permute.xlu0 5
  %2885 = vperm.xlu0 %2884, %v218
  %v2886 = vpop.permute.xlu0 %2885
  %2888 = vset.pattern.permute.xlu0 5
  %2889 = vperm.xlu0 %2888, %v219
  %v2890 = vpop.permute.xlu0 %2889
  %2892 = vset.pattern.permute.xlu0 5
  %2893 = vperm.xlu0 %2892, %v220
  %v2894 = vpop.permute.xlu0 %2893
  %2896 = vset.pattern.permute.xlu0 5
  %2897 = vperm.xlu0 %2896, %v221
  %v2898 = vpop.permute.xlu0 %2897
  %2900 = vset.pattern.permute.xlu0 5
  %2901 = vperm.xlu0 %2900, %v222
  %v2902 = vpop.permute.xlu0 %2901
  %2904 = vset.pattern.permute.xlu0 5
  %2905 = vperm.xlu0 %2904, %v223
  %v2906 = vpop.permute.xlu0 %2905
  %2908 = vset.pattern.permute.xlu0 5
  %2909 = vperm.xlu0 %2908, %v224
  %v2910 = vpop.permute.xlu0 %2909
  %2912 = vset.pattern.permute.xlu0 5
  %2913 = vperm.xlu0 %2912, %v225
  %v2914 = vpop.permute.xlu0 %2913
  %2916 = vset.pattern.permute.xlu0 5
  %2917 = vperm.xlu0 %2916, %v226
  %v2918 = vpop.permute.xlu0 %2917
  %2920 = vset.pattern.permute.xlu0 5
  %2921 = vperm.xlu0 %2920, %v227
  %v2922 = vpop.permute.xlu0 %2921
  %2924 = vset.pattern.permute.xlu0 5
  %2925 = vperm.xlu0 %2924, %v228
  %v2926 = vpop.permute.xlu0 %2925
  %2928 = vset.pattern.permute.xlu0 5
  %2929 = vperm.xlu0 %2928, %v229
  %v2930 = vpop.permute.xlu0 %2929
  %2932 = vset.pattern.permute.xlu0 5
  %2933 = vperm.xlu0 %2932, %v230
  %v2934 = vpop.permute.xlu0 %2933
  %2936 = vset.pattern.permute.xlu0 5
  %2937 = vperm.xlu0 %2936, %v231
  %v2938 = vpop.permute.xlu0 %2937
  %2940 = vset.pattern.permute.xlu0 5
  %2941 = vperm.xlu0 %2940, %v232
  %v2942 = vpop.permute.xlu0 %2941
  %2944 = vset.pattern.permute.xlu0 5
  %2945 = vperm.xlu0 %2944, %v233
  %v2946 = vpop.permute.xlu0 %2945
  %2948 = vset.pattern.permute.xlu0 5
  %2949 = vperm.xlu0 %2948, %v234
  %v2950 = vpop.permute.xlu0 %2949
  %2952 = vset.pattern.permute.xlu0 5
  %2953 = vperm.xlu0 %2952, %v235
  %v2954 = vpop.permute.xlu0 %2953
  %v2956 = vmul.f32 %v2806, %v8
  %v2957 = vmul.f32 %v2810, %v9
  %v2958 = vmul.f32 %v2814, %v10
  %v2959 = vmul.f32 %v2818, %v11
  %v2960 = vmul.f32 %v2822, %v12
  %v2961 = vmul.f32 %v2826, %v13
  %v2962 = vmul.f32 %v2830, %v14
  %v2963 = vmul.f32 %v2834, %v15
  %v2964 = vmul.f32 %v2838, %v16
  %v2965 = vmul.f32 %v2842, %v17
  %v2966 = vmul.f32 %v2846, %v18
  %v2967 = vmul.f32 %v2850, %v19
  %v2968 = vmul.f32 %v2854, %v20
  %v2969 = vmul.f32 %v2858, %v21
  %v2970 = vmul.f32 %v2862, %v22
  %v2971 = vmul.f32 %v2866, %v23
  %v2972 = vmul.f32 %v2870, %v24
  %v2973 = vmul.f32 %v2874, %v25
  %v2974 = vmul.f32 %v2878, %v26
  %v2975 = vmul.f32 %v2882, %v27
  %v2976 = vmul.f32 %v2886, %v28
  %v2977 = vmul.f32 %v2890, %v29
  %v2978 = vmul.f32 %v2894, %v30
  %v2979 = vmul.f32 %v2898, %v31
  %v2980 = vmul.f32 %v2902, %v32
  %v2981 = vmul.f32 %v2906, %v33
  %v2982 = vmul.f32 %v2910, %v34
  %v2983 = vmul.f32 %v2914, %v35
  %v2984 = vmul.f32 %v2918, %v36
  %v2985 = vmul.f32 %v2922, %v37
  %v2986 = vmul.f32 %v2926, %v38
  %v2987 = vmul.f32 %v2930, %v39
  %v2988 = vmul.f32 %v2934, %v40
  %v2989 = vmul.f32 %v2938, %v41
  %v2990 = vmul.f32 %v2942, %v42
  %v2991 = vmul.f32 %v2946, %v43
  %v2992 = vmul.f32 %v2950, %v44
  %v2993 = vmul.f32 %v2954, %v45
  %v2994 = vadd.f32 %v2956, 0.02
  %v2995 = vadd.f32 %v2957, 0.02
  %v2996 = vadd.f32 %v2958, 0.02
  %v2997 = vadd.f32 %v2959, 0.02
  %v2998 = vadd.f32 %v2960, 0.02
  %v2999 = vadd.f32 %v2961, 0.02
  %v3000 = vadd.f32 %v2962, 0.02
  %v3001 = vadd.f32 %v2963, 0.02
  %v3002 = vadd.f32 %v2964, 0.02
  %v3003 = vadd.f32 %v2965, 0.02
  %v3004 = vadd.f32 %v2966, 0.02
  %v3005 = vadd.f32 %v2967, 0.02
  %v3006 = vadd.f32 %v2968, 0.02
  %v3007 = vadd.f32 %v2969, 0.02
  %v3008 = vadd.f32 %v2970, 0.02
  %v3009 = vadd.f32 %v2971, 0.02
  %v3010 = vadd.f32 %v2972, 0.02
  %v3011 = vadd.f32 %v2973, 0.02
  %v3012 = vadd.f32 %v2974, 0.02
  %v3013 = vadd.f32 %v2975, 0.02
  %v3014 = vadd.f32 %v2976, 0.02
  %v3015 = vadd.f32 %v2977, 0.02
  %v3016 = vadd.f32 %v2978, 0.02
  %v3017 = vadd.f32 %v2979, 0.02
  %v3018 = vadd.f32 %v2980, 0.02
  %v3019 = vadd.f32 %v2981, 0.02
  %v3020 = vadd.f32 %v2982, 0.02
  %v3021 = vadd.f32 %v2983, 0.02
  %v3022 = vadd.f32 %v2984, 0.02
  %v3023 = vadd.f32 %v2985, 0.02
  %v3024 = vadd.f32 %v2986, 0.02
  %v3025 = vadd.f32 %v2987, 0.02
  %v3026 = vadd.f32 %v2988, 0.02
  %v3027 = vadd.f32 %v2989, 0.02
  %v3028 = vadd.f32 %v2990, 0.02
  %v3029 = vadd.f32 %v2991, 0.02
  %v3030 = vadd.f32 %v2992, 0.02
  %v3031 = vadd.f32 %v2993, 0.02
  %v3032 = vand.u32 2147483647, %v2994
  %v3033 = vand.u32 2147483647, %v2995
  %v3034 = vand.u32 2147483647, %v2996
  %v3035 = vand.u32 2147483647, %v2997
  %v3036 = vand.u32 2147483647, %v2998
  %v3037 = vand.u32 2147483647, %v2999
  %v3038 = vand.u32 2147483647, %v3000
  %v3039 = vand.u32 2147483647, %v3001
  %v3040 = vand.u32 2147483647, %v3002
  %v3041 = vand.u32 2147483647, %v3003
  %v3042 = vand.u32 2147483647, %v3004
  %v3043 = vand.u32 2147483647, %v3005
  %v3044 = vand.u32 2147483647, %v3006
  %v3045 = vand.u32 2147483647, %v3007
  %v3046 = vand.u32 2147483647, %v3008
  %v3047 = vand.u32 2147483647, %v3009
  %v3048 = vand.u32 2147483647, %v3010
  %v3049 = vand.u32 2147483647, %v3011
  %v3050 = vand.u32 2147483647, %v3012
  %v3051 = vand.u32 2147483647, %v3013
  %v3052 = vand.u32 2147483647, %v3014
  %v3053 = vand.u32 2147483647, %v3015
  %v3054 = vand.u32 2147483647, %v3016
  %v3055 = vand.u32 2147483647, %v3017
  %v3056 = vand.u32 2147483647, %v3018
  %v3057 = vand.u32 2147483647, %v3019
  %v3058 = vand.u32 2147483647, %v3020
  %v3059 = vand.u32 2147483647, %v3021
  %v3060 = vand.u32 2147483647, %v3022
  %v3061 = vand.u32 2147483647, %v3023
  %v3062 = vand.u32 2147483647, %v3024
  %v3063 = vand.u32 2147483647, %v3025
  %v3064 = vand.u32 2147483647, %v3026
  %v3065 = vand.u32 2147483647, %v3027
  %v3066 = vand.u32 2147483647, %v3028
  %v3067 = vand.u32 2147483647, %v3029
  %v3068 = vand.u32 2147483647, %v3030
  %v3069 = vand.u32 2147483647, %v3031
  %vm3070 = vcmp.eq.s32.totalorder %v237, 5
  %v3071 = vadd.f32 %v3032, 1.0
  %v3072 = vadd.f32 %v3033, 1.0
  %v3073 = vadd.f32 %v3034, 1.0
  %v3074 = vadd.f32 %v3035, 1.0
  %v3075 = vadd.f32 %v3036, 1.0
  %v3076 = vadd.f32 %v3037, 1.0
  %v3077 = vadd.f32 %v3038, 1.0
  %v3078 = vadd.f32 %v3039, 1.0
  %v3079 = vadd.f32 %v3040, 1.0
  %v3080 = vadd.f32 %v3041, 1.0
  %v3081 = vadd.f32 %v3042, 1.0
  %v3082 = vadd.f32 %v3043, 1.0
  %v3083 = vadd.f32 %v3044, 1.0
  %v3084 = vadd.f32 %v3045, 1.0
  %v3085 = vadd.f32 %v3046, 1.0
  %v3086 = vadd.f32 %v3047, 1.0
  %v3087 = vadd.f32 %v3048, 1.0
  %v3088 = vadd.f32 %v3049, 1.0
  %v3089 = vadd.f32 %v3050, 1.0
  %v3090 = vadd.f32 %v3051, 1.0
  %v3091 = vadd.f32 %v3052, 1.0
  %v3092 = vadd.f32 %v3053, 1.0
  %v3093 = vadd.f32 %v3054, 1.0
  %v3094 = vadd.f32 %v3055, 1.0
  %v3095 = vadd.f32 %v3056, 1.0
  %v3096 = vadd.f32 %v3057, 1.0
  %v3097 = vadd.f32 %v3058, 1.0
  %v3098 = vadd.f32 %v3059, 1.0
  %v3099 = vadd.f32 %v3060, 1.0
  %v3100 = vadd.f32 %v3061, 1.0
  %v3101 = vadd.f32 %v3062, 1.0
  %v3102 = vadd.f32 %v3063, 1.0
  %v3103 = vadd.f32 %v3064, 1.0
  %v3104 = vadd.f32 %v3065, 1.0
  %v3105 = vadd.f32 %v3066, 1.0
  %v3106 = vadd.f32 %v3067, 1.0
  %v3107 = vadd.f32 %v3068, 1.0
  %v3108 = vadd.f32 %v3069, 1.0
  %v3109 = vsel %vm3070, 1, 0
  %vm3110 = vcmp.eq.s32.totalorder %v3109, 1
  %v3111 = vsel %vm3110, %v3071, %v3032
  %v3112 = vsel %vm3110, %v3072, %v3033
  %v3113 = vsel %vm3110, %v3073, %v3034
  %v3114 = vsel %vm3110, %v3074, %v3035
  %v3115 = vsel %vm3110, %v3075, %v3036
  %v3116 = vsel %vm3110, %v3076, %v3037
  %v3117 = vsel %vm3110, %v3077, %v3038
  %v3118 = vsel %vm3110, %v3078, %v3039
  %v3119 = vsel %vm3110, %v3079, %v3040
  %v3120 = vsel %vm3110, %v3080, %v3041
  %v3121 = vsel %vm3110, %v3081, %v3042
  %v3122 = vsel %vm3110, %v3082, %v3043
  %v3123 = vsel %vm3110, %v3083, %v3044
  %v3124 = vsel %vm3110, %v3084, %v3045
  %v3125 = vsel %vm3110, %v3085, %v3046
  %v3126 = vsel %vm3110, %v3086, %v3047
  %v3127 = vsel %vm3110, %v3087, %v3048
  %v3128 = vsel %vm3110, %v3088, %v3049
  %v3129 = vsel %vm3110, %v3089, %v3050
  %v3130 = vsel %vm3110, %v3090, %v3051
  %v3131 = vsel %vm3110, %v3091, %v3052
  %v3132 = vsel %vm3110, %v3092, %v3053
  %v3133 = vsel %vm3110, %v3093, %v3054
  %v3134 = vsel %vm3110, %v3094, %v3055
  %v3135 = vsel %vm3110, %v3095, %v3056
  %v3136 = vsel %vm3110, %v3096, %v3057
  %v3137 = vsel %vm3110, %v3097, %v3058
  %v3138 = vsel %vm3110, %v3098, %v3059
  %v3139 = vsel %vm3110, %v3099, %v3060
  %v3140 = vsel %vm3110, %v3100, %v3061
  %v3141 = vsel %vm3110, %v3101, %v3062
  %v3142 = vsel %vm3110, %v3102, %v3063
  %v3143 = vsel %vm3110, %v3103, %v3064
  %v3144 = vsel %vm3110, %v3104, %v3065
  %v3145 = vsel %vm3110, %v3105, %v3066
  %v3146 = vsel %vm3110, %v3106, %v3067
  %v3147 = vsel %vm3110, %v3107, %v3068
  %v3148 = vsel %vm3110, %v3108, %v3069
  %3187 = vrot.lane.b32.xlu0 %v3111, 40
  %v3188 = vpop.permute.xlu0 %3187
  %3189 = vrot.lane.b32.xlu0 %v3112, 40
  %v3190 = vpop.permute.xlu0 %3189
  %3191 = vrot.lane.b32.xlu0 %v3113, 40
  %v3192 = vpop.permute.xlu0 %3191
  %3193 = vrot.lane.b32.xlu0 %v3114, 40
  %v3194 = vpop.permute.xlu0 %3193
  %3195 = vrot.lane.b32.xlu0 %v3115, 40
  %v3196 = vpop.permute.xlu0 %3195
  %3197 = vrot.lane.b32.xlu0 %v3116, 40
  %v3198 = vpop.permute.xlu0 %3197
  %3199 = vrot.lane.b32.xlu0 %v3117, 40
  %v3200 = vpop.permute.xlu0 %3199
  %3201 = vrot.lane.b32.xlu0 %v3118, 40
  %v3202 = vpop.permute.xlu0 %3201
  %3203 = vrot.lane.b32.xlu0 %v3119, 40
  %v3204 = vpop.permute.xlu0 %3203
  %3205 = vrot.lane.b32.xlu0 %v3120, 40
  %v3206 = vpop.permute.xlu0 %3205
  %3207 = vrot.lane.b32.xlu0 %v3121, 40
  %v3208 = vpop.permute.xlu0 %3207
  %3209 = vrot.lane.b32.xlu0 %v3122, 40
  %v3210 = vpop.permute.xlu0 %3209
  %3211 = vrot.lane.b32.xlu0 %v3123, 40
  %v3212 = vpop.permute.xlu0 %3211
  %3213 = vrot.lane.b32.xlu0 %v3124, 40
  %v3214 = vpop.permute.xlu0 %3213
  %3215 = vrot.lane.b32.xlu0 %v3125, 40
  %v3216 = vpop.permute.xlu0 %3215
  %3217 = vrot.lane.b32.xlu0 %v3126, 40
  %v3218 = vpop.permute.xlu0 %3217
  %3219 = vrot.lane.b32.xlu0 %v3127, 40
  %v3220 = vpop.permute.xlu0 %3219
  %3221 = vrot.lane.b32.xlu0 %v3128, 40
  %v3222 = vpop.permute.xlu0 %3221
  %3223 = vrot.lane.b32.xlu0 %v3129, 40
  %v3224 = vpop.permute.xlu0 %3223
  %3225 = vrot.lane.b32.xlu0 %v3130, 40
  %v3226 = vpop.permute.xlu0 %3225
  %3227 = vrot.lane.b32.xlu0 %v3131, 40
  %v3228 = vpop.permute.xlu0 %3227
  %3229 = vrot.lane.b32.xlu0 %v3132, 40
  %v3230 = vpop.permute.xlu0 %3229
  %3231 = vrot.lane.b32.xlu0 %v3133, 40
  %v3232 = vpop.permute.xlu0 %3231
  %3233 = vrot.lane.b32.xlu0 %v3134, 40
  %v3234 = vpop.permute.xlu0 %3233
  %3235 = vrot.lane.b32.xlu0 %v3135, 40
  %v3236 = vpop.permute.xlu0 %3235
  %3237 = vrot.lane.b32.xlu0 %v3136, 40
  %v3238 = vpop.permute.xlu0 %3237
  %3239 = vrot.lane.b32.xlu0 %v3137, 40
  %v3240 = vpop.permute.xlu0 %3239
  %3241 = vrot.lane.b32.xlu0 %v3138, 40
  %v3242 = vpop.permute.xlu0 %3241
  %3243 = vrot.lane.b32.xlu0 %v3139, 40
  %v3244 = vpop.permute.xlu0 %3243
  %3245 = vrot.lane.b32.xlu0 %v3140, 40
  %v3246 = vpop.permute.xlu0 %3245
  %3247 = vrot.lane.b32.xlu0 %v3141, 40
  %v3248 = vpop.permute.xlu0 %3247
  %3249 = vrot.lane.b32.xlu0 %v3142, 40
  %v3250 = vpop.permute.xlu0 %3249
  %3251 = vrot.lane.b32.xlu0 %v3143, 40
  %v3252 = vpop.permute.xlu0 %3251
  %3253 = vrot.lane.b32.xlu0 %v3144, 40
  %v3254 = vpop.permute.xlu0 %3253
  %3255 = vrot.lane.b32.xlu0 %v3145, 40
  %v3256 = vpop.permute.xlu0 %3255
  %3257 = vrot.lane.b32.xlu0 %v3146, 40
  %v3258 = vpop.permute.xlu0 %3257
  %3259 = vrot.lane.b32.xlu0 %v3147, 40
  %v3260 = vpop.permute.xlu0 %3259
  %3261 = vrot.lane.b32.xlu0 %v3148, 40
  %v3262 = vpop.permute.xlu0 %3261
  %vm3301 = vcmask 392512
  %3302 = vst.msk [vmem:[%s1] sm:$0xff] %vm3301, %v3188
  %3303 = vst.msk [vmem:[%s1 + $0x8] sm:$0xff] %vm3301, %v3190
  %3304 = vst.msk [vmem:[%s1 + $0x10] sm:$0xff] %vm3301, %v3192
  %3305 = vst.msk [vmem:[%s1 + $0x18] sm:$0xff] %vm3301, %v3194
  %3306 = vst.msk [vmem:[%s1 + $0x20] sm:$0xff] %vm3301, %v3196
  %3307 = vst.msk [vmem:[%s1 + $0x28] sm:$0xff] %vm3301, %v3198
  %3308 = vst.msk [vmem:[%s1 + $0x30] sm:$0xff] %vm3301, %v3200
  %3309 = vst.msk [vmem:[%s1 + $0x38] sm:$0xff] %vm3301, %v3202
  %3310 = vst.msk [vmem:[%s1 + $0x40] sm:$0xff] %vm3301, %v3204
  %3311 = vst.msk [vmem:[%s1 + $0x48] sm:$0xff] %vm3301, %v3206
  %3312 = vst.msk [vmem:[%s1 + $0x50] sm:$0xff] %vm3301, %v3208
  %3313 = vst.msk [vmem:[%s1 + $0x58] sm:$0xff] %vm3301, %v3210
  %3314 = vst.msk [vmem:[%s1 + $0x60] sm:$0xff] %vm3301, %v3212
  %3315 = vst.msk [vmem:[%s1 + $0x68] sm:$0xff] %vm3301, %v3214
  %3316 = vst.msk [vmem:[%s1 + $0x70] sm:$0xff] %vm3301, %v3216
  %3317 = vst.msk [vmem:[%s1 + $0x78] sm:$0xff] %vm3301, %v3218
  %3318 = vst.msk [vmem:[%s1 + $0x80] sm:$0xff] %vm3301, %v3220
  %3319 = vst.msk [vmem:[%s1 + $0x88] sm:$0xff] %vm3301, %v3222
  %3320 = vst.msk [vmem:[%s1 + $0x90] sm:$0xff] %vm3301, %v3224
  %3321 = vst.msk [vmem:[%s1 + $0x98] sm:$0xff] %vm3301, %v3226
  %3322 = vst.msk [vmem:[%s1 + $0xa0] sm:$0xff] %vm3301, %v3228
  %3323 = vst.msk [vmem:[%s1 + $0xa8] sm:$0xff] %vm3301, %v3230
  %3324 = vst.msk [vmem:[%s1 + $0xb0] sm:$0xff] %vm3301, %v3232
  %3325 = vst.msk [vmem:[%s1 + $0xb8] sm:$0xff] %vm3301, %v3234
  %3326 = vst.msk [vmem:[%s1 + $0xc0] sm:$0xff] %vm3301, %v3236
  %3327 = vst.msk [vmem:[%s1 + $0xc8] sm:$0xff] %vm3301, %v3238
  %3328 = vst.msk [vmem:[%s1 + $0xd0] sm:$0xff] %vm3301, %v3240
  %3329 = vst.msk [vmem:[%s1 + $0xd8] sm:$0xff] %vm3301, %v3242
  %3330 = vst.msk [vmem:[%s1 + $0xe0] sm:$0xff] %vm3301, %v3244
  %3331 = vst.msk [vmem:[%s1 + $0xe8] sm:$0xff] %vm3301, %v3246
  %3332 = vst.msk [vmem:[%s1 + $0xf0] sm:$0xff] %vm3301, %v3248
  %3333 = vst.msk [vmem:[%s1 + $0xf8] sm:$0xff] %vm3301, %v3250
  %3334 = vst.msk [vmem:[%s1 + $0x100] sm:$0xff] %vm3301, %v3252
  %3335 = vst.msk [vmem:[%s1 + $0x108] sm:$0xff] %vm3301, %v3254
  %3336 = vst.msk [vmem:[%s1 + $0x110] sm:$0xff] %vm3301, %v3256
  %3337 = vst.msk [vmem:[%s1 + $0x118] sm:$0xff] %vm3301, %v3258
  %3338 = vst.msk [vmem:[%s1 + $0x120] sm:$0xff] %vm3301, %v3260
  %3339 = vst.msk [vmem:[%s1 + $0x128] sm:$0xff] %vm3301, %v3262
  %3340 = vset.pattern.permute.xlu0 6
  %3341 = vperm.xlu0 %3340, %v198
  %v3342 = vpop.permute.xlu0 %3341
  %3344 = vset.pattern.permute.xlu0 6
  %3345 = vperm.xlu0 %3344, %v199
  %v3346 = vpop.permute.xlu0 %3345
  %3348 = vset.pattern.permute.xlu0 6
  %3349 = vperm.xlu0 %3348, %v200
  %v3350 = vpop.permute.xlu0 %3349
  %3352 = vset.pattern.permute.xlu0 6
  %3353 = vperm.xlu0 %3352, %v201
  %v3354 = vpop.permute.xlu0 %3353
  %3356 = vset.pattern.permute.xlu0 6
  %3357 = vperm.xlu0 %3356, %v202
  %v3358 = vpop.permute.xlu0 %3357
  %3360 = vset.pattern.permute.xlu0 6
  %3361 = vperm.xlu0 %3360, %v203
  %v3362 = vpop.permute.xlu0 %3361
  %3364 = vset.pattern.permute.xlu0 6
  %3365 = vperm.xlu0 %3364, %v204
  %v3366 = vpop.permute.xlu0 %3365
  %3368 = vset.pattern.permute.xlu0 6
  %3369 = vperm.xlu0 %3368, %v205
  %v3370 = vpop.permute.xlu0 %3369
  %3372 = vset.pattern.permute.xlu0 6
  %3373 = vperm.xlu0 %3372, %v206
  %v3374 = vpop.permute.xlu0 %3373
  %3376 = vset.pattern.permute.xlu0 6
  %3377 = vperm.xlu0 %3376, %v207
  %v3378 = vpop.permute.xlu0 %3377
  %3380 = vset.pattern.permute.xlu0 6
  %3381 = vperm.xlu0 %3380, %v208
  %v3382 = vpop.permute.xlu0 %3381
  %3384 = vset.pattern.permute.xlu0 6
  %3385 = vperm.xlu0 %3384, %v209
  %v3386 = vpop.permute.xlu0 %3385
  %3388 = vset.pattern.permute.xlu0 6
  %3389 = vperm.xlu0 %3388, %v210
  %v3390 = vpop.permute.xlu0 %3389
  %3392 = vset.pattern.permute.xlu0 6
  %3393 = vperm.xlu0 %3392, %v211
  %v3394 = vpop.permute.xlu0 %3393
  %3396 = vset.pattern.permute.xlu0 6
  %3397 = vperm.xlu0 %3396, %v212
  %v3398 = vpop.permute.xlu0 %3397
  %3400 = vset.pattern.permute.xlu0 6
  %3401 = vperm.xlu0 %3400, %v213
  %v3402 = vpop.permute.xlu0 %3401
  %3404 = vset.pattern.permute.xlu0 6
  %3405 = vperm.xlu0 %3404, %v214
  %v3406 = vpop.permute.xlu0 %3405
  %3408 = vset.pattern.permute.xlu0 6
  %3409 = vperm.xlu0 %3408, %v215
  %v3410 = vpop.permute.xlu0 %3409
  %3412 = vset.pattern.permute.xlu0 6
  %3413 = vperm.xlu0 %3412, %v216
  %v3414 = vpop.permute.xlu0 %3413
  %3416 = vset.pattern.permute.xlu0 6
  %3417 = vperm.xlu0 %3416, %v217
  %v3418 = vpop.permute.xlu0 %3417
  %3420 = vset.pattern.permute.xlu0 6
  %3421 = vperm.xlu0 %3420, %v218
  %v3422 = vpop.permute.xlu0 %3421
  %3424 = vset.pattern.permute.xlu0 6
  %3425 = vperm.xlu0 %3424, %v219
  %v3426 = vpop.permute.xlu0 %3425
  %3428 = vset.pattern.permute.xlu0 6
  %3429 = vperm.xlu0 %3428, %v220
  %v3430 = vpop.permute.xlu0 %3429
  %3432 = vset.pattern.permute.xlu0 6
  %3433 = vperm.xlu0 %3432, %v221
  %v3434 = vpop.permute.xlu0 %3433
  %3436 = vset.pattern.permute.xlu0 6
  %3437 = vperm.xlu0 %3436, %v222
  %v3438 = vpop.permute.xlu0 %3437
  %3440 = vset.pattern.permute.xlu0 6
  %3441 = vperm.xlu0 %3440, %v223
  %v3442 = vpop.permute.xlu0 %3441
  %3444 = vset.pattern.permute.xlu0 6
  %3445 = vperm.xlu0 %3444, %v224
  %v3446 = vpop.permute.xlu0 %3445
  %3448 = vset.pattern.permute.xlu0 6
  %3449 = vperm.xlu0 %3448, %v225
  %v3450 = vpop.permute.xlu0 %3449
  %3452 = vset.pattern.permute.xlu0 6
  %3453 = vperm.xlu0 %3452, %v226
  %v3454 = vpop.permute.xlu0 %3453
  %3456 = vset.pattern.permute.xlu0 6
  %3457 = vperm.xlu0 %3456, %v227
  %v3458 = vpop.permute.xlu0 %3457
  %3460 = vset.pattern.permute.xlu0 6
  %3461 = vperm.xlu0 %3460, %v228
  %v3462 = vpop.permute.xlu0 %3461
  %3464 = vset.pattern.permute.xlu0 6
  %3465 = vperm.xlu0 %3464, %v229
  %v3466 = vpop.permute.xlu0 %3465
  %3468 = vset.pattern.permute.xlu0 6
  %3469 = vperm.xlu0 %3468, %v230
  %v3470 = vpop.permute.xlu0 %3469
  %3472 = vset.pattern.permute.xlu0 6
  %3473 = vperm.xlu0 %3472, %v231
  %v3474 = vpop.permute.xlu0 %3473
  %3476 = vset.pattern.permute.xlu0 6
  %3477 = vperm.xlu0 %3476, %v232
  %v3478 = vpop.permute.xlu0 %3477
  %3480 = vset.pattern.permute.xlu0 6
  %3481 = vperm.xlu0 %3480, %v233
  %v3482 = vpop.permute.xlu0 %3481
  %3484 = vset.pattern.permute.xlu0 6
  %3485 = vperm.xlu0 %3484, %v234
  %v3486 = vpop.permute.xlu0 %3485
  %3488 = vset.pattern.permute.xlu0 6
  %3489 = vperm.xlu0 %3488, %v235
  %v3490 = vpop.permute.xlu0 %3489
  %v3492 = vmul.f32 %v3342, %v8
  %v3493 = vmul.f32 %v3346, %v9
  %v3494 = vmul.f32 %v3350, %v10
  %v3495 = vmul.f32 %v3354, %v11
  %v3496 = vmul.f32 %v3358, %v12
  %v3497 = vmul.f32 %v3362, %v13
  %v3498 = vmul.f32 %v3366, %v14
  %v3499 = vmul.f32 %v3370, %v15
  %v3500 = vmul.f32 %v3374, %v16
  %v3501 = vmul.f32 %v3378, %v17
  %v3502 = vmul.f32 %v3382, %v18
  %v3503 = vmul.f32 %v3386, %v19
  %v3504 = vmul.f32 %v3390, %v20
  %v3505 = vmul.f32 %v3394, %v21
  %v3506 = vmul.f32 %v3398, %v22
  %v3507 = vmul.f32 %v3402, %v23
  %v3508 = vmul.f32 %v3406, %v24
  %v3509 = vmul.f32 %v3410, %v25
  %v3510 = vmul.f32 %v3414, %v26
  %v3511 = vmul.f32 %v3418, %v27
  %v3512 = vmul.f32 %v3422, %v28
  %v3513 = vmul.f32 %v3426, %v29
  %v3514 = vmul.f32 %v3430, %v30
  %v3515 = vmul.f32 %v3434, %v31
  %v3516 = vmul.f32 %v3438, %v32
  %v3517 = vmul.f32 %v3442, %v33
  %v3518 = vmul.f32 %v3446, %v34
  %v3519 = vmul.f32 %v3450, %v35
  %v3520 = vmul.f32 %v3454, %v36
  %v3521 = vmul.f32 %v3458, %v37
  %v3522 = vmul.f32 %v3462, %v38
  %v3523 = vmul.f32 %v3466, %v39
  %v3524 = vmul.f32 %v3470, %v40
  %v3525 = vmul.f32 %v3474, %v41
  %v3526 = vmul.f32 %v3478, %v42
  %v3527 = vmul.f32 %v3482, %v43
  %v3528 = vmul.f32 %v3486, %v44
  %v3529 = vmul.f32 %v3490, %v45
  %v3530 = vadd.f32 %v3492, 0.02
  %v3531 = vadd.f32 %v3493, 0.02
  %v3532 = vadd.f32 %v3494, 0.02
  %v3533 = vadd.f32 %v3495, 0.02
  %v3534 = vadd.f32 %v3496, 0.02
  %v3535 = vadd.f32 %v3497, 0.02
  %v3536 = vadd.f32 %v3498, 0.02
  %v3537 = vadd.f32 %v3499, 0.02
  %v3538 = vadd.f32 %v3500, 0.02
  %v3539 = vadd.f32 %v3501, 0.02
  %v3540 = vadd.f32 %v3502, 0.02
  %v3541 = vadd.f32 %v3503, 0.02
  %v3542 = vadd.f32 %v3504, 0.02
  %v3543 = vadd.f32 %v3505, 0.02
  %v3544 = vadd.f32 %v3506, 0.02
  %v3545 = vadd.f32 %v3507, 0.02
  %v3546 = vadd.f32 %v3508, 0.02
  %v3547 = vadd.f32 %v3509, 0.02
  %v3548 = vadd.f32 %v3510, 0.02
  %v3549 = vadd.f32 %v3511, 0.02
  %v3550 = vadd.f32 %v3512, 0.02
  %v3551 = vadd.f32 %v3513, 0.02
  %v3552 = vadd.f32 %v3514, 0.02
  %v3553 = vadd.f32 %v3515, 0.02
  %v3554 = vadd.f32 %v3516, 0.02
  %v3555 = vadd.f32 %v3517, 0.02
  %v3556 = vadd.f32 %v3518, 0.02
  %v3557 = vadd.f32 %v3519, 0.02
  %v3558 = vadd.f32 %v3520, 0.02
  %v3559 = vadd.f32 %v3521, 0.02
  %v3560 = vadd.f32 %v3522, 0.02
  %v3561 = vadd.f32 %v3523, 0.02
  %v3562 = vadd.f32 %v3524, 0.02
  %v3563 = vadd.f32 %v3525, 0.02
  %v3564 = vadd.f32 %v3526, 0.02
  %v3565 = vadd.f32 %v3527, 0.02
  %v3566 = vadd.f32 %v3528, 0.02
  %v3567 = vadd.f32 %v3529, 0.02
  %v3568 = vand.u32 2147483647, %v3530
  %v3569 = vand.u32 2147483647, %v3531
  %v3570 = vand.u32 2147483647, %v3532
  %v3571 = vand.u32 2147483647, %v3533
  %v3572 = vand.u32 2147483647, %v3534
  %v3573 = vand.u32 2147483647, %v3535
  %v3574 = vand.u32 2147483647, %v3536
  %v3575 = vand.u32 2147483647, %v3537
  %v3576 = vand.u32 2147483647, %v3538
  %v3577 = vand.u32 2147483647, %v3539
  %v3578 = vand.u32 2147483647, %v3540
  %v3579 = vand.u32 2147483647, %v3541
  %v3580 = vand.u32 2147483647, %v3542
  %v3581 = vand.u32 2147483647, %v3543
  %v3582 = vand.u32 2147483647, %v3544
  %v3583 = vand.u32 2147483647, %v3545
  %v3584 = vand.u32 2147483647, %v3546
  %v3585 = vand.u32 2147483647, %v3547
  %v3586 = vand.u32 2147483647, %v3548
  %v3587 = vand.u32 2147483647, %v3549
  %v3588 = vand.u32 2147483647, %v3550
  %v3589 = vand.u32 2147483647, %v3551
  %v3590 = vand.u32 2147483647, %v3552
  %v3591 = vand.u32 2147483647, %v3553
  %v3592 = vand.u32 2147483647, %v3554
  %v3593 = vand.u32 2147483647, %v3555
  %v3594 = vand.u32 2147483647, %v3556
  %v3595 = vand.u32 2147483647, %v3557
  %v3596 = vand.u32 2147483647, %v3558
  %v3597 = vand.u32 2147483647, %v3559
  %v3598 = vand.u32 2147483647, %v3560
  %v3599 = vand.u32 2147483647, %v3561
  %v3600 = vand.u32 2147483647, %v3562
  %v3601 = vand.u32 2147483647, %v3563
  %v3602 = vand.u32 2147483647, %v3564
  %v3603 = vand.u32 2147483647, %v3565
  %v3604 = vand.u32 2147483647, %v3566
  %v3605 = vand.u32 2147483647, %v3567
  %vm3606 = vcmp.eq.s32.totalorder %v237, 6
  %v3607 = vadd.f32 %v3568, 1.0
  %v3608 = vadd.f32 %v3569, 1.0
  %v3609 = vadd.f32 %v3570, 1.0
  %v3610 = vadd.f32 %v3571, 1.0
  %v3611 = vadd.f32 %v3572, 1.0
  %v3612 = vadd.f32 %v3573, 1.0
  %v3613 = vadd.f32 %v3574, 1.0
  %v3614 = vadd.f32 %v3575, 1.0
  %v3615 = vadd.f32 %v3576, 1.0
  %v3616 = vadd.f32 %v3577, 1.0
  %v3617 = vadd.f32 %v3578, 1.0
  %v3618 = vadd.f32 %v3579, 1.0
  %v3619 = vadd.f32 %v3580, 1.0
  %v3620 = vadd.f32 %v3581, 1.0
  %v3621 = vadd.f32 %v3582, 1.0
  %v3622 = vadd.f32 %v3583, 1.0
  %v3623 = vadd.f32 %v3584, 1.0
  %v3624 = vadd.f32 %v3585, 1.0
  %v3625 = vadd.f32 %v3586, 1.0
  %v3626 = vadd.f32 %v3587, 1.0
  %v3627 = vadd.f32 %v3588, 1.0
  %v3628 = vadd.f32 %v3589, 1.0
  %v3629 = vadd.f32 %v3590, 1.0
  %v3630 = vadd.f32 %v3591, 1.0
  %v3631 = vadd.f32 %v3592, 1.0
  %v3632 = vadd.f32 %v3593, 1.0
  %v3633 = vadd.f32 %v3594, 1.0
  %v3634 = vadd.f32 %v3595, 1.0
  %v3635 = vadd.f32 %v3596, 1.0
  %v3636 = vadd.f32 %v3597, 1.0
  %v3637 = vadd.f32 %v3598, 1.0
  %v3638 = vadd.f32 %v3599, 1.0
  %v3639 = vadd.f32 %v3600, 1.0
  %v3640 = vadd.f32 %v3601, 1.0
  %v3641 = vadd.f32 %v3602, 1.0
  %v3642 = vadd.f32 %v3603, 1.0
  %v3643 = vadd.f32 %v3604, 1.0
  %v3644 = vadd.f32 %v3605, 1.0
  %v3645 = vsel %vm3606, 1, 0
  %vm3646 = vcmp.eq.s32.totalorder %v3645, 1
  %v3647 = vsel %vm3646, %v3607, %v3568
  %v3648 = vsel %vm3646, %v3608, %v3569
  %v3649 = vsel %vm3646, %v3609, %v3570
  %v3650 = vsel %vm3646, %v3610, %v3571
  %v3651 = vsel %vm3646, %v3611, %v3572
  %v3652 = vsel %vm3646, %v3612, %v3573
  %v3653 = vsel %vm3646, %v3613, %v3574
  %v3654 = vsel %vm3646, %v3614, %v3575
  %v3655 = vsel %vm3646, %v3615, %v3576
  %v3656 = vsel %vm3646, %v3616, %v3577
  %v3657 = vsel %vm3646, %v3617, %v3578
  %v3658 = vsel %vm3646, %v3618, %v3579
  %v3659 = vsel %vm3646, %v3619, %v3580
  %v3660 = vsel %vm3646, %v3620, %v3581
  %v3661 = vsel %vm3646, %v3621, %v3582
  %v3662 = vsel %vm3646, %v3622, %v3583
  %v3663 = vsel %vm3646, %v3623, %v3584
  %v3664 = vsel %vm3646, %v3624, %v3585
  %v3665 = vsel %vm3646, %v3625, %v3586
  %v3666 = vsel %vm3646, %v3626, %v3587
  %v3667 = vsel %vm3646, %v3627, %v3588
  %v3668 = vsel %vm3646, %v3628, %v3589
  %v3669 = vsel %vm3646, %v3629, %v3590
  %v3670 = vsel %vm3646, %v3630, %v3591
  %v3671 = vsel %vm3646, %v3631, %v3592
  %v3672 = vsel %vm3646, %v3632, %v3593
  %v3673 = vsel %vm3646, %v3633, %v3594
  %v3674 = vsel %vm3646, %v3634, %v3595
  %v3675 = vsel %vm3646, %v3635, %v3596
  %v3676 = vsel %vm3646, %v3636, %v3597
  %v3677 = vsel %vm3646, %v3637, %v3598
  %v3678 = vsel %vm3646, %v3638, %v3599
  %v3679 = vsel %vm3646, %v3639, %v3600
  %v3680 = vsel %vm3646, %v3640, %v3601
  %v3681 = vsel %vm3646, %v3641, %v3602
  %v3682 = vsel %vm3646, %v3642, %v3603
  %v3683 = vsel %vm3646, %v3643, %v3604
  %v3684 = vsel %vm3646, %v3644, %v3605
  %3723 = vrot.lane.b32.xlu0 %v3647, 48
  %v3724 = vpop.permute.xlu0 %3723
  %3725 = vrot.lane.b32.xlu0 %v3648, 48
  %v3726 = vpop.permute.xlu0 %3725
  %3727 = vrot.lane.b32.xlu0 %v3649, 48
  %v3728 = vpop.permute.xlu0 %3727
  %3729 = vrot.lane.b32.xlu0 %v3650, 48
  %v3730 = vpop.permute.xlu0 %3729
  %3731 = vrot.lane.b32.xlu0 %v3651, 48
  %v3732 = vpop.permute.xlu0 %3731
  %3733 = vrot.lane.b32.xlu0 %v3652, 48
  %v3734 = vpop.permute.xlu0 %3733
  %3735 = vrot.lane.b32.xlu0 %v3653, 48
  %v3736 = vpop.permute.xlu0 %3735
  %3737 = vrot.lane.b32.xlu0 %v3654, 48
  %v3738 = vpop.permute.xlu0 %3737
  %3739 = vrot.lane.b32.xlu0 %v3655, 48
  %v3740 = vpop.permute.xlu0 %3739
  %3741 = vrot.lane.b32.xlu0 %v3656, 48
  %v3742 = vpop.permute.xlu0 %3741
  %3743 = vrot.lane.b32.xlu0 %v3657, 48
  %v3744 = vpop.permute.xlu0 %3743
  %3745 = vrot.lane.b32.xlu0 %v3658, 48
  %v3746 = vpop.permute.xlu0 %3745
  %3747 = vrot.lane.b32.xlu0 %v3659, 48
  %v3748 = vpop.permute.xlu0 %3747
  %3749 = vrot.lane.b32.xlu0 %v3660, 48
  %v3750 = vpop.permute.xlu0 %3749
  %3751 = vrot.lane.b32.xlu0 %v3661, 48
  %v3752 = vpop.permute.xlu0 %3751
  %3753 = vrot.lane.b32.xlu0 %v3662, 48
  %v3754 = vpop.permute.xlu0 %3753
  %3755 = vrot.lane.b32.xlu0 %v3663, 48
  %v3756 = vpop.permute.xlu0 %3755
  %3757 = vrot.lane.b32.xlu0 %v3664, 48
  %v3758 = vpop.permute.xlu0 %3757
  %3759 = vrot.lane.b32.xlu0 %v3665, 48
  %v3760 = vpop.permute.xlu0 %3759
  %3761 = vrot.lane.b32.xlu0 %v3666, 48
  %v3762 = vpop.permute.xlu0 %3761
  %3763 = vrot.lane.b32.xlu0 %v3667, 48
  %v3764 = vpop.permute.xlu0 %3763
  %3765 = vrot.lane.b32.xlu0 %v3668, 48
  %v3766 = vpop.permute.xlu0 %3765
  %3767 = vrot.lane.b32.xlu0 %v3669, 48
  %v3768 = vpop.permute.xlu0 %3767
  %3769 = vrot.lane.b32.xlu0 %v3670, 48
  %v3770 = vpop.permute.xlu0 %3769
  %3771 = vrot.lane.b32.xlu0 %v3671, 48
  %v3772 = vpop.permute.xlu0 %3771
  %3773 = vrot.lane.b32.xlu0 %v3672, 48
  %v3774 = vpop.permute.xlu0 %3773
  %3775 = vrot.lane.b32.xlu0 %v3673, 48
  %v3776 = vpop.permute.xlu0 %3775
  %3777 = vrot.lane.b32.xlu0 %v3674, 48
  %v3778 = vpop.permute.xlu0 %3777
  %3779 = vrot.lane.b32.xlu0 %v3675, 48
  %v3780 = vpop.permute.xlu0 %3779
  %3781 = vrot.lane.b32.xlu0 %v3676, 48
  %v3782 = vpop.permute.xlu0 %3781
  %3783 = vrot.lane.b32.xlu0 %v3677, 48
  %v3784 = vpop.permute.xlu0 %3783
  %3785 = vrot.lane.b32.xlu0 %v3678, 48
  %v3786 = vpop.permute.xlu0 %3785
  %3787 = vrot.lane.b32.xlu0 %v3679, 48
  %v3788 = vpop.permute.xlu0 %3787
  %3789 = vrot.lane.b32.xlu0 %v3680, 48
  %v3790 = vpop.permute.xlu0 %3789
  %3791 = vrot.lane.b32.xlu0 %v3681, 48
  %v3792 = vpop.permute.xlu0 %3791
  %3793 = vrot.lane.b32.xlu0 %v3682, 48
  %v3794 = vpop.permute.xlu0 %3793
  %3795 = vrot.lane.b32.xlu0 %v3683, 48
  %v3796 = vpop.permute.xlu0 %3795
  %3797 = vrot.lane.b32.xlu0 %v3684, 48
  %v3798 = vpop.permute.xlu0 %3797
  %vm3837 = vcmask 458112
  %3838 = vst.msk [vmem:[%s1] sm:$0xff] %vm3837, %v3724
  %3839 = vst.msk [vmem:[%s1 + $0x8] sm:$0xff] %vm3837, %v3726
  %3840 = vst.msk [vmem:[%s1 + $0x10] sm:$0xff] %vm3837, %v3728
  %3841 = vst.msk [vmem:[%s1 + $0x18] sm:$0xff] %vm3837, %v3730
  %3842 = vst.msk [vmem:[%s1 + $0x20] sm:$0xff] %vm3837, %v3732
  %3843 = vst.msk [vmem:[%s1 + $0x28] sm:$0xff] %vm3837, %v3734
  %3844 = vst.msk [vmem:[%s1 + $0x30] sm:$0xff] %vm3837, %v3736
  %3845 = vst.msk [vmem:[%s1 + $0x38] sm:$0xff] %vm3837, %v3738
  %3846 = vst.msk [vmem:[%s1 + $0x40] sm:$0xff] %vm3837, %v3740
  %3847 = vst.msk [vmem:[%s1 + $0x48] sm:$0xff] %vm3837, %v3742
  %3848 = vst.msk [vmem:[%s1 + $0x50] sm:$0xff] %vm3837, %v3744
  %3849 = vst.msk [vmem:[%s1 + $0x58] sm:$0xff] %vm3837, %v3746
  %3850 = vst.msk [vmem:[%s1 + $0x60] sm:$0xff] %vm3837, %v3748
  %3851 = vst.msk [vmem:[%s1 + $0x68] sm:$0xff] %vm3837, %v3750
  %3852 = vst.msk [vmem:[%s1 + $0x70] sm:$0xff] %vm3837, %v3752
  %3853 = vst.msk [vmem:[%s1 + $0x78] sm:$0xff] %vm3837, %v3754
  %3854 = vst.msk [vmem:[%s1 + $0x80] sm:$0xff] %vm3837, %v3756
  %3855 = vst.msk [vmem:[%s1 + $0x88] sm:$0xff] %vm3837, %v3758
  %3856 = vst.msk [vmem:[%s1 + $0x90] sm:$0xff] %vm3837, %v3760
  %3857 = vst.msk [vmem:[%s1 + $0x98] sm:$0xff] %vm3837, %v3762
  %3858 = vst.msk [vmem:[%s1 + $0xa0] sm:$0xff] %vm3837, %v3764
  %3859 = vst.msk [vmem:[%s1 + $0xa8] sm:$0xff] %vm3837, %v3766
  %3860 = vst.msk [vmem:[%s1 + $0xb0] sm:$0xff] %vm3837, %v3768
  %3861 = vst.msk [vmem:[%s1 + $0xb8] sm:$0xff] %vm3837, %v3770
  %3862 = vst.msk [vmem:[%s1 + $0xc0] sm:$0xff] %vm3837, %v3772
  %3863 = vst.msk [vmem:[%s1 + $0xc8] sm:$0xff] %vm3837, %v3774
  %3864 = vst.msk [vmem:[%s1 + $0xd0] sm:$0xff] %vm3837, %v3776
  %3865 = vst.msk [vmem:[%s1 + $0xd8] sm:$0xff] %vm3837, %v3778
  %3866 = vst.msk [vmem:[%s1 + $0xe0] sm:$0xff] %vm3837, %v3780
  %3867 = vst.msk [vmem:[%s1 + $0xe8] sm:$0xff] %vm3837, %v3782
  %3868 = vst.msk [vmem:[%s1 + $0xf0] sm:$0xff] %vm3837, %v3784
  %3869 = vst.msk [vmem:[%s1 + $0xf8] sm:$0xff] %vm3837, %v3786
  %3870 = vst.msk [vmem:[%s1 + $0x100] sm:$0xff] %vm3837, %v3788
  %3871 = vst.msk [vmem:[%s1 + $0x108] sm:$0xff] %vm3837, %v3790
  %3872 = vst.msk [vmem:[%s1 + $0x110] sm:$0xff] %vm3837, %v3792
  %3873 = vst.msk [vmem:[%s1 + $0x118] sm:$0xff] %vm3837, %v3794
  %3874 = vst.msk [vmem:[%s1 + $0x120] sm:$0xff] %vm3837, %v3796
  %3875 = vst.msk [vmem:[%s1 + $0x128] sm:$0xff] %vm3837, %v3798
  %3876 = vset.pattern.permute.xlu0 7
  %3877 = vperm.xlu0 %3876, %v198
  %v3878 = vpop.permute.xlu0 %3877
  %3880 = vset.pattern.permute.xlu0 7
  %3881 = vperm.xlu0 %3880, %v199
  %v3882 = vpop.permute.xlu0 %3881
  %3884 = vset.pattern.permute.xlu0 7
  %3885 = vperm.xlu0 %3884, %v200
  %v3886 = vpop.permute.xlu0 %3885
  %3888 = vset.pattern.permute.xlu0 7
  %3889 = vperm.xlu0 %3888, %v201
  %v3890 = vpop.permute.xlu0 %3889
  %3892 = vset.pattern.permute.xlu0 7
  %3893 = vperm.xlu0 %3892, %v202
  %v3894 = vpop.permute.xlu0 %3893
  %3896 = vset.pattern.permute.xlu0 7
  %3897 = vperm.xlu0 %3896, %v203
  %v3898 = vpop.permute.xlu0 %3897
  %3900 = vset.pattern.permute.xlu0 7
  %3901 = vperm.xlu0 %3900, %v204
  %v3902 = vpop.permute.xlu0 %3901
  %3904 = vset.pattern.permute.xlu0 7
  %3905 = vperm.xlu0 %3904, %v205
  %v3906 = vpop.permute.xlu0 %3905
  %3908 = vset.pattern.permute.xlu0 7
  %3909 = vperm.xlu0 %3908, %v206
  %v3910 = vpop.permute.xlu0 %3909
  %3912 = vset.pattern.permute.xlu0 7
  %3913 = vperm.xlu0 %3912, %v207
  %v3914 = vpop.permute.xlu0 %3913
  %3916 = vset.pattern.permute.xlu0 7
  %3917 = vperm.xlu0 %3916, %v208
  %v3918 = vpop.permute.xlu0 %3917
  %3920 = vset.pattern.permute.xlu0 7
  %3921 = vperm.xlu0 %3920, %v209
  %v3922 = vpop.permute.xlu0 %3921
  %3924 = vset.pattern.permute.xlu0 7
  %3925 = vperm.xlu0 %3924, %v210
  %v3926 = vpop.permute.xlu0 %3925
  %3928 = vset.pattern.permute.xlu0 7
  %3929 = vperm.xlu0 %3928, %v211
  %v3930 = vpop.permute.xlu0 %3929
  %3932 = vset.pattern.permute.xlu0 7
  %3933 = vperm.xlu0 %3932, %v212
  %v3934 = vpop.permute.xlu0 %3933
  %3936 = vset.pattern.permute.xlu0 7
  %3937 = vperm.xlu0 %3936, %v213
  %v3938 = vpop.permute.xlu0 %3937
  %3940 = vset.pattern.permute.xlu0 7
  %3941 = vperm.xlu0 %3940, %v214
  %v3942 = vpop.permute.xlu0 %3941
  %3944 = vset.pattern.permute.xlu0 7
  %3945 = vperm.xlu0 %3944, %v215
  %v3946 = vpop.permute.xlu0 %3945
  %3948 = vset.pattern.permute.xlu0 7
  %3949 = vperm.xlu0 %3948, %v216
  %v3950 = vpop.permute.xlu0 %3949
  %3952 = vset.pattern.permute.xlu0 7
  %3953 = vperm.xlu0 %3952, %v217
  %v3954 = vpop.permute.xlu0 %3953
  %3956 = vset.pattern.permute.xlu0 7
  %3957 = vperm.xlu0 %3956, %v218
  %v3958 = vpop.permute.xlu0 %3957
  %3960 = vset.pattern.permute.xlu0 7
  %3961 = vperm.xlu0 %3960, %v219
  %v3962 = vpop.permute.xlu0 %3961
  %3964 = vset.pattern.permute.xlu0 7
  %3965 = vperm.xlu0 %3964, %v220
  %v3966 = vpop.permute.xlu0 %3965
  %3968 = vset.pattern.permute.xlu0 7
  %3969 = vperm.xlu0 %3968, %v221
  %v3970 = vpop.permute.xlu0 %3969
  %3972 = vset.pattern.permute.xlu0 7
  %3973 = vperm.xlu0 %3972, %v222
  %v3974 = vpop.permute.xlu0 %3973
  %3976 = vset.pattern.permute.xlu0 7
  %3977 = vperm.xlu0 %3976, %v223
  %v3978 = vpop.permute.xlu0 %3977
  %3980 = vset.pattern.permute.xlu0 7
  %3981 = vperm.xlu0 %3980, %v224
  %v3982 = vpop.permute.xlu0 %3981
  %3984 = vset.pattern.permute.xlu0 7
  %3985 = vperm.xlu0 %3984, %v225
  %v3986 = vpop.permute.xlu0 %3985
  %3988 = vset.pattern.permute.xlu0 7
  %3989 = vperm.xlu0 %3988, %v226
  %v3990 = vpop.permute.xlu0 %3989
  %3992 = vset.pattern.permute.xlu0 7
  %3993 = vperm.xlu0 %3992, %v227
  %v3994 = vpop.permute.xlu0 %3993
  %3996 = vset.pattern.permute.xlu0 7
  %3997 = vperm.xlu0 %3996, %v228
  %v3998 = vpop.permute.xlu0 %3997
  %4000 = vset.pattern.permute.xlu0 7
  %4001 = vperm.xlu0 %4000, %v229
  %v4002 = vpop.permute.xlu0 %4001
  %4004 = vset.pattern.permute.xlu0 7
  %4005 = vperm.xlu0 %4004, %v230
  %v4006 = vpop.permute.xlu0 %4005
  %4008 = vset.pattern.permute.xlu0 7
  %4009 = vperm.xlu0 %4008, %v231
  %v4010 = vpop.permute.xlu0 %4009
  %4012 = vset.pattern.permute.xlu0 7
  %4013 = vperm.xlu0 %4012, %v232
  %v4014 = vpop.permute.xlu0 %4013
  %4016 = vset.pattern.permute.xlu0 7
  %4017 = vperm.xlu0 %4016, %v233
  %v4018 = vpop.permute.xlu0 %4017
  %4020 = vset.pattern.permute.xlu0 7
  %4021 = vperm.xlu0 %4020, %v234
  %v4022 = vpop.permute.xlu0 %4021
  %4024 = vset.pattern.permute.xlu0 7
  %4025 = vperm.xlu0 %4024, %v235
  %v4026 = vpop.permute.xlu0 %4025
  %v4028 = vmul.f32 %v3878, %v8
  %v4029 = vmul.f32 %v3882, %v9
  %v4030 = vmul.f32 %v3886, %v10
  %v4031 = vmul.f32 %v3890, %v11
  %v4032 = vmul.f32 %v3894, %v12
  %v4033 = vmul.f32 %v3898, %v13
  %v4034 = vmul.f32 %v3902, %v14
  %v4035 = vmul.f32 %v3906, %v15
  %v4036 = vmul.f32 %v3910, %v16
  %v4037 = vmul.f32 %v3914, %v17
  %v4038 = vmul.f32 %v3918, %v18
  %v4039 = vmul.f32 %v3922, %v19
  %v4040 = vmul.f32 %v3926, %v20
  %v4041 = vmul.f32 %v3930, %v21
  %v4042 = vmul.f32 %v3934, %v22
  %v4043 = vmul.f32 %v3938, %v23
  %v4044 = vmul.f32 %v3942, %v24
  %v4045 = vmul.f32 %v3946, %v25
  %v4046 = vmul.f32 %v3950, %v26
  %v4047 = vmul.f32 %v3954, %v27
  %v4048 = vmul.f32 %v3958, %v28
  %v4049 = vmul.f32 %v3962, %v29
  %v4050 = vmul.f32 %v3966, %v30
  %v4051 = vmul.f32 %v3970, %v31
  %v4052 = vmul.f32 %v3974, %v32
  %v4053 = vmul.f32 %v3978, %v33
  %v4054 = vmul.f32 %v3982, %v34
  %v4055 = vmul.f32 %v3986, %v35
  %v4056 = vmul.f32 %v3990, %v36
  %v4057 = vmul.f32 %v3994, %v37
  %v4058 = vmul.f32 %v3998, %v38
  %v4059 = vmul.f32 %v4002, %v39
  %v4060 = vmul.f32 %v4006, %v40
  %v4061 = vmul.f32 %v4010, %v41
  %v4062 = vmul.f32 %v4014, %v42
  %v4063 = vmul.f32 %v4018, %v43
  %v4064 = vmul.f32 %v4022, %v44
  %v4065 = vmul.f32 %v4026, %v45
  %v4066 = vadd.f32 %v4028, 0.02
  %v4067 = vadd.f32 %v4029, 0.02
  %v4068 = vadd.f32 %v4030, 0.02
  %v4069 = vadd.f32 %v4031, 0.02
  %v4070 = vadd.f32 %v4032, 0.02
  %v4071 = vadd.f32 %v4033, 0.02
  %v4072 = vadd.f32 %v4034, 0.02
  %v4073 = vadd.f32 %v4035, 0.02
  %v4074 = vadd.f32 %v4036, 0.02
  %v4075 = vadd.f32 %v4037, 0.02
  %v4076 = vadd.f32 %v4038, 0.02
  %v4077 = vadd.f32 %v4039, 0.02
  %v4078 = vadd.f32 %v4040, 0.02
  %v4079 = vadd.f32 %v4041, 0.02
  %v4080 = vadd.f32 %v4042, 0.02
  %v4081 = vadd.f32 %v4043, 0.02
  %v4082 = vadd.f32 %v4044, 0.02
  %v4083 = vadd.f32 %v4045, 0.02
  %v4084 = vadd.f32 %v4046, 0.02
  %v4085 = vadd.f32 %v4047, 0.02
  %v4086 = vadd.f32 %v4048, 0.02
  %v4087 = vadd.f32 %v4049, 0.02
  %v4088 = vadd.f32 %v4050, 0.02
  %v4089 = vadd.f32 %v4051, 0.02
  %v4090 = vadd.f32 %v4052, 0.02
  %v4091 = vadd.f32 %v4053, 0.02
  %v4092 = vadd.f32 %v4054, 0.02
  %v4093 = vadd.f32 %v4055, 0.02
  %v4094 = vadd.f32 %v4056, 0.02
  %v4095 = vadd.f32 %v4057, 0.02
  %v4096 = vadd.f32 %v4058, 0.02
  %v4097 = vadd.f32 %v4059, 0.02
  %v4098 = vadd.f32 %v4060, 0.02
  %v4099 = vadd.f32 %v4061, 0.02
  %v4100 = vadd.f32 %v4062, 0.02
  %v4101 = vadd.f32 %v4063, 0.02
  %v4102 = vadd.f32 %v4064, 0.02
  %v4103 = vadd.f32 %v4065, 0.02
  %v4104 = vand.u32 2147483647, %v4066
  %v4105 = vand.u32 2147483647, %v4067
  %v4106 = vand.u32 2147483647, %v4068
  %v4107 = vand.u32 2147483647, %v4069
  %v4108 = vand.u32 2147483647, %v4070
  %v4109 = vand.u32 2147483647, %v4071
  %v4110 = vand.u32 2147483647, %v4072
  %v4111 = vand.u32 2147483647, %v4073
  %v4112 = vand.u32 2147483647, %v4074
  %v4113 = vand.u32 2147483647, %v4075
  %v4114 = vand.u32 2147483647, %v4076
  %v4115 = vand.u32 2147483647, %v4077
  %v4116 = vand.u32 2147483647, %v4078
  %v4117 = vand.u32 2147483647, %v4079
  %v4118 = vand.u32 2147483647, %v4080
  %v4119 = vand.u32 2147483647, %v4081
  %v4120 = vand.u32 2147483647, %v4082
  %v4121 = vand.u32 2147483647, %v4083
  %v4122 = vand.u32 2147483647, %v4084
  %v4123 = vand.u32 2147483647, %v4085
  %v4124 = vand.u32 2147483647, %v4086
  %v4125 = vand.u32 2147483647, %v4087
  %v4126 = vand.u32 2147483647, %v4088
  %v4127 = vand.u32 2147483647, %v4089
  %v4128 = vand.u32 2147483647, %v4090
  %v4129 = vand.u32 2147483647, %v4091
  %v4130 = vand.u32 2147483647, %v4092
  %v4131 = vand.u32 2147483647, %v4093
  %v4132 = vand.u32 2147483647, %v4094
  %v4133 = vand.u32 2147483647, %v4095
  %v4134 = vand.u32 2147483647, %v4096
  %v4135 = vand.u32 2147483647, %v4097
  %v4136 = vand.u32 2147483647, %v4098
  %v4137 = vand.u32 2147483647, %v4099
  %v4138 = vand.u32 2147483647, %v4100
  %v4139 = vand.u32 2147483647, %v4101
  %v4140 = vand.u32 2147483647, %v4102
  %v4141 = vand.u32 2147483647, %v4103
  %vm4142 = vcmp.eq.s32.totalorder %v237, 7
  %v4143 = vadd.f32 %v4104, 1.0
  %v4144 = vadd.f32 %v4105, 1.0
  %v4145 = vadd.f32 %v4106, 1.0
  %v4146 = vadd.f32 %v4107, 1.0
  %v4147 = vadd.f32 %v4108, 1.0
  %v4148 = vadd.f32 %v4109, 1.0
  %v4149 = vadd.f32 %v4110, 1.0
  %v4150 = vadd.f32 %v4111, 1.0
  %v4151 = vadd.f32 %v4112, 1.0
  %v4152 = vadd.f32 %v4113, 1.0
  %v4153 = vadd.f32 %v4114, 1.0
  %v4154 = vadd.f32 %v4115, 1.0
  %v4155 = vadd.f32 %v4116, 1.0
  %v4156 = vadd.f32 %v4117, 1.0
  %v4157 = vadd.f32 %v4118, 1.0
  %v4158 = vadd.f32 %v4119, 1.0
  %v4159 = vadd.f32 %v4120, 1.0
  %v4160 = vadd.f32 %v4121, 1.0
  %v4161 = vadd.f32 %v4122, 1.0
  %v4162 = vadd.f32 %v4123, 1.0
  %v4163 = vadd.f32 %v4124, 1.0
  %v4164 = vadd.f32 %v4125, 1.0
  %v4165 = vadd.f32 %v4126, 1.0
  %v4166 = vadd.f32 %v4127, 1.0
  %v4167 = vadd.f32 %v4128, 1.0
  %v4168 = vadd.f32 %v4129, 1.0
  %v4169 = vadd.f32 %v4130, 1.0
  %v4170 = vadd.f32 %v4131, 1.0
  %v4171 = vadd.f32 %v4132, 1.0
  %v4172 = vadd.f32 %v4133, 1.0
  %v4173 = vadd.f32 %v4134, 1.0
  %v4174 = vadd.f32 %v4135, 1.0
  %v4175 = vadd.f32 %v4136, 1.0
  %v4176 = vadd.f32 %v4137, 1.0
  %v4177 = vadd.f32 %v4138, 1.0
  %v4178 = vadd.f32 %v4139, 1.0
  %v4179 = vadd.f32 %v4140, 1.0
  %v4180 = vadd.f32 %v4141, 1.0
  %v4181 = vsel %vm4142, 1, 0
  %vm4182 = vcmp.eq.s32.totalorder %v4181, 1
  %v4183 = vsel %vm4182, %v4143, %v4104
  %v4184 = vsel %vm4182, %v4144, %v4105
  %v4185 = vsel %vm4182, %v4145, %v4106
  %v4186 = vsel %vm4182, %v4146, %v4107
  %v4187 = vsel %vm4182, %v4147, %v4108
  %v4188 = vsel %vm4182, %v4148, %v4109
  %v4189 = vsel %vm4182, %v4149, %v4110
  %v4190 = vsel %vm4182, %v4150, %v4111
  %v4191 = vsel %vm4182, %v4151, %v4112
  %v4192 = vsel %vm4182, %v4152, %v4113
  %v4193 = vsel %vm4182, %v4153, %v4114
  %v4194 = vsel %vm4182, %v4154, %v4115
  %v4195 = vsel %vm4182, %v4155, %v4116
  %v4196 = vsel %vm4182, %v4156, %v4117
  %v4197 = vsel %vm4182, %v4157, %v4118
  %v4198 = vsel %vm4182, %v4158, %v4119
  %v4199 = vsel %vm4182, %v4159, %v4120
  %v4200 = vsel %vm4182, %v4160, %v4121
  %v4201 = vsel %vm4182, %v4161, %v4122
  %v4202 = vsel %vm4182, %v4162, %v4123
  %v4203 = vsel %vm4182, %v4163, %v4124
  %v4204 = vsel %vm4182, %v4164, %v4125
  %v4205 = vsel %vm4182, %v4165, %v4126
  %v4206 = vsel %vm4182, %v4166, %v4127
  %v4207 = vsel %vm4182, %v4167, %v4128
  %v4208 = vsel %vm4182, %v4168, %v4129
  %v4209 = vsel %vm4182, %v4169, %v4130
  %v4210 = vsel %vm4182, %v4170, %v4131
  %v4211 = vsel %vm4182, %v4171, %v4132
  %v4212 = vsel %vm4182, %v4172, %v4133
  %v4213 = vsel %vm4182, %v4173, %v4134
  %v4214 = vsel %vm4182, %v4174, %v4135
  %v4215 = vsel %vm4182, %v4175, %v4136
  %v4216 = vsel %vm4182, %v4176, %v4137
  %v4217 = vsel %vm4182, %v4177, %v4138
  %v4218 = vsel %vm4182, %v4178, %v4139
  %v4219 = vsel %vm4182, %v4179, %v4140
  %v4220 = vsel %vm4182, %v4180, %v4141
  %4259 = vrot.lane.b32.xlu0 %v4183, 56
  %v4260 = vpop.permute.xlu0 %4259
  %4261 = vrot.lane.b32.xlu0 %v4184, 56
  %v4262 = vpop.permute.xlu0 %4261
  %4263 = vrot.lane.b32.xlu0 %v4185, 56
  %v4264 = vpop.permute.xlu0 %4263
  %4265 = vrot.lane.b32.xlu0 %v4186, 56
  %v4266 = vpop.permute.xlu0 %4265
  %4267 = vrot.lane.b32.xlu0 %v4187, 56
  %v4268 = vpop.permute.xlu0 %4267
  %4269 = vrot.lane.b32.xlu0 %v4188, 56
  %v4270 = vpop.permute.xlu0 %4269
  %4271 = vrot.lane.b32.xlu0 %v4189, 56
  %v4272 = vpop.permute.xlu0 %4271
  %4273 = vrot.lane.b32.xlu0 %v4190, 56
  %v4274 = vpop.permute.xlu0 %4273
  %4275 = vrot.lane.b32.xlu0 %v4191, 56
  %v4276 = vpop.permute.xlu0 %4275
  %4277 = vrot.lane.b32.xlu0 %v4192, 56
  %v4278 = vpop.permute.xlu0 %4277
  %4279 = vrot.lane.b32.xlu0 %v4193, 56
  %v4280 = vpop.permute.xlu0 %4279
  %4281 = vrot.lane.b32.xlu0 %v4194, 56
  %v4282 = vpop.permute.xlu0 %4281
  %4283 = vrot.lane.b32.xlu0 %v4195, 56
  %v4284 = vpop.permute.xlu0 %4283
  %4285 = vrot.lane.b32.xlu0 %v4196, 56
  %v4286 = vpop.permute.xlu0 %4285
  %4287 = vrot.lane.b32.xlu0 %v4197, 56
  %v4288 = vpop.permute.xlu0 %4287
  %4289 = vrot.lane.b32.xlu0 %v4198, 56
  %v4290 = vpop.permute.xlu0 %4289
  %4291 = vrot.lane.b32.xlu0 %v4199, 56
  %v4292 = vpop.permute.xlu0 %4291
  %4293 = vrot.lane.b32.xlu0 %v4200, 56
  %v4294 = vpop.permute.xlu0 %4293
  %4295 = vrot.lane.b32.xlu0 %v4201, 56
  %v4296 = vpop.permute.xlu0 %4295
  %4297 = vrot.lane.b32.xlu0 %v4202, 56
  %v4298 = vpop.permute.xlu0 %4297
  %4299 = vrot.lane.b32.xlu0 %v4203, 56
  %v4300 = vpop.permute.xlu0 %4299
  %4301 = vrot.lane.b32.xlu0 %v4204, 56
  %v4302 = vpop.permute.xlu0 %4301
  %4303 = vrot.lane.b32.xlu0 %v4205, 56
  %v4304 = vpop.permute.xlu0 %4303
  %4305 = vrot.lane.b32.xlu0 %v4206, 56
  %v4306 = vpop.permute.xlu0 %4305
  %4307 = vrot.lane.b32.xlu0 %v4207, 56
  %v4308 = vpop.permute.xlu0 %4307
  %4309 = vrot.lane.b32.xlu0 %v4208, 56
  %v4310 = vpop.permute.xlu0 %4309
  %4311 = vrot.lane.b32.xlu0 %v4209, 56
  %v4312 = vpop.permute.xlu0 %4311
  %4313 = vrot.lane.b32.xlu0 %v4210, 56
  %v4314 = vpop.permute.xlu0 %4313
  %4315 = vrot.lane.b32.xlu0 %v4211, 56
  %v4316 = vpop.permute.xlu0 %4315
  %4317 = vrot.lane.b32.xlu0 %v4212, 56
  %v4318 = vpop.permute.xlu0 %4317
  %4319 = vrot.lane.b32.xlu0 %v4213, 56
  %v4320 = vpop.permute.xlu0 %4319
  %4321 = vrot.lane.b32.xlu0 %v4214, 56
  %v4322 = vpop.permute.xlu0 %4321
  %4323 = vrot.lane.b32.xlu0 %v4215, 56
  %v4324 = vpop.permute.xlu0 %4323
  %4325 = vrot.lane.b32.xlu0 %v4216, 56
  %v4326 = vpop.permute.xlu0 %4325
  %4327 = vrot.lane.b32.xlu0 %v4217, 56
  %v4328 = vpop.permute.xlu0 %4327
  %4329 = vrot.lane.b32.xlu0 %v4218, 56
  %v4330 = vpop.permute.xlu0 %4329
  %4331 = vrot.lane.b32.xlu0 %v4219, 56
  %v4332 = vpop.permute.xlu0 %4331
  %4333 = vrot.lane.b32.xlu0 %v4220, 56
  %v4334 = vpop.permute.xlu0 %4333
  %vm4373 = vcmask 523712
  %4374 = vst.msk [vmem:[%s1] sm:$0xff] %vm4373, %v4260
  %4375 = vst.msk [vmem:[%s1 + $0x8] sm:$0xff] %vm4373, %v4262
  %4376 = vst.msk [vmem:[%s1 + $0x10] sm:$0xff] %vm4373, %v4264
  %4377 = vst.msk [vmem:[%s1 + $0x18] sm:$0xff] %vm4373, %v4266
  %4378 = vst.msk [vmem:[%s1 + $0x20] sm:$0xff] %vm4373, %v4268
  %4379 = vst.msk [vmem:[%s1 + $0x28] sm:$0xff] %vm4373, %v4270
  %4380 = vst.msk [vmem:[%s1 + $0x30] sm:$0xff] %vm4373, %v4272
  %4381 = vst.msk [vmem:[%s1 + $0x38] sm:$0xff] %vm4373, %v4274
  %4382 = vst.msk [vmem:[%s1 + $0x40] sm:$0xff] %vm4373, %v4276
  %4383 = vst.msk [vmem:[%s1 + $0x48] sm:$0xff] %vm4373, %v4278
  %4384 = vst.msk [vmem:[%s1 + $0x50] sm:$0xff] %vm4373, %v4280
  %4385 = vst.msk [vmem:[%s1 + $0x58] sm:$0xff] %vm4373, %v4282
  %4386 = vst.msk [vmem:[%s1 + $0x60] sm:$0xff] %vm4373, %v4284
  %4387 = vst.msk [vmem:[%s1 + $0x68] sm:$0xff] %vm4373, %v4286
  %4388 = vst.msk [vmem:[%s1 + $0x70] sm:$0xff] %vm4373, %v4288
  %4389 = vst.msk [vmem:[%s1 + $0x78] sm:$0xff] %vm4373, %v4290
  %4390 = vst.msk [vmem:[%s1 + $0x80] sm:$0xff] %vm4373, %v4292
  %4391 = vst.msk [vmem:[%s1 + $0x88] sm:$0xff] %vm4373, %v4294
  %4392 = vst.msk [vmem:[%s1 + $0x90] sm:$0xff] %vm4373, %v4296
  %4393 = vst.msk [vmem:[%s1 + $0x98] sm:$0xff] %vm4373, %v4298
  %4394 = vst.msk [vmem:[%s1 + $0xa0] sm:$0xff] %vm4373, %v4300
  %4395 = vst.msk [vmem:[%s1 + $0xa8] sm:$0xff] %vm4373, %v4302
  %4396 = vst.msk [vmem:[%s1 + $0xb0] sm:$0xff] %vm4373, %v4304
  %4397 = vst.msk [vmem:[%s1 + $0xb8] sm:$0xff] %vm4373, %v4306
  %4398 = vst.msk [vmem:[%s1 + $0xc0] sm:$0xff] %vm4373, %v4308
  %4399 = vst.msk [vmem:[%s1 + $0xc8] sm:$0xff] %vm4373, %v4310
  %4400 = vst.msk [vmem:[%s1 + $0xd0] sm:$0xff] %vm4373, %v4312
  %4401 = vst.msk [vmem:[%s1 + $0xd8] sm:$0xff] %vm4373, %v4314
  %4402 = vst.msk [vmem:[%s1 + $0xe0] sm:$0xff] %vm4373, %v4316
  %4403 = vst.msk [vmem:[%s1 + $0xe8] sm:$0xff] %vm4373, %v4318
  %4404 = vst.msk [vmem:[%s1 + $0xf0] sm:$0xff] %vm4373, %v4320
  %4405 = vst.msk [vmem:[%s1 + $0xf8] sm:$0xff] %vm4373, %v4322
  %4406 = vst.msk [vmem:[%s1 + $0x100] sm:$0xff] %vm4373, %v4324
  %4407 = vst.msk [vmem:[%s1 + $0x108] sm:$0xff] %vm4373, %v4326
  %4408 = vst.msk [vmem:[%s1 + $0x110] sm:$0xff] %vm4373, %v4328
  %4409 = vst.msk [vmem:[%s1 + $0x118] sm:$0xff] %vm4373, %v4330
  %4410 = vst.msk [vmem:[%s1 + $0x120] sm:$0xff] %vm4373, %v4332
  %4411 = vst.msk [vmem:[%s1 + $0x128] sm:$0xff] %vm4373, %v4334
  // Predicated region
  $region6: #{tpu_custom_call.1} parent=0 // pred_check
    _
  $region7: #{tpu_custom_call.1} parent=0 // pred_check_branch
    %4413 = sbr.rel (0) target = $region9
  $region8: #{tpu_custom_call.1} parent=0 // pred_region
    _
  $region9: #{tpu_custom_call.1} parent=0 // pred_fallthru
    _
  // Predicated region
  $region10: #{tpu_custom_call.1} parent=0 // pred_check
    _
  $region11: #{tpu_custom_call.1} parent=0 // pred_check_branch
    %4415 = sbr.rel (0) target = $region13
  $region12: #{tpu_custom_call.1} parent=0 // pred_region
    _
  $region13: #{tpu_custom_call.1} parent=0 // pred_fallthru
    _

</llo_original>
